<compile_context>
chip_gen: v7x
topology: tpu7x:2x2x1
jax: 0.10.0
libtpu: 0.0.40
codegen_flags: <defaults>
</compile_context>

<pallas_src>
import functools

import jax
import jax.numpy as jnp
from jax.experimental import pallas as pl
from jax.experimental.pallas import tpu as pltpu

_ROW_TILE = 128     # row-tile height (sublane-aligned, keeps logits tile in vregs)


def _supcon_kernel(zr_ref, zc_ref, lr_ref, lc_ref, out_ref,
                   m_sc, d_sc, s_sc, c_sc, *,
                   tm: int, tkb: int, tks: int, n_sub: int,
                   inv_t: float, n_pad: int, use_bf16: bool):
    i = pl.program_id(0)            # row-tile index   (parallel)
    k = pl.program_id(1)            # col-block index  (reduction, innermost)
    nk = pl.num_programs(1)

    @pl.when(k == 0)
    def _init():
        m_sc[...] = jnp.full_like(m_sc, -jnp.inf)
        d_sc[...] = jnp.zeros_like(d_sc)
        s_sc[...] = jnp.zeros_like(s_sc)
        c_sc[...] = jnp.zeros_like(c_sc)

    row0 = i * tm                   # global row offset of this row tile
    col_base = k * tkb              # global col offset of this column block

    zr = zr_ref[...]                # (tm, D) f32
    if use_bf16:
        zr = zr.astype(jnp.bfloat16)
    lr = lr_ref[...]                # (tm, 1) int32, -1 on padded rows
    inv_t_f32 = jnp.float32(inv_t)

    def sweep(mask_diag: bool):
        # Online-softmax sweep over the n_sub sub-tiles of this column block.
        # State carried in registers; scratch touched once per grid step.
        m = m_sc[...]
        d = d_sc[...]
        s = s_sc[...]
        c = c_sc[...]
        if mask_diag:
            # local (col - row) index difference; self-pair <=> diff == offset
            diff = (jax.lax.broadcasted_iota(jnp.int32, (tm, tks), 1)
                    - jax.lax.broadcasted_iota(jnp.int32, (tm, tks), 0))
        for sub in range(n_sub):    # static, fully unrolled
            off = sub * tks
            zc = zc_ref[pl.ds(off, tks), :]            # (tks, D)
            lc = lc_ref[:, pl.ds(off, tks)]            # (1, tks)
            if use_bf16:
                raw = jax.lax.dot_general(
                    zr, zc.astype(jnp.bfloat16), (((1,), (1,)), ((), ())),
                    preferred_element_type=jnp.float32)
            else:
                raw = jax.lax.dot_general(
                    zr, zc, (((1,), (1,)), ((), ())),
                    precision=jax.lax.Precision.HIGHEST,
                    preferred_element_type=jnp.float32)
            logits = raw * inv_t_f32                   # (tm, tks)

            # Row max over all columns (self & padding included), as in torch.
            m_new = jnp.maximum(m, jnp.max(logits, axis=1, keepdims=True))
            alpha = jnp.exp(m - m_new)
            p = jnp.exp(logits - m_new)
            pos = (lr == lc).astype(jnp.float32)       # padded cols never match
            if mask_diag:
                keep = diff != (row0 - (col_base + off))
                p = jnp.where(keep, p, 0.0)
                pos = jnp.where(keep, pos, 0.0)

            d = alpha * d + jnp.sum(p, axis=1, keepdims=True)
            s = s + jnp.sum(pos * logits, axis=1, keepdims=True)
            c = c + jnp.sum(pos, axis=1, keepdims=True)
            m = m_new
        m_sc[...] = m
        d_sc[...] = d
        s_sc[...] = s
        c_sc[...] = c

    # Self-pairs can only appear in the column block containing this row
    # tile's diagonal; every other (interior) block takes the mask-free path.
    is_diag_block = jnp.logical_and(row0 >= col_base, row0 < col_base + tkb)

    @pl.when(is_diag_block)
    def _diag():
        sweep(True)

    @pl.when(jnp.logical_not(is_diag_block))
    def _interior():
        sweep(False)

    @pl.when(k == nk - 1)
    def _finalize():
        m_f = m_sc[...]
        d_f = d_sc[...]
        if n_pad:
            # Each padded (all-zero) column contributed exp(0 - m) to d.
            d_f = d_f - jnp.float32(n_pad) * jnp.exp(-m_f)
        c = c_sc[...]
        safe_c = jnp.where(c > 0.0, c, 1.0)            # zero-positive guard
        mlp = s_sc[...] / safe_c - m_f - jnp.log(d_f)
        out_ref[...] = jnp.where(c > 0.0, mlp, 0.0)


def intramodal_supcon(embeds: jax.Array, labels: jax.Array,
                      temperature: float = 0.07,
                      use_bf16_matmul: bool = True) -> jax.Array:
    """embeds: (N, n_views, D), labels: (N,) int  ->  scalar SupCon loss."""
    assert embeds.ndim == 3, "Embeddings has unexpected shape."
    assert embeds.shape[0] == labels.shape[0], \
        "Batch sizes of embeddings and labels don't match."
    N, n_views, D = embeds.shape
    M = n_views * N
    Mp = ((M + 127) // 128) * 128                      # lane-dense padding
    # Row tile: 128, except split a single-tile problem in two so the
    # "parallel" row axis can feed both TensorCores on v7x.
    tm = _ROW_TILE if Mp > _ROW_TILE else _ROW_TILE // 2
    # Large reduction block amortizes per-grid-step overhead; swept in
    # 256-wide sub-tiles inside the kernel.
    if Mp % 512 == 0:
        tkb = 512
    elif Mp % 256 == 0:
        tkb = 256
    else:
        tkb = 128
    tks = min(256, tkb)
    n_sub = tkb // tks
    n_pad = Mp - M

    z = jnp.transpose(embeds, (1, 0, 2)).reshape(M, D).astype(jnp.float32)
    lab = jnp.tile(labels.astype(jnp.int32), n_views)  # (M,)
    if n_pad:
        z = jnp.pad(z, ((0, n_pad), (0, 0)))           # zero rows
        lab = jnp.pad(lab, (0, n_pad), constant_values=-1)
    lab_col = lab.reshape(Mp, 1)
    lab_row = lab.reshape(1, Mp)

    grid = (Mp // tm, Mp // tkb)
    kernel = functools.partial(
        _supcon_kernel, tm=tm, tkb=tkb, tks=tks, n_sub=n_sub,
        inv_t=1.0 / float(temperature), n_pad=n_pad, use_bf16=use_bf16_matmul)
    cost = pl.CostEstimate(
        flops=int(2 * Mp * Mp * D),
        transcendentals=int(Mp * Mp),
        bytes_accessed=int(Mp * D * 4 * (1 + Mp // tm) + 3 * Mp * 4))

    mlp = pl.pallas_call(
        kernel,
        out_shape=jax.ShapeDtypeStruct((Mp, 1), jnp.float32),
        grid_spec=pltpu.PrefetchScalarGridSpec(
            num_scalar_prefetch=0,
            grid=grid,
            in_specs=[
                pl.BlockSpec((tm, D), lambda i, k: (i, 0)),    # z row tile
                pl.BlockSpec((tkb, D), lambda i, k: (k, 0)),   # z column block
                pl.BlockSpec((tm, 1), lambda i, k: (i, 0)),    # row labels
                pl.BlockSpec((1, tkb), lambda i, k: (0, k)),   # col labels
            ],
            out_specs=pl.BlockSpec((tm, 1), lambda i, k: (i, 0)),
            scratch_shapes=[pltpu.VMEM((tm, 1), jnp.float32)] * 4,
        ),
        compiler_params=pltpu.CompilerParams(
            dimension_semantics=("parallel", "arbitrary"),
            vmem_limit_bytes=32 * 1024 * 1024,         # v7x-safe
        ),
        cost_estimate=cost,
    )(z, z, lab_col, lab_row)

    # TODO(synk): PyTorch raises RuntimeError / RuntimeWarning on non-finite
    # values and zero-sized positive sets; host-side exceptions have no
    # in-kernel equivalent (zero-positive rows are zeroed like the clamped
    # reference; non-finite values propagate silently).
    return -jnp.mean(mlp[:M, 0])


def _reference(embeds, labels, temperature=0.07):
    """Pure-JAX reference mirroring the PyTorch forward."""
    N, n_views, D = embeds.shape
    M = n_views * N
    z = jnp.transpose(embeds, (1, 0, 2)).reshape(M, D).astype(jnp.float32)
    lab = jnp.tile(labels.astype(jnp.int32), n_views)
    sup_mask = (lab[:, None] == lab[None, :]).astype(jnp.float32)
    same_mask = 1.0 - jnp.eye(M, dtype=jnp.float32)
    mask = same_mask * sup_mask
    logits = jnp.matmul(z, z.T, precision=jax.lax.Precision.HIGHEST) / temperature
    logits = logits - jnp.max(logits, axis=1, keepdims=True)
    denom = jnp.sum(same_mask * jnp.exp(logits), axis=1, keepdims=True)
    log_prob = logits - jnp.log(denom)
    pos = jnp.sum(mask, axis=1)
    pos = jnp.where(pos == 0.0, 1.0, pos)
    mean_log_prob = jnp.sum(mask * log_prob, axis=1) / pos
    return jnp.mean(-mean_log_prob)


if __name__ == "__main__":
    def run_case(key, batch, n_views, dim, n_classes, use_bf16, rtol, atol):
        k_e, k_l = jax.random.split(key)
        embeds = jax.random.normal(k_e, (batch, n_views, dim), dtype=jnp.float32)
        # SupCon operates on L2-normalized embeddings; unnormalized gaussians
        # at T=0.07 underflow the softmax denominator to 0 (the PyTorch module
        # raises RuntimeError on such inputs too).
        embeds = embeds / jnp.linalg.norm(embeds, axis=-1, keepdims=True)
        labels = jax.random.randint(k_l, (batch,), 0, n_classes, dtype=jnp.int32)

        loss = jax.block_until_ready(
            intramodal_supcon(embeds, labels, 0.07, use_bf16_matmul=use_bf16))
        ref = _reference(embeds, labels, 0.07)
        assert bool(jnp.isfinite(loss)), "loss is NaN or inf"
        assert jnp.allclose(loss, ref, rtol=rtol, atol=atol), (loss, ref)
        return loss

    key = jax.random.PRNGKey(0)
    k1, k2, k3, k4 = jax.random.split(key, 4)
    # f32 (HIGHEST) accuracy path vs f32 reference, tight tolerance.
    run_case(k1, 8,   2, 32, 4,  use_bf16=False, rtol=1e-4, atol=1e-4)  # Mp=128, split row tiles
    run_case(k2, 72,  2, 32, 10, use_bf16=False, rtol=1e-4, atol=1e-4)  # Mp=256, padding path
    run_case(k3, 512, 2, 32, 16, use_bf16=False, rtol=1e-4, atol=1e-4)  # Mp=1024: 512-wide blocks,
                                                                        # 2 sub-tiles, interior fast path
    # Default bf16-MXU fast path (f32 accumulate), looser tolerance.
    run_case(k4, 72,  2, 32, 10, use_bf16=True,  rtol=2e-2, atol=2e-2)
    print("KERNEL_OK")
</pallas_src>

<mosaic_0001>
module attributes {stable_mosaic.version = 11 : i64} {
  func.func @_supcon_kernel(%arg0: i32, %arg1: i32, %arg2: memref<64x32xf32, #tpu.memory_space<vmem>>, %arg3: memref<128x32xf32, #tpu.memory_space<vmem>>, %arg4: memref<64x1xi32, #tpu.memory_space<vmem>>, %arg5: memref<1x128xi32, #tpu.memory_space<vmem>>, %arg6: memref<64x1xf32, #tpu.memory_space<vmem>>, %arg7: memref<64x1xf32, #tpu.memory_space<vmem>>, %arg8: memref<64x1xf32, #tpu.memory_space<vmem>>, %arg9: memref<64x1xf32, #tpu.memory_space<vmem>>, %arg10: memref<64x1xf32, #tpu.memory_space<vmem>>) attributes {dimension_semantics = [#tpu.dimension_semantics<parallel>, #tpu.dimension_semantics<arbitrary>], iteration_bounds = array<i64: 2, 1>, scalar_prefetch = 0 : i64, scratch_operands = 4 : i64, tpu.core_type = #tpu.core_type<tc>, window_params = [{transform_indices = @transform_0, window_bounds = array<i64: 64, 32>}, {transform_indices = @transform_1, window_bounds = array<i64: 128, 32>}, {transform_indices = @transform_2, window_bounds = array<i64: 64, 1>}, {transform_indices = @transform_3, window_bounds = array<i64: 1, 128>}, {transform_indices = @transform_4, window_bounds = array<i64: 64, 1>}]} {
    %c0_i32 = arith.constant 0 : i32
    %0 = arith.cmpi eq, %arg1, %c0_i32 : i32
    %1 = arith.extui %0 : i1 to i32
    %c0_i32_0 = arith.constant 0 : i32
    %2 = arith.cmpi ne, %1, %c0_i32_0 : i32
    scf.if %2 {
      %cst_10 = arith.constant 0xFF800000 : f32
      %19 = vector.broadcast %cst_10 : f32 to vector<64x1xf32>
      %c0_11 = arith.constant 0 : index
      %c0_12 = arith.constant 0 : index
      %20 = vector.load %arg7[%c0_11, %c0_12] : memref<64x1xf32, #tpu.memory_space<vmem>>, vector<64x1xf32>
      tpu.vector_store %arg7[%c0_11, %c0_12], %19 {strides = array<i32>} : memref<64x1xf32, #tpu.memory_space<vmem>>, vector<64x1xf32>,
      %cst_13 = arith.constant 0.000000e+00 : f32
      %21 = vector.broadcast %cst_13 : f32 to vector<64x1xf32>
      %c0_14 = arith.constant 0 : index
      %c0_15 = arith.constant 0 : index
      %22 = vector.load %arg8[%c0_14, %c0_15] : memref<64x1xf32, #tpu.memory_space<vmem>>, vector<64x1xf32>
      tpu.vector_store %arg8[%c0_14, %c0_15], %21 {strides = array<i32>} : memref<64x1xf32, #tpu.memory_space<vmem>>, vector<64x1xf32>,
      %cst_16 = arith.constant 0.000000e+00 : f32
      %23 = vector.broadcast %cst_16 : f32 to vector<64x1xf32>
      %c0_17 = arith.constant 0 : index
      %c0_18 = arith.constant 0 : index
      %24 = vector.load %arg9[%c0_17, %c0_18] : memref<64x1xf32, #tpu.memory_space<vmem>>, vector<64x1xf32>
      tpu.vector_store %arg9[%c0_17, %c0_18], %23 {strides = array<i32>} : memref<64x1xf32, #tpu.memory_space<vmem>>, vector<64x1xf32>,
      %cst_19 = arith.constant 0.000000e+00 : f32
      %25 = vector.broadcast %cst_19 : f32 to vector<64x1xf32>
      %c0_20 = arith.constant 0 : index
      %c0_21 = arith.constant 0 : index
      %26 = vector.load %arg10[%c0_20, %c0_21] : memref<64x1xf32, #tpu.memory_space<vmem>>, vector<64x1xf32>
      tpu.vector_store %arg10[%c0_20, %c0_21], %25 {strides = array<i32>} : memref<64x1xf32, #tpu.memory_space<vmem>>, vector<64x1xf32>,
    } else {
    }
    %c64_i32 = arith.constant 64 : i32
    %3 = arith.muli %arg0, %c64_i32 : i32
    %c128_i32 = arith.constant 128 : i32
    %4 = arith.muli %arg1, %c128_i32 : i32
    %c0 = arith.constant 0 : index
    %c0_1 = arith.constant 0 : index
    %5 = vector.load %arg2[%c0, %c0_1] : memref<64x32xf32, #tpu.memory_space<vmem>>, vector<64x32xf32>
    %c0_2 = arith.constant 0 : index
    %c0_3 = arith.constant 0 : index
    %6 = vector.load %arg4[%c0_2, %c0_3] : memref<64x1xi32, #tpu.memory_space<vmem>>, vector<64x1xi32>
    %7 = arith.cmpi sge, %3, %4 : i32
    %c128_i32_4 = arith.constant 128 : i32
    %8 = arith.addi %4, %c128_i32_4 : i32
    %9 = arith.cmpi slt, %3, %8 : i32
    %10 = arith.andi %7, %9 : i1
    %11 = arith.extui %10 : i1 to i32
    %cst = arith.constant 14.2857141 : f32
    %c0_i32_5 = arith.constant 0 : i32
    %12 = arith.cmpi ne, %11, %c0_i32_5 : i32
    scf.if %12 {
      %c0_10 = arith.constant 0 : index
      %c0_11 = arith.constant 0 : index
      %19 = vector.load %arg7[%c0_10, %c0_11] : memref<64x1xf32, #tpu.memory_space<vmem>>, vector<64x1xf32>
      %c0_12 = arith.constant 0 : index
      %c0_13 = arith.constant 0 : index
      %20 = vector.load %arg8[%c0_12, %c0_13] : memref<64x1xf32, #tpu.memory_space<vmem>>, vector<64x1xf32>
      %c0_14 = arith.constant 0 : index
      %c0_15 = arith.constant 0 : index
      %21 = vector.load %arg9[%c0_14, %c0_15] : memref<64x1xf32, #tpu.memory_space<vmem>>, vector<64x1xf32>
      %c0_16 = arith.constant 0 : index
      %c0_17 = arith.constant 0 : index
      %22 = vector.load %arg10[%c0_16, %c0_17] : memref<64x1xf32, #tpu.memory_space<vmem>>, vector<64x1xf32>
      %23 = tpu.iota {dimensions = array<i32: 1>} : vector<64x128xi32>
      %24 = tpu.iota {dimensions = array<i32: 0>} : vector<64x128xi32>
      %25 = arith.subi %23, %24 : vector<64x128xi32>
      %c0_18 = arith.constant 0 : index
      %c0_19 = arith.constant 0 : index
      %26 = vector.load %arg3[%c0_18, %c0_19] : memref<128x32xf32, #tpu.memory_space<vmem>>, vector<128x32xf32>
      %c0_20 = arith.constant 0 : index
      %c0_21 = arith.constant 0 : index
      %27 = vector.load %arg5[%c0_20, %c0_21] : memref<1x128xi32, #tpu.memory_space<vmem>>, vector<1x128xi32>
      %cst_22 = arith.constant dense<0.000000e+00> : vector<64x128xf32>
      %28 = tpu.matmul %5, %26, %cst_22 {dimension_numbers = #tpu.dot_dimension_numbers<[1], [1], [0], [0], [0, 0, 1, 0], [], []>, precision = #tpu.contract_precision<fp32>} : vector<64x32xf32>, vector<128x32xf32>, vector<64x128xf32> -> vector<64x128xf32>
      %29 = vector.broadcast %cst : f32 to vector<64x128xf32>
      %30 = arith.mulf %28, %29 : vector<64x128xf32>
      %cst_23 = arith.constant dense<0xFF800000> : vector<64xf32>
      %31 = vector.multi_reduction <maximumf>, %30, %cst_23 [1] : vector<64x128xf32> to vector<64xf32>
      %32 = vector.shape_cast %31 : vector<64xf32> to vector<64x1xf32>
      %33 = arith.maximumf %19, %32 : vector<64x1xf32>
      %34 = arith.subf %19, %33 : vector<64x1xf32>
      %35 = math.exp %34 : vector<64x1xf32>
      %36 = vector.broadcast %33 : vector<64x1xf32> to vector<64x128xf32>
      %37 = arith.subf %30, %36 : vector<64x128xf32>
      %38 = math.exp %37 : vector<64x128xf32>
      %39 = vector.broadcast %6 : vector<64x1xi32> to vector<64x128xi32>
      %40 = vector.broadcast %27 : vector<1x128xi32> to vector<64x128xi32>
      %41 = arith.cmpi eq, %39, %40 : vector<64x128xi32>
      %42 = arith.extui %41 : vector<64x128xi1> to vector<64x128xi32>
      %43 = arith.sitofp %42 : vector<64x128xi32> to vector<64x128xf32>
      %c0_i32_24 = arith.constant 0 : i32
      %44 = arith.addi %4, %c0_i32_24 : i32
      %45 = arith.subi %3, %44 : i32
      %46 = vector.broadcast %45 : i32 to vector<64x128xi32>
      %47 = arith.cmpi ne, %25, %46 : vector<64x128xi32>
      %cst_25 = arith.constant 0.000000e+00 : f32
      %48 = vector.broadcast %cst_25 : f32 to vector<64x128xf32>
      %49 = arith.select %47, %38, %48 : vector<64x128xi1>, vector<64x128xf32>
      %cst_26 = arith.constant 0.000000e+00 : f32
      %50 = vector.broadcast %cst_26 : f32 to vector<64x128xf32>
      %51 = arith.select %47, %43, %50 : vector<64x128xi1>, vector<64x128xf32>
      %52 = arith.mulf %35, %20 : vector<64x1xf32>
      %cst_27 = arith.constant dense<0.000000e+00> : vector<64xf32>
      %53 = vector.multi_reduction <add>, %49, %cst_27 [1] : vector<64x128xf32> to vector<64xf32>
      %54 = vector.shape_cast %53 : vector<64xf32> to vector<64x1xf32>
      %55 = arith.addf %52, %54 : vector<64x1xf32>
      %56 = arith.mulf %51, %30 : vector<64x128xf32>
      %cst_28 = arith.constant dense<0.000000e+00> : vector<64xf32>
      %57 = vector.multi_reduction <add>, %56, %cst_28 [1] : vector<64x128xf32> to vector<64xf32>
      %58 = vector.shape_cast %57 : vector<64xf32> to vector<64x1xf32>
      %59 = arith.addf %21, %58 : vector<64x1xf32>
      %cst_29 = arith.constant dense<0.000000e+00> : vector<64xf32>
      %60 = vector.multi_reduction <add>, %51, %cst_29 [1] : vector<64x128xf32> to vector<64xf32>
      %61 = vector.shape_cast %60 : vector<64xf32> to vector<64x1xf32>
      %62 = arith.addf %22, %61 : vector<64x1xf32>
      %c0_30 = arith.constant 0 : index
      %c0_31 = arith.constant 0 : index
      %63 = vector.load %arg7[%c0_30, %c0_31] : memref<64x1xf32, #tpu.memory_space<vmem>>, vector<64x1xf32>
      tpu.vector_store %arg7[%c0_30, %c0_31], %33 {strides = array<i32>} : memref<64x1xf32, #tpu.memory_space<vmem>>, vector<64x1xf32>,
      %c0_32 = arith.constant 0 : index
      %c0_33 = arith.constant 0 : index
      %64 = vector.load %arg8[%c0_32, %c0_33] : memref<64x1xf32, #tpu.memory_space<vmem>>, vector<64x1xf32>
      tpu.vector_store %arg8[%c0_32, %c0_33], %55 {strides = array<i32>} : memref<64x1xf32, #tpu.memory_space<vmem>>, vector<64x1xf32>,
      %c0_34 = arith.constant 0 : index
      %c0_35 = arith.constant 0 : index
      %65 = vector.load %arg9[%c0_34, %c0_35] : memref<64x1xf32, #tpu.memory_space<vmem>>, vector<64x1xf32>
      tpu.vector_store %arg9[%c0_34, %c0_35], %59 {strides = array<i32>} : memref<64x1xf32, #tpu.memory_space<vmem>>, vector<64x1xf32>,
      %c0_36 = arith.constant 0 : index
      %c0_37 = arith.constant 0 : index
      %66 = vector.load %arg10[%c0_36, %c0_37] : memref<64x1xf32, #tpu.memory_space<vmem>>, vector<64x1xf32>
      tpu.vector_store %arg10[%c0_36, %c0_37], %62 {strides = array<i32>} : memref<64x1xf32, #tpu.memory_space<vmem>>, vector<64x1xf32>,
    } else {
    }
    %true = arith.constant true
    %13 = arith.xori %10, %true : i1
    %14 = arith.extui %13 : i1 to i32
    %cst_6 = arith.constant 14.2857141 : f32
    %c0_i32_7 = arith.constant 0 : i32
    %15 = arith.cmpi ne, %14, %c0_i32_7 : i32
    scf.if %15 {
      %c0_10 = arith.constant 0 : index
      %c0_11 = arith.constant 0 : index
      %19 = vector.load %arg7[%c0_10, %c0_11] : memref<64x1xf32, #tpu.memory_space<vmem>>, vector<64x1xf32>
      %c0_12 = arith.constant 0 : index
      %c0_13 = arith.constant 0 : index
      %20 = vector.load %arg8[%c0_12, %c0_13] : memref<64x1xf32, #tpu.memory_space<vmem>>, vector<64x1xf32>
      %c0_14 = arith.constant 0 : index
      %c0_15 = arith.constant 0 : index
      %21 = vector.load %arg9[%c0_14, %c0_15] : memref<64x1xf32, #tpu.memory_space<vmem>>, vector<64x1xf32>
      %c0_16 = arith.constant 0 : index
      %c0_17 = arith.constant 0 : index
      %22 = vector.load %arg10[%c0_16, %c0_17] : memref<64x1xf32, #tpu.memory_space<vmem>>, vector<64x1xf32>
      %c0_18 = arith.constant 0 : index
      %c0_19 = arith.constant 0 : index
      %23 = vector.load %arg3[%c0_18, %c0_19] : memref<128x32xf32, #tpu.memory_space<vmem>>, vector<128x32xf32>
      %c0_20 = arith.constant 0 : index
      %c0_21 = arith.constant 0 : index
      %24 = vector.load %arg5[%c0_20, %c0_21] : memref<1x128xi32, #tpu.memory_space<vmem>>, vector<1x128xi32>
      %cst_22 = arith.constant dense<0.000000e+00> : vector<64x128xf32>
      %25 = tpu.matmul %5, %23, %cst_22 {dimension_numbers = #tpu.dot_dimension_numbers<[1], [1], [0], [0], [0, 0, 1, 0], [], []>, precision = #tpu.contract_precision<fp32>} : vector<64x32xf32>, vector<128x32xf32>, vector<64x128xf32> -> vector<64x128xf32>
      %26 = vector.broadcast %cst_6 : f32 to vector<64x128xf32>
      %27 = arith.mulf %25, %26 : vector<64x128xf32>
      %cst_23 = arith.constant dense<0xFF800000> : vector<64xf32>
      %28 = vector.multi_reduction <maximumf>, %27, %cst_23 [1] : vector<64x128xf32> to vector<64xf32>
      %29 = vector.shape_cast %28 : vector<64xf32> to vector<64x1xf32>
      %30 = arith.maximumf %19, %29 : vector<64x1xf32>
      %31 = arith.subf %19, %30 : vector<64x1xf32>
      %32 = math.exp %31 : vector<64x1xf32>
      %33 = vector.broadcast %30 : vector<64x1xf32> to vector<64x128xf32>
      %34 = arith.subf %27, %33 : vector<64x128xf32>
      %35 = math.exp %34 : vector<64x128xf32>
      %36 = vector.broadcast %6 : vector<64x1xi32> to vector<64x128xi32>
      %37 = vector.broadcast %24 : vector<1x128xi32> to vector<64x128xi32>
      %38 = arith.cmpi eq, %36, %37 : vector<64x128xi32>
      %39 = arith.extui %38 : vector<64x128xi1> to vector<64x128xi32>
      %40 = arith.sitofp %39 : vector<64x128xi32> to vector<64x128xf32>
      %41 = arith.mulf %32, %20 : vector<64x1xf32>
      %cst_24 = arith.constant dense<0.000000e+00> : vector<64xf32>
      %42 = vector.multi_reduction <add>, %35, %cst_24 [1] : vector<64x128xf32> to vector<64xf32>
      %43 = vector.shape_cast %42 : vector<64xf32> to vector<64x1xf32>
      %44 = arith.addf %41, %43 : vector<64x1xf32>
      %45 = arith.mulf %40, %27 : vector<64x128xf32>
      %cst_25 = arith.constant dense<0.000000e+00> : vector<64xf32>
      %46 = vector.multi_reduction <add>, %45, %cst_25 [1] : vector<64x128xf32> to vector<64xf32>
      %47 = vector.shape_cast %46 : vector<64xf32> to vector<64x1xf32>
      %48 = arith.addf %21, %47 : vector<64x1xf32>
      %cst_26 = arith.constant dense<0.000000e+00> : vector<64xf32>
      %49 = vector.multi_reduction <add>, %40, %cst_26 [1] : vector<64x128xf32> to vector<64xf32>
      %50 = vector.shape_cast %49 : vector<64xf32> to vector<64x1xf32>
      %51 = arith.addf %22, %50 : vector<64x1xf32>
      %c0_27 = arith.constant 0 : index
      %c0_28 = arith.constant 0 : index
      %52 = vector.load %arg7[%c0_27, %c0_28] : memref<64x1xf32, #tpu.memory_space<vmem>>, vector<64x1xf32>
      tpu.vector_store %arg7[%c0_27, %c0_28], %30 {strides = array<i32>} : memref<64x1xf32, #tpu.memory_space<vmem>>, vector<64x1xf32>,
      %c0_29 = arith.constant 0 : index
      %c0_30 = arith.constant 0 : index
      %53 = vector.load %arg8[%c0_29, %c0_30] : memref<64x1xf32, #tpu.memory_space<vmem>>, vector<64x1xf32>
      tpu.vector_store %arg8[%c0_29, %c0_30], %44 {strides = array<i32>} : memref<64x1xf32, #tpu.memory_space<vmem>>, vector<64x1xf32>,
      %c0_31 = arith.constant 0 : index
      %c0_32 = arith.constant 0 : index
      %54 = vector.load %arg9[%c0_31, %c0_32] : memref<64x1xf32, #tpu.memory_space<vmem>>, vector<64x1xf32>
      tpu.vector_store %arg9[%c0_31, %c0_32], %48 {strides = array<i32>} : memref<64x1xf32, #tpu.memory_space<vmem>>, vector<64x1xf32>,
      %c0_33 = arith.constant 0 : index
      %c0_34 = arith.constant 0 : index
      %55 = vector.load %arg10[%c0_33, %c0_34] : memref<64x1xf32, #tpu.memory_space<vmem>>, vector<64x1xf32>
      tpu.vector_store %arg10[%c0_33, %c0_34], %51 {strides = array<i32>} : memref<64x1xf32, #tpu.memory_space<vmem>>, vector<64x1xf32>,
    } else {
    }
    %c0_i32_8 = arith.constant 0 : i32
    %16 = arith.cmpi eq, %arg1, %c0_i32_8 : i32
    %17 = arith.extui %16 : i1 to i32
    %c0_i32_9 = arith.constant 0 : i32
    %18 = arith.cmpi ne, %17, %c0_i32_9 : i32
    scf.if %18 {
      %c0_10 = arith.constant 0 : index
      %c0_11 = arith.constant 0 : index
      %19 = vector.load %arg7[%c0_10, %c0_11] : memref<64x1xf32, #tpu.memory_space<vmem>>, vector<64x1xf32>
      %c0_12 = arith.constant 0 : index
      %c0_13 = arith.constant 0 : index
      %20 = vector.load %arg8[%c0_12, %c0_13] : memref<64x1xf32, #tpu.memory_space<vmem>>, vector<64x1xf32>
      %cst_14 = arith.constant 0.000000e+00 : f32
      %21 = vector.broadcast %cst_14 : f32 to vector<64x1xf32>
      %22 = arith.subf %21, %19 : vector<64x1xf32>
      %23 = math.exp %22 : vector<64x1xf32>
      %cst_15 = arith.constant 1.120000e+02 : f32
      %24 = vector.broadcast %cst_15 : f32 to vector<64x1xf32>
      %25 = arith.mulf %24, %23 : vector<64x1xf32>
      %26 = arith.subf %20, %25 : vector<64x1xf32>
      %c0_16 = arith.constant 0 : index
      %c0_17 = arith.constant 0 : index
      %27 = vector.load %arg10[%c0_16, %c0_17] : memref<64x1xf32, #tpu.memory_space<vmem>>, vector<64x1xf32>
      %cst_18 = arith.constant 0.000000e+00 : f32
      %28 = vector.broadcast %cst_18 : f32 to vector<64x1xf32>
      %29 = arith.cmpf ogt, %27, %28 : vector<64x1xf32>
      %cst_19 = arith.constant 1.000000e+00 : f32
      %30 = vector.broadcast %cst_19 : f32 to vector<64x1xf32>
      %31 = arith.select %29, %27, %30 : vector<64x1xi1>, vector<64x1xf32>
      %c0_20 = arith.constant 0 : index
      %c0_21 = arith.constant 0 : index
      %32 = vector.load %arg9[%c0_20, %c0_21] : memref<64x1xf32, #tpu.memory_space<vmem>>, vector<64x1xf32>
      %33 = arith.divf %32, %31 : vector<64x1xf32>
      %34 = arith.subf %33, %19 : vector<64x1xf32>
      %35 = math.log %26 : vector<64x1xf32>
      %36 = arith.subf %34, %35 : vector<64x1xf32>
      %cst_22 = arith.constant 0.000000e+00 : f32
      %37 = vector.broadcast %cst_22 : f32 to vector<64x1xf32>
      %38 = arith.cmpf ogt, %27, %37 : vector<64x1xf32>
      %cst_23 = arith.constant 0.000000e+00 : f32
      %39 = vector.broadcast %cst_23 : f32 to vector<64x1xf32>
      %40 = arith.select %38, %36, %39 : vector<64x1xi1>, vector<64x1xf32>
      %c0_24 = arith.constant 0 : index
      %c0_25 = arith.constant 0 : index
      %41 = vector.load %arg6[%c0_24, %c0_25] : memref<64x1xf32, #tpu.memory_space<vmem>>, vector<64x1xf32>
      tpu.vector_store %arg6[%c0_24, %c0_25], %40 {strides = array<i32>} : memref<64x1xf32, #tpu.memory_space<vmem>>, vector<64x1xf32>,
    } else {
    }
    return
  }
  func.func @transform_0(%arg0: i32, %arg1: i32) -> (i32, i32) {
    %c0_i32 = arith.constant 0 : i32
    %c0_i32_0 = arith.constant 0 : i32
    return %arg0, %c0_i32 : i32, i32
  }
  func.func @transform_1(%arg0: i32, %arg1: i32) -> (i32, i32) {
    %c0_i32 = arith.constant 0 : i32
    %c0_i32_0 = arith.constant 0 : i32
    return %arg1, %c0_i32 : i32, i32
  }
  func.func @transform_2(%arg0: i32, %arg1: i32) -> (i32, i32) {
    %c0_i32 = arith.constant 0 : i32
    %c0_i32_0 = arith.constant 0 : i32
    return %arg0, %c0_i32 : i32, i32
  }
  func.func @transform_3(%arg0: i32, %arg1: i32) -> (i32, i32) {
    %c0_i32 = arith.constant 0 : i32
    %c0_i32_0 = arith.constant 0 : i32
    return %c0_i32, %arg1 : i32, i32
  }
  func.func @transform_4(%arg0: i32, %arg1: i32) -> (i32, i32) {
    %c0_i32 = arith.constant 0 : i32
    %c0_i32_0 = arith.constant 0 : i32
    return %arg0, %c0_i32 : i32, i32
  }
}

</mosaic_0001>

<llo_original>
// kernel: tpu_custom_call.1
$region0: #{tpu_custom_call.1}
  #allocation0 [shape = 'u32[]', space=smem, size = 0x4, offset = 0x4, fixed_abs, tag = 'smem constant byte address 0x4 - core index']
  #allocation1 [shape = 'u32[144,128]{1,0:T(1,128)}', space=vmem, size = 0x12000, scoped, tag = 'internal scratch']
  #allocation2 [shape = 'f32[64,1]{1,0:T(8,128)}', space=vmem, size = 0x8000, scoped, tag = 'scratch operand']
  #allocation3 [shape = 'f32[64,1]{1,0:T(8,128)}', space=vmem, size = 0x8000, scoped, tag = 'scratch operand']
  #allocation4 [shape = 'f32[64,1]{1,0:T(8,128)}', space=vmem, size = 0x8000, scoped, tag = 'scratch operand']
  #allocation5 [shape = 'f32[64,1]{1,0:T(8,128)}', space=vmem, size = 0x8000, scoped, tag = 'scratch operand']
  %s0 = inlined_call_operand.vmem [shape: f32[128,32], index: 0, kind: input, shape index: {}]
  %s1 = inlined_call_operand.vmem [shape: f32[128,32], index: 1, kind: input, shape index: {}]
  %s2 = inlined_call_operand.vmem [shape: s32[128,1], index: 2, kind: input, shape index: {}]
  %s3 = inlined_call_operand.vmem [shape: s32[1,128], index: 3, kind: input, shape index: {}]
  %s4 = inlined_call_operand.vmem [shape: f32[128,1], index: 4, kind: output, shape index: {}]
  %s5 = sld [smem:[#allocation0]]
  $region65: #{tpu_custom_call.1} parent=0
    _
  %s7 = ssub.s32 1, %s5
  %s8 = scalar_select 0, %s7, %s5
  loop: start=0, step=1, limit=4
  $region2: #{tpu_custom_call.1} parent=0 // loop_pre_header
    _
  $region3: #{tpu_custom_call.1} parent=0 // loop_header
    %s10 = sphi 0, %s14
    %p11 = scmp.ge.s32.totalorder %s10, 4
    %s17 = sphi 0, %s29
    %s18 = sphi 0, %s25
    %s19 = sphi 0, %s17
    %s20 = sphi 0, %s18
    %s21 = sphi 0, %s19
    %s22 = sphi 0, %s20
    %s32 = sphi 0, %s34
    %s35 = sphi 0, %s32
    %s36 = sphi 0, %s35
    %s52 = sphi 0, %s36
    %s58 = sphi 0, %s60
    %s61 = sphi 0, %s58
    %s62 = sphi 0, %s61
    %s78 = sphi 0, %s62
    %s84 = sphi 0, %s86
    %s87 = sphi 0, %s84
    %s88 = sphi 0, %s87
    %s104 = sphi 0, %s88
    %s110 = sphi 0, %s112
    %s113 = sphi 0, %s110
    %s114 = sphi 0, %s113
    %s130 = sphi 0, %s114
    %s136 = sphi 0, %s138
    %s139 = sphi 0, %s136
    %s140 = sphi 0, %s139
    %s156 = sphi 0, %s140
  $region4: #{tpu_custom_call.1} parent=0 // loop_header_branch
    %13 = sbr.rel (%p11) target = $region8
  $region5: #{tpu_custom_call.1} parent=0 // loop_body
    %s15 = ssub.s32 %s10, 1
    %s16 = ssub.s32 %s10, 2
    %s23 = sadd.s32 1, %s18
    %p24 = scmp.ge.s32.totalorder %s23, 1
    %s25 = scalar_select %p24, 0, %s23
    %s26 = sadd.s32 1, %s17
    %s27 = scalar_select %p24, %s26, %s17
    %p28 = scmp.ge.s32.totalorder %s27, 2
    %s29 = scalar_select %p28, 0, %s27
    %s30 = ssub.s32 %s17, %s29
    %p31 = scmp.eq.s32.totalorder %s30, 0
    %s33 = sadd.s32 %s32, 1
    %s34 = scalar_select %p31, %s32, %s33
    %p37 = pneg %p31
    %p38 = scmp.eq.s32.totalorder %s10, 1
    %p39 = por %p37, %p38
    %p40 = scmp.ne.s32.totalorder %s32, %s35
    %p41 = scmp.eq.s32.totalorder %s10, 0
    %p42 = por %p40, %p41
    %p43 = scmp.ne.s32.totalorder %s32, %s35
    %p44 = scmp.eq.s32.totalorder %s15, 1
    %p45 = por %p43, %p44
    %p46 = scmp.ne.s32.totalorder %s35, %s36
    %p47 = scmp.eq.s32.totalorder %s15, 0
    %p48 = por %p46, %p47
    %p49 = scmp.ne.s32.totalorder %s35, %s36
    %p50 = scmp.eq.s32.totalorder %s16, 1
    %p51 = por %p49, %p50
    %p53 = scmp.ne.s32.totalorder %s36, %s52
    %p54 = scmp.eq.s32.totalorder %s16, 0
    %p55 = por %p53, %p54
    %s56 = ssub.s32 %s18, %s25
    %p57 = scmp.eq.s32.totalorder %s56, 0
    %s59 = sadd.s32 %s58, 1
    %s60 = scalar_select %p57, %s58, %s59
    %p63 = pneg %p57
    %p64 = scmp.eq.s32.totalorder %s10, 1
    %p65 = por %p63, %p64
    %p66 = scmp.ne.s32.totalorder %s58, %s61
    %p67 = scmp.eq.s32.totalorder %s10, 0
    %p68 = por %p66, %p67
    %p69 = scmp.ne.s32.totalorder %s58, %s61
    %p70 = scmp.eq.s32.totalorder %s15, 1
    %p71 = por %p69, %p70
    %p72 = scmp.ne.s32.totalorder %s61, %s62
    %p73 = scmp.eq.s32.totalorder %s15, 0
    %p74 = por %p72, %p73
    %p75 = scmp.ne.s32.totalorder %s61, %s62
    %p76 = scmp.eq.s32.totalorder %s16, 1
    %p77 = por %p75, %p76
    %p79 = scmp.ne.s32.totalorder %s62, %s78
    %p80 = scmp.eq.s32.totalorder %s16, 0
    %p81 = por %p79, %p80
    %s82 = ssub.s32 %s17, %s29
    %p83 = scmp.eq.s32.totalorder %s82, 0
    %s85 = sadd.s32 %s84, 1
    %s86 = scalar_select %p83, %s84, %s85
    %p89 = pneg %p83
    %p90 = scmp.eq.s32.totalorder %s10, 1
    %p91 = por %p89, %p90
    %p92 = scmp.ne.s32.totalorder %s84, %s87
    %p93 = scmp.eq.s32.totalorder %s10, 0
    %p94 = por %p92, %p93
    %p95 = scmp.ne.s32.totalorder %s84, %s87
    %p96 = scmp.eq.s32.totalorder %s15, 1
    %p97 = por %p95, %p96
    %p98 = scmp.ne.s32.totalorder %s87, %s88
    %p99 = scmp.eq.s32.totalorder %s15, 0
    %p100 = por %p98, %p99
    %p101 = scmp.ne.s32.totalorder %s87, %s88
    %p102 = scmp.eq.s32.totalorder %s16, 1
    %p103 = por %p101, %p102
    %p105 = scmp.ne.s32.totalorder %s88, %s104
    %p106 = scmp.eq.s32.totalorder %s16, 0
    %p107 = por %p105, %p106
    %s108 = ssub.s32 %s18, %s25
    %p109 = scmp.eq.s32.totalorder %s108, 0
    %s111 = sadd.s32 %s110, 1
    %s112 = scalar_select %p109, %s110, %s111
    %p115 = pneg %p109
    %p116 = scmp.eq.s32.totalorder %s10, 1
    %p117 = por %p115, %p116
    %p118 = scmp.ne.s32.totalorder %s110, %s113
    %p119 = scmp.eq.s32.totalorder %s10, 0
    %p120 = por %p118, %p119
    %p121 = scmp.ne.s32.totalorder %s110, %s113
    %p122 = scmp.eq.s32.totalorder %s15, 1
    %p123 = por %p121, %p122
    %p124 = scmp.ne.s32.totalorder %s113, %s114
    %p125 = scmp.eq.s32.totalorder %s15, 0
    %p126 = por %p124, %p125
    %p127 = scmp.ne.s32.totalorder %s113, %s114
    %p128 = scmp.eq.s32.totalorder %s16, 1
    %p129 = por %p127, %p128
    %p131 = scmp.ne.s32.totalorder %s114, %s130
    %p132 = scmp.eq.s32.totalorder %s16, 0
    %p133 = por %p131, %p132
    %s134 = ssub.s32 %s17, %s29
    %p135 = scmp.eq.s32.totalorder %s134, 0
    %s137 = sadd.s32 %s136, 1
    %s138 = scalar_select %p135, %s136, %s137
    %p141 = pneg %p135
    %p142 = scmp.eq.s32.totalorder %s10, 1
    %p143 = por %p141, %p142
    %p144 = scmp.ne.s32.totalorder %s136, %s139
    %p145 = scmp.eq.s32.totalorder %s10, 0
    %p146 = por %p144, %p145
    %p147 = scmp.ne.s32.totalorder %s136, %s139
    %p148 = scmp.eq.s32.totalorder %s15, 1
    %p149 = por %p147, %p148
    %p150 = scmp.ne.s32.totalorder %s139, %s140
    %p151 = scmp.eq.s32.totalorder %s15, 0
    %p152 = por %p150, %p151
    %p153 = scmp.ne.s32.totalorder %s139, %s140
    %p154 = scmp.eq.s32.totalorder %s16, 1
    %p155 = por %p153, %p154
    %p157 = scmp.ne.s32.totalorder %s140, %s156
    %p158 = scmp.eq.s32.totalorder %s16, 0
    %p159 = por %p157, %p158
    %p160 = scmp.le.s32.totalorder 1, %s10
    %p161 = scmp.lt.s32.totalorder %s10, 3
    %p162 = pnand %p160, %p161
    %p163 = pneg %p162
    // Predicated region
    $region9: #{tpu_custom_call.1} parent=5 // pred_check
      _
    $region10: #{tpu_custom_call.1} parent=5 // pred_check_branch
      %165 = sbr.rel (%p162) target = $region12
    $region11: #{tpu_custom_call.1} parent=5 // pred_region
      %s166 = ssub.s32 %s10, 1
      // Predicated region
      $region13: #{tpu_custom_call.1} parent=11 // pred_check
        %p167 = pneg %p74
      $region14: #{tpu_custom_call.1} parent=11 // pred_check_branch
        %169 = sbr.rel (%p167) target = $region16
      $region15: #{tpu_custom_call.1} parent=11 // pred_region
        %s170 = smul.u32 16, %s20
        %p171 = scmp.lt.s32.totalorder %s170, 15
        %s172 = scalar_select %p171, %s170, 15
        %s173 = smul.addr %s172, 8
        %s174 = scalar_lea.vmem %s1, %s173
        %s175 = smul.u32 16, %s20
      $region16: #{tpu_custom_call.1} parent=11 // pred_fallthru
        _
      // Predicated region
      $region17: #{tpu_custom_call.1} parent=11 // pred_check
        %p176 = pneg %p126
      $region18: #{tpu_custom_call.1} parent=11 // pred_check_branch
        %178 = sbr.rel (%p176) target = $region20
      $region19: #{tpu_custom_call.1} parent=11 // pred_region
        %p179 = scmp.lt.s32.totalorder %s20, 0
        %s180 = scalar_select %p179, %s20, 0
        %s181 = scalar_lea.vmem %s3, %s180
      $region20: #{tpu_custom_call.1} parent=11 // pred_fallthru
        _
    $region12: #{tpu_custom_call.1} parent=5 // pred_fallthru
      _
    %p182 = scmp.lt.s32.totalorder %s10, 2
    // Predicated region
    $region21: #{tpu_custom_call.1} parent=5 // pred_check
      %p183 = pneg %p182
    $region22: #{tpu_custom_call.1} parent=5 // pred_check_branch
      %185 = sbr.rel (%p183) target = $region24
    $region23: #{tpu_custom_call.1} parent=5 // pred_region
      // Predicated region
      $region25: #{tpu_custom_call.1} parent=23 // pred_check
        %p186 = pneg %p42
      $region26: #{tpu_custom_call.1} parent=23 // pred_check_branch
        %188 = sbr.rel (%p186) target = $region28
      $region27: #{tpu_custom_call.1} parent=23 // pred_region
        %s189 = smul.u32 8, %s17
        %p190 = scmp.lt.s32.totalorder %s189, 15
        %s191 = scalar_select %p190, %s189, 15
        %s192 = smul.addr %s191, 8
        %s193 = scalar_lea.vmem %s0, %s192
        %s194 = smul.u32 8, %s17
      $region28: #{tpu_custom_call.1} parent=23 // pred_fallthru
        _
      // Predicated region
      $region29: #{tpu_custom_call.1} parent=23 // pred_check
        %p195 = pneg %p94
      $region30: #{tpu_custom_call.1} parent=23 // pred_check_branch
        %197 = sbr.rel (%p195) target = $region32
      $region31: #{tpu_custom_call.1} parent=23 // pred_region
        %s198 = smul.u32 8, %s17
        %p199 = scmp.lt.s32.totalorder %s198, 15
        %s200 = scalar_select %p199, %s198, 15
        %s201 = smul.addr %s200, 8
        %s202 = scalar_lea.vmem %s2, %s201
        %s203 = smul.u32 8, %s17
      $region32: #{tpu_custom_call.1} parent=23 // pred_fallthru
        _
    $region24: #{tpu_custom_call.1} parent=5 // pred_fallthru
      _
    %p204 = scmp.le.s32.totalorder 1, %s10
    %p205 = scmp.lt.s32.totalorder %s10, 3
    %p206 = pnand %p204, %p205
    %p207 = pneg %p206
    // Predicated region
    $region33: #{tpu_custom_call.1} parent=5 // pred_check
      _
    $region34: #{tpu_custom_call.1} parent=5 // pred_check_branch
      %209 = sbr.rel (%p206) target = $region36
    $region35: #{tpu_custom_call.1} parent=5 // pred_region
      %s210 = ssub.s32 %s10, 1
      %s211 = smul.u32 8, %s19
      %p212 = scmp.lt.s32.totalorder %s211, 15
      %s213 = scalar_select %p212, %s211, 15
      %s214 = smul.addr %s213, 8
      %s215 = scalar_lea.vmem %s0, %s214
      %p216 = pneg %p48
      %p217 = pneg %p45
      %s218 = smul.u32 16, %s20
      %p219 = scmp.lt.s32.totalorder %s218, 15
      %s220 = scalar_select %p219, %s218, 15
      %s221 = smul.addr %s220, 8
      %s222 = scalar_lea.vmem %s1, %s221
      %p223 = pneg %p74
      %p224 = pneg %p71
      %s225 = smul.u32 8, %s19
      %p226 = scmp.lt.s32.totalorder %s225, 15
      %s227 = scalar_select %p226, %s225, 15
      %s228 = smul.addr %s227, 8
      %s229 = scalar_lea.vmem %s2, %s228
      %p230 = pneg %p100
      %p231 = pneg %p97
      %p232 = scmp.lt.s32.totalorder %s20, 0
      %s233 = scalar_select %p232, %s20, 0
      %s234 = scalar_lea.vmem %s3, %s233
      %p235 = pneg %p126
      %p236 = pneg %p123
      %p237 = pneg %p152
      %p238 = pneg %p149
      %s239 = smul.u32 8, %s19
      %p240 = scmp.lt.s32.totalorder %s239, 15
      %s241 = scalar_select %p240, %s239, 15
      %s242 = smul.addr %s241, 8
      %s243 = scalar_lea.vmem %s4, %s242
      %s244 = smul.u32 8, %s19
      %p245 = scmp.lt.s32.totalorder %s244, 15
      %s246 = scalar_select %p245, %s244, 15
      %s247 = smul.addr %s246, 8
      %s248 = scalar_lea.vmem %s0, %s247
      %s249 = smul.u32 8, %s19
      %s250 = smul.u32 16, %s20
      %p251 = scmp.lt.s32.totalorder %s250, 15
      %s252 = scalar_select %p251, %s250, 15
      %s253 = smul.addr %s252, 8
      %s254 = scalar_lea.vmem %s1, %s253
      %s255 = smul.u32 16, %s20
      %s256 = smul.u32 8, %s19
      %p257 = scmp.lt.s32.totalorder %s256, 15
      %s258 = scalar_select %p257, %s256, 15
      %s259 = smul.addr %s258, 8
      %s260 = scalar_lea.vmem %s2, %s259
      %s261 = smul.u32 8, %s19
      %p262 = scmp.lt.s32.totalorder %s20, 0
      %s263 = scalar_select %p262, %s20, 0
      %s264 = scalar_lea.vmem %s3, %s263
      %s265 = smul.u32 8, %s19
      %p266 = scmp.lt.s32.totalorder %s265, 15
      %s267 = scalar_select %p266, %s265, 15
      %s268 = smul.addr %s267, 8
      %s269 = scalar_lea.vmem %s4, %s268
      %s270 = smul.u32 8, %s19
      %p271 = scmp.eq.s32.totalorder %s20, 0
      // Predicated region
      $region37: #{tpu_custom_call.1} parent=35 // pred_check
        %p272 = pneg %p271
      $region38: #{tpu_custom_call.1} parent=35 // pred_check_branch
        %274 = sbr.rel (%p272) target = $region40
      $region39: #{tpu_custom_call.1} parent=35 // pred_region
        %vm275 = vcmask 7168
        %276 = vst.msk [vmem:[#allocation2] sm:$0xff] %vm275, -inf
        %277 = vst.msk [vmem:[#allocation2 + $0x8] sm:$0xff] %vm275, -inf
        %278 = vst.msk [vmem:[#allocation2 + $0x10] sm:$0xff] %vm275, -inf
        %279 = vst.msk [vmem:[#allocation2 + $0x18] sm:$0xff] %vm275, -inf
        %280 = vst.msk [vmem:[#allocation2 + $0x20] sm:$0xff] %vm275, -inf
        %281 = vst.msk [vmem:[#allocation2 + $0x28] sm:$0xff] %vm275, -inf
        %282 = vst.msk [vmem:[#allocation2 + $0x30] sm:$0xff] %vm275, -inf
        %283 = vst.msk [vmem:[#allocation2 + $0x38] sm:$0xff] %vm275, -inf
        %284 = vst.msk [vmem:[#allocation3] sm:$0xff] %vm275, 0.0
        %285 = vst.msk [vmem:[#allocation3 + $0x8] sm:$0xff] %vm275, 0.0
        %286 = vst.msk [vmem:[#allocation3 + $0x10] sm:$0xff] %vm275, 0.0
        %287 = vst.msk [vmem:[#allocation3 + $0x18] sm:$0xff] %vm275, 0.0
        %288 = vst.msk [vmem:[#allocation3 + $0x20] sm:$0xff] %vm275, 0.0
        %289 = vst.msk [vmem:[#allocation3 + $0x28] sm:$0xff] %vm275, 0.0
        %290 = vst.msk [vmem:[#allocation3 + $0x30] sm:$0xff] %vm275, 0.0
        %291 = vst.msk [vmem:[#allocation3 + $0x38] sm:$0xff] %vm275, 0.0
        %292 = vst.msk [vmem:[#allocation4] sm:$0xff] %vm275, 0.0
        %293 = vst.msk [vmem:[#allocation4 + $0x8] sm:$0xff] %vm275, 0.0
        %294 = vst.msk [vmem:[#allocation4 + $0x10] sm:$0xff] %vm275, 0.0
        %295 = vst.msk [vmem:[#allocation4 + $0x18] sm:$0xff] %vm275, 0.0
        %296 = vst.msk [vmem:[#allocation4 + $0x20] sm:$0xff] %vm275, 0.0
        %297 = vst.msk [vmem:[#allocation4 + $0x28] sm:$0xff] %vm275, 0.0
        %298 = vst.msk [vmem:[#allocation4 + $0x30] sm:$0xff] %vm275, 0.0
        %299 = vst.msk [vmem:[#allocation4 + $0x38] sm:$0xff] %vm275, 0.0
        %300 = vst.msk [vmem:[#allocation5] sm:$0xff] %vm275, 0.0
        %301 = vst.msk [vmem:[#allocation5 + $0x8] sm:$0xff] %vm275, 0.0
        %302 = vst.msk [vmem:[#allocation5 + $0x10] sm:$0xff] %vm275, 0.0
        %303 = vst.msk [vmem:[#allocation5 + $0x18] sm:$0xff] %vm275, 0.0
        %304 = vst.msk [vmem:[#allocation5 + $0x20] sm:$0xff] %vm275, 0.0
        %305 = vst.msk [vmem:[#allocation5 + $0x28] sm:$0xff] %vm275, 0.0
        %306 = vst.msk [vmem:[#allocation5 + $0x30] sm:$0xff] %vm275, 0.0
        %307 = vst.msk [vmem:[#allocation5 + $0x38] sm:$0xff] %vm275, 0.0
      $region40: #{tpu_custom_call.1} parent=35 // pred_fallthru
        _
      %s308 = smul.u32 %s19, 64
      %s309 = smul.u32 %s20, 128
      %v310 = vld [vmem:[%s248] sm:$0xff]
      %v311 = vld [vmem:[%s248 + $0x8] sm:$0xff]
      %v312 = vld [vmem:[%s248 + $0x10] sm:$0xff]
      %v313 = vld [vmem:[%s248 + $0x18] sm:$0xff]
      %v314 = vld [vmem:[%s248 + $0x20] sm:$0xff]
      %v315 = vld [vmem:[%s248 + $0x28] sm:$0xff]
      %v316 = vld [vmem:[%s248 + $0x30] sm:$0xff]
      %v317 = vld [vmem:[%s248 + $0x38] sm:$0xff]
      %v318 = vld [vmem:[%s260] sm:$0xff]
      %v319 = vld [vmem:[%s260 + $0x8] sm:$0xff]
      %v320 = vld [vmem:[%s260 + $0x10] sm:$0xff]
      %v321 = vld [vmem:[%s260 + $0x18] sm:$0xff]
      %v322 = vld [vmem:[%s260 + $0x20] sm:$0xff]
      %v323 = vld [vmem:[%s260 + $0x28] sm:$0xff]
      %v324 = vld [vmem:[%s260 + $0x30] sm:$0xff]
      %v325 = vld [vmem:[%s260 + $0x38] sm:$0xff]
      %p326 = scmp.ge.s32.totalorder %s308, %s309
      %s327 = sadd.s32 %s309, 128
      %p328 = scmp.lt.s32.totalorder %s308, %s327
      %p329 = pnand %p326, %p328
      %p330 = pneg %p329
      // Predicated region
      $region41: #{tpu_custom_call.1} parent=35 // pred_check
        _
      $region42: #{tpu_custom_call.1} parent=35 // pred_check_branch
        %332 = sbr.rel (%p329) target = $region44
      $region43: #{tpu_custom_call.1} parent=35 // pred_region
        %v333 = vld [vmem:[#allocation2] sm:$0xff]
        %v334 = vld [vmem:[#allocation2 + $0x8] sm:$0xff]
        %v335 = vld [vmem:[#allocation2 + $0x10] sm:$0xff]
        %v336 = vld [vmem:[#allocation2 + $0x18] sm:$0xff]
        %v337 = vld [vmem:[#allocation2 + $0x20] sm:$0xff]
        %v338 = vld [vmem:[#allocation2 + $0x28] sm:$0xff]
        %v339 = vld [vmem:[#allocation2 + $0x30] sm:$0xff]
        %v340 = vld [vmem:[#allocation2 + $0x38] sm:$0xff]
        %v341 = vld [vmem:[#allocation3] sm:$0xff]
        %v342 = vld [vmem:[#allocation3 + $0x8] sm:$0xff]
        %v343 = vld [vmem:[#allocation3 + $0x10] sm:$0xff]
        %v344 = vld [vmem:[#allocation3 + $0x18] sm:$0xff]
        %v345 = vld [vmem:[#allocation3 + $0x20] sm:$0xff]
        %v346 = vld [vmem:[#allocation3 + $0x28] sm:$0xff]
        %v347 = vld [vmem:[#allocation3 + $0x30] sm:$0xff]
        %v348 = vld [vmem:[#allocation3 + $0x38] sm:$0xff]
        %v349 = vld [vmem:[#allocation4] sm:$0xff]
        %v350 = vld [vmem:[#allocation4 + $0x8] sm:$0xff]
        %v351 = vld [vmem:[#allocation4 + $0x10] sm:$0xff]
        %v352 = vld [vmem:[#allocation4 + $0x18] sm:$0xff]
        %v353 = vld [vmem:[#allocation4 + $0x20] sm:$0xff]
        %v354 = vld [vmem:[#allocation4 + $0x28] sm:$0xff]
        %v355 = vld [vmem:[#allocation4 + $0x30] sm:$0xff]
        %v356 = vld [vmem:[#allocation4 + $0x38] sm:$0xff]
        %v357 = vld [vmem:[#allocation5] sm:$0xff]
        %v358 = vld [vmem:[#allocation5 + $0x8] sm:$0xff]
        %v359 = vld [vmem:[#allocation5 + $0x10] sm:$0xff]
        %v360 = vld [vmem:[#allocation5 + $0x18] sm:$0xff]
        %v361 = vld [vmem:[#allocation5 + $0x20] sm:$0xff]
        %v362 = vld [vmem:[#allocation5 + $0x28] sm:$0xff]
        %v363 = vld [vmem:[#allocation5 + $0x30] sm:$0xff]
        %v364 = vld [vmem:[#allocation5 + $0x38] sm:$0xff]
        %v365 = vlaneseq
        %v366 = vand.u32 %v365, 127
        %v367 = vlaneseq
        %v368 = vshrl.u32 %v367, 7
        %v369 = vadd.s32 %v368, 8
        %v370 = vadd.s32 %v368, 16
        %v371 = vadd.s32 %v368, 24
        %v372 = vadd.s32 %v368, 32
        %v373 = vadd.s32 %v368, 40
        %v374 = vadd.s32 %v368, 48
        %v375 = vadd.s32 %v368, 56
        %v376 = vsub.s32 %v366, %v368
        %v377 = vsub.s32 %v366, %v369
        %v378 = vsub.s32 %v366, %v370
        %v379 = vsub.s32 %v366, %v371
        %v380 = vsub.s32 %v366, %v372
        %v381 = vsub.s32 %v366, %v373
        %v382 = vsub.s32 %v366, %v374
        %v383 = vsub.s32 %v366, %v375
        %v384 = vld [vmem:[%s254] sm:$0xff]
        %v385 = vld [vmem:[%s254 + $0x8] sm:$0xff]
        %v386 = vld [vmem:[%s254 + $0x10] sm:$0xff]
        %v387 = vld [vmem:[%s254 + $0x18] sm:$0xff]
        %v388 = vld [vmem:[%s254 + $0x20] sm:$0xff]
        %v389 = vld [vmem:[%s254 + $0x28] sm:$0xff]
        %v390 = vld [vmem:[%s254 + $0x30] sm:$0xff]
        %v391 = vld [vmem:[%s254 + $0x38] sm:$0xff]
        %v392 = vld [vmem:[%s254 + $0x40] sm:$0xff]
        %v393 = vld [vmem:[%s254 + $0x48] sm:$0xff]
        %v394 = vld [vmem:[%s254 + $0x50] sm:$0xff]
        %v395 = vld [vmem:[%s254 + $0x58] sm:$0xff]
        %v396 = vld [vmem:[%s254 + $0x60] sm:$0xff]
        %v397 = vld [vmem:[%s254 + $0x68] sm:$0xff]
        %v398 = vld [vmem:[%s254 + $0x70] sm:$0xff]
        %v399 = vld [vmem:[%s254 + $0x78] sm:$0xff]
        %v400 = vld [vmem:[%s264] sm:$0x1]
        %vm401 = vcmask 261120
        %v403 = vsel %vm401, %v310, 0
        %v406 = vsel %vm401, %v311, 0
        %v409 = vsel %vm401, %v312, 0
        %v412 = vsel %vm401, %v313, 0
        %v415 = vsel %vm401, %v314, 0
        %v418 = vsel %vm401, %v315, 0
        %v421 = vsel %vm401, %v316, 0
        %v424 = vsel %vm401, %v317, 0
        %v427 = vsel %vm401, %v384, 0
        %v430 = vsel %vm401, %v385, 0
        %v433 = vsel %vm401, %v386, 0
        %v436 = vsel %vm401, %v387, 0
        %v439 = vsel %vm401, %v388, 0
        %v442 = vsel %vm401, %v389, 0
        %v445 = vsel %vm401, %v390, 0
        %v448 = vsel %vm401, %v391, 0
        %v451 = vsel %vm401, %v392, 0
        %v454 = vsel %vm401, %v393, 0
        %v457 = vsel %vm401, %v394, 0
        %v460 = vsel %vm401, %v395, 0
        %v463 = vsel %vm401, %v396, 0
        %v466 = vsel %vm401, %v397, 0
        %v469 = vsel %vm401, %v398, 0
        %v472 = vsel %vm401, %v399, 0
        %474 = vmatprep.subr.mxu0 0.0
        %v475 = vand.u32 %v427, 4294901760
        %476 = vmatpush1.xpose.msra.mxu0 %v475
        %477 = vmatprep.subr.mxu0 0.0
        %v478 = vand.u32 %v430, 4294901760
        %479 = vmatpush1.xpose.msra.mxu0 %v478
        %480 = vmatprep.subr.mxu0 0.0
        %v481 = vand.u32 %v433, 4294901760
        %482 = vmatpush1.xpose.msra.mxu0 %v481
        %483 = vmatprep.subr.mxu0 0.0
        %v484 = vand.u32 %v436, 4294901760
        %485 = vmatpush1.xpose.msra.mxu0 %v484
        %486 = vmatprep.subr.mxu0 0.0
        %v487 = vand.u32 %v439, 4294901760
        %488 = vmatpush1.xpose.msra.mxu0 %v487
        %489 = vmatprep.subr.mxu0 0.0
        %v490 = vand.u32 %v442, 4294901760
        %491 = vmatpush1.xpose.msra.mxu0 %v490
        %492 = vmatprep.subr.mxu0 0.0
        %v493 = vand.u32 %v445, 4294901760
        %494 = vmatpush1.xpose.msra.mxu0 %v493
        %495 = vmatprep.subr.mxu0 0.0
        %v496 = vand.u32 %v448, 4294901760
        %497 = vmatpush1.xpose.msra.mxu0 %v496
        %498 = vmatprep.subr.mxu0 0.0
        %v499 = vand.u32 %v451, 4294901760
        %500 = vmatpush1.xpose.msra.mxu0 %v499
        %501 = vmatprep.subr.mxu0 0.0
        %v502 = vand.u32 %v454, 4294901760
        %503 = vmatpush1.xpose.msra.mxu0 %v502
        %504 = vmatprep.subr.mxu0 0.0
        %v505 = vand.u32 %v457, 4294901760
        %506 = vmatpush1.xpose.msra.mxu0 %v505
        %507 = vmatprep.subr.mxu0 0.0
        %v508 = vand.u32 %v460, 4294901760
        %509 = vmatpush1.xpose.msra.mxu0 %v508
        %510 = vmatprep.subr.mxu0 0.0
        %v511 = vand.u32 %v463, 4294901760
        %512 = vmatpush1.xpose.msra.mxu0 %v511
        %513 = vmatprep.subr.mxu0 0.0
        %v514 = vand.u32 %v466, 4294901760
        %515 = vmatpush1.xpose.msra.mxu0 %v514
        %516 = vmatprep.subr.mxu0 0.0
        %v517 = vand.u32 %v469, 4294901760
        %518 = vmatpush1.xpose.msra.mxu0 %v517
        %519 = vmatprep.subr.mxu0 0.0
        %v520 = vand.u32 %v472, 4294901760
        %521 = vmatpush1.xpose.msra.mxu0 %v520
        %522 = vmatprep.subr.mxu0 0.0
        %523 = vmatpush1.xpose.msra.mxu0 0.0
        %524 = vmatprep.subr.mxu0 0.0
        %525 = vmatpush1.xpose.msra.mxu0 0.0
        %526 = vmatprep.subr.mxu0 0.0
        %527 = vmatpush1.xpose.msra.mxu0 0.0
        %528 = vmatprep.subr.mxu0 0.0
        %529 = vmatpush1.xpose.msra.mxu0 0.0
        %530 = vmatprep.subr.mxu0 0.0
        %531 = vmatpush1.xpose.msra.mxu0 0.0
        %532 = vmatprep.subr.mxu0 0.0
        %533 = vmatpush1.xpose.msra.mxu0 0.0
        %534 = vmatprep.subr.mxu0 0.0
        %535 = vmatpush1.xpose.msra.mxu0 0.0
        %536 = vmatprep.subr.mxu0 0.0
        %537 = vmatpush1.xpose.msra.mxu0 0.0
        %538 = vmatprep.subr.mxu0 0.0
        %539 = vmatpush1.xpose.msra.mxu0 0.0
        %540 = vmatprep.subr.mxu0 0.0
        %541 = vmatpush1.xpose.msra.mxu0 0.0
        %542 = vmatprep.subr.mxu0 0.0
        %543 = vmatpush1.xpose.msra.mxu0 0.0
        %544 = vmatprep.subr.mxu0 0.0
        %545 = vmatpush1.xpose.msra.mxu0 0.0
        %546 = vmatprep.subr.mxu0 0.0
        %547 = vmatpush1.xpose.msra.mxu0 0.0
        %548 = vmatprep.subr.mxu0 0.0
        %549 = vmatpush1.xpose.msra.mxu0 0.0
        %550 = vmatprep.subr.mxu0 0.0
        %551 = vmatpush1.xpose.msra.mxu0 0.0
        %552 = vmatprep.subr.mxu0 0.0
        %553 = vmatpush1.xpose.msra.mxu0 0.0
        %554 = vmatprep.mubr.f32.mxu0 0.0
        %v555 = vand.u32 %v403, 4294901760
        %v556 = vsub.f32 %v403, %v555
        %v557 = vand.u32 %v556, 4294901760
        %v558 = vsub.f32 %v556, %v557
        %v559 = vand.u32 %v558, 4294901760
        %560 = vmatmul.mubr.f32.gmra.mrb[0].mxu0 %v559
        %v561 = vpop.f32.mrb[0].mxu0
        %v562 = vadd.f32 0.0, %v561
        %v563 = vpop.f32.mrb[0].mxu0
        %564 = vmatprep.mubr.f32.mxu0 0.0
        %v565 = vand.u32 %v406, 4294901760
        %v566 = vsub.f32 %v406, %v565
        %v567 = vand.u32 %v566, 4294901760
        %v568 = vsub.f32 %v566, %v567
        %v569 = vand.u32 %v568, 4294901760
        %570 = vmatmul.mubr.f32.gmra.mrb[0].mxu0 %v569
        %v571 = vpop.f32.mrb[0].mxu0
        %v572 = vadd.f32 0.0, %v571
        %v573 = vpop.f32.mrb[0].mxu0
        %574 = vmatprep.mubr.f32.mxu0 0.0
        %v575 = vand.u32 %v409, 4294901760
        %v576 = vsub.f32 %v409, %v575
        %v577 = vand.u32 %v576, 4294901760
        %v578 = vsub.f32 %v576, %v577
        %v579 = vand.u32 %v578, 4294901760
        %580 = vmatmul.mubr.f32.gmra.mrb[0].mxu0 %v579
        %v581 = vpop.f32.mrb[0].mxu0
        %v582 = vadd.f32 0.0, %v581
        %v583 = vpop.f32.mrb[0].mxu0
        %584 = vmatprep.mubr.f32.mxu0 0.0
        %v585 = vand.u32 %v412, 4294901760
        %v586 = vsub.f32 %v412, %v585
        %v587 = vand.u32 %v586, 4294901760
        %v588 = vsub.f32 %v586, %v587
        %v589 = vand.u32 %v588, 4294901760
        %590 = vmatmul.mubr.f32.gmra.mrb[0].mxu0 %v589
        %v591 = vpop.f32.mrb[0].mxu0
        %v592 = vadd.f32 0.0, %v591
        %v593 = vpop.f32.mrb[0].mxu0
        %594 = vmatprep.mubr.f32.mxu0 0.0
        %v595 = vand.u32 %v415, 4294901760
        %v596 = vsub.f32 %v415, %v595
        %v597 = vand.u32 %v596, 4294901760
        %v598 = vsub.f32 %v596, %v597
        %v599 = vand.u32 %v598, 4294901760
        %600 = vmatmul.mubr.f32.gmra.mrb[0].mxu0 %v599
        %v601 = vpop.f32.mrb[0].mxu0
        %v602 = vadd.f32 0.0, %v601
        %v603 = vpop.f32.mrb[0].mxu0
        %604 = vmatprep.mubr.f32.mxu0 0.0
        %v605 = vand.u32 %v418, 4294901760
        %v606 = vsub.f32 %v418, %v605
        %v607 = vand.u32 %v606, 4294901760
        %v608 = vsub.f32 %v606, %v607
        %v609 = vand.u32 %v608, 4294901760
        %610 = vmatmul.mubr.f32.gmra.mrb[0].mxu0 %v609
        %v611 = vpop.f32.mrb[0].mxu0
        %v612 = vadd.f32 0.0, %v611
        %v613 = vpop.f32.mrb[0].mxu0
        %614 = vmatprep.mubr.f32.mxu0 0.0
        %v615 = vand.u32 %v421, 4294901760
        %v616 = vsub.f32 %v421, %v615
        %v617 = vand.u32 %v616, 4294901760
        %v618 = vsub.f32 %v616, %v617
        %v619 = vand.u32 %v618, 4294901760
        %620 = vmatmul.mubr.f32.gmra.mrb[0].mxu0 %v619
        %v621 = vpop.f32.mrb[0].mxu0
        %v622 = vadd.f32 0.0, %v621
        %v623 = vpop.f32.mrb[0].mxu0
        %624 = vmatprep.mubr.f32.mxu0 0.0
        %v625 = vand.u32 %v424, 4294901760
        %v626 = vsub.f32 %v424, %v625
        %v627 = vand.u32 %v626, 4294901760
        %v628 = vsub.f32 %v626, %v627
        %v629 = vand.u32 %v628, 4294901760
        %630 = vmatmul.mubr.f32.gmra.mrb[0].mxu0 %v629
        %v631 = vpop.f32.mrb[0].mxu0
        %v632 = vadd.f32 0.0, %v631
        %v633 = vpop.f32.mrb[0].mxu0
        %634 = vdwg.mxu0
        %635 = vmatprep.subr.mxu0 0.0
        %v636 = vand.u32 %v427, 4294901760
        %v637 = vsub.f32 %v427, %v636
        %v638 = vand.u32 %v637, 4294901760
        %v639 = vsub.f32 %v637, %v638
        %v640 = vand.u32 %v639, 4294901760
        %641 = vmatpush1.xpose.msra.mxu0 %v640
        %642 = vmatprep.subr.mxu0 0.0
        %v643 = vand.u32 %v430, 4294901760
        %v644 = vsub.f32 %v430, %v643
        %v645 = vand.u32 %v644, 4294901760
        %v646 = vsub.f32 %v644, %v645
        %v647 = vand.u32 %v646, 4294901760
        %648 = vmatpush1.xpose.msra.mxu0 %v647
        %649 = vmatprep.subr.mxu0 0.0
        %v650 = vand.u32 %v433, 4294901760
        %v651 = vsub.f32 %v433, %v650
        %v652 = vand.u32 %v651, 4294901760
        %v653 = vsub.f32 %v651, %v652
        %v654 = vand.u32 %v653, 4294901760
        %655 = vmatpush1.xpose.msra.mxu0 %v654
        %656 = vmatprep.subr.mxu0 0.0
        %v657 = vand.u32 %v436, 4294901760
        %v658 = vsub.f32 %v436, %v657
        %v659 = vand.u32 %v658, 4294901760
        %v660 = vsub.f32 %v658, %v659
        %v661 = vand.u32 %v660, 4294901760
        %662 = vmatpush1.xpose.msra.mxu0 %v661
        %663 = vmatprep.subr.mxu0 0.0
        %v664 = vand.u32 %v439, 4294901760
        %v665 = vsub.f32 %v439, %v664
        %v666 = vand.u32 %v665, 4294901760
        %v667 = vsub.f32 %v665, %v666
        %v668 = vand.u32 %v667, 4294901760
        %669 = vmatpush1.xpose.msra.mxu0 %v668
        %670 = vmatprep.subr.mxu0 0.0
        %v671 = vand.u32 %v442, 4294901760
        %v672 = vsub.f32 %v442, %v671
        %v673 = vand.u32 %v672, 4294901760
        %v674 = vsub.f32 %v672, %v673
        %v675 = vand.u32 %v674, 4294901760
        %676 = vmatpush1.xpose.msra.mxu0 %v675
        %677 = vmatprep.subr.mxu0 0.0
        %v678 = vand.u32 %v445, 4294901760
        %v679 = vsub.f32 %v445, %v678
        %v680 = vand.u32 %v679, 4294901760
        %v681 = vsub.f32 %v679, %v680
        %v682 = vand.u32 %v681, 4294901760
        %683 = vmatpush1.xpose.msra.mxu0 %v682
        %684 = vmatprep.subr.mxu0 0.0
        %v685 = vand.u32 %v448, 4294901760
        %v686 = vsub.f32 %v448, %v685
        %v687 = vand.u32 %v686, 4294901760
        %v688 = vsub.f32 %v686, %v687
        %v689 = vand.u32 %v688, 4294901760
        %690 = vmatpush1.xpose.msra.mxu0 %v689
        %691 = vmatprep.subr.mxu0 0.0
        %v692 = vand.u32 %v451, 4294901760
        %v693 = vsub.f32 %v451, %v692
        %v694 = vand.u32 %v693, 4294901760
        %v695 = vsub.f32 %v693, %v694
        %v696 = vand.u32 %v695, 4294901760
        %697 = vmatpush1.xpose.msra.mxu0 %v696
        %698 = vmatprep.subr.mxu0 0.0
        %v699 = vand.u32 %v454, 4294901760
        %v700 = vsub.f32 %v454, %v699
        %v701 = vand.u32 %v700, 4294901760
        %v702 = vsub.f32 %v700, %v701
        %v703 = vand.u32 %v702, 4294901760
        %704 = vmatpush1.xpose.msra.mxu0 %v703
        %705 = vmatprep.subr.mxu0 0.0
        %v706 = vand.u32 %v457, 4294901760
        %v707 = vsub.f32 %v457, %v706
        %v708 = vand.u32 %v707, 4294901760
        %v709 = vsub.f32 %v707, %v708
        %v710 = vand.u32 %v709, 4294901760
        %711 = vmatpush1.xpose.msra.mxu0 %v710
        %712 = vmatprep.subr.mxu0 0.0
        %v713 = vand.u32 %v460, 4294901760
        %v714 = vsub.f32 %v460, %v713
        %v715 = vand.u32 %v714, 4294901760
        %v716 = vsub.f32 %v714, %v715
        %v717 = vand.u32 %v716, 4294901760
        %718 = vmatpush1.xpose.msra.mxu0 %v717
        %719 = vmatprep.subr.mxu0 0.0
        %v720 = vand.u32 %v463, 4294901760
        %v721 = vsub.f32 %v463, %v720
        %v722 = vand.u32 %v721, 4294901760
        %v723 = vsub.f32 %v721, %v722
        %v724 = vand.u32 %v723, 4294901760
        %725 = vmatpush1.xpose.msra.mxu0 %v724
        %726 = vmatprep.subr.mxu0 0.0
        %v727 = vand.u32 %v466, 4294901760
        %v728 = vsub.f32 %v466, %v727
        %v729 = vand.u32 %v728, 4294901760
        %v730 = vsub.f32 %v728, %v729
        %v731 = vand.u32 %v730, 4294901760
        %732 = vmatpush1.xpose.msra.mxu0 %v731
        %733 = vmatprep.subr.mxu0 0.0
        %v734 = vand.u32 %v469, 4294901760
        %v735 = vsub.f32 %v469, %v734
        %v736 = vand.u32 %v735, 4294901760
        %v737 = vsub.f32 %v735, %v736
        %v738 = vand.u32 %v737, 4294901760
        %739 = vmatpush1.xpose.msra.mxu0 %v738
        %740 = vmatprep.subr.mxu0 0.0
        %v741 = vand.u32 %v472, 4294901760
        %v742 = vsub.f32 %v472, %v741
        %v743 = vand.u32 %v742, 4294901760
        %v744 = vsub.f32 %v742, %v743
        %v745 = vand.u32 %v744, 4294901760
        %746 = vmatpush1.xpose.msra.mxu0 %v745
        %747 = vmatprep.subr.mxu0 0.0
        %748 = vmatpush1.xpose.msra.mxu0 0.0
        %749 = vmatprep.subr.mxu0 0.0
        %750 = vmatpush1.xpose.msra.mxu0 0.0
        %751 = vmatprep.subr.mxu0 0.0
        %752 = vmatpush1.xpose.msra.mxu0 0.0
        %753 = vmatprep.subr.mxu0 0.0
        %754 = vmatpush1.xpose.msra.mxu0 0.0
        %755 = vmatprep.subr.mxu0 0.0
        %756 = vmatpush1.xpose.msra.mxu0 0.0
        %757 = vmatprep.subr.mxu0 0.0
        %758 = vmatpush1.xpose.msra.mxu0 0.0
        %759 = vmatprep.subr.mxu0 0.0
        %760 = vmatpush1.xpose.msra.mxu0 0.0
        %761 = vmatprep.subr.mxu0 0.0
        %762 = vmatpush1.xpose.msra.mxu0 0.0
        %763 = vmatprep.subr.mxu0 0.0
        %764 = vmatpush1.xpose.msra.mxu0 0.0
        %765 = vmatprep.subr.mxu0 0.0
        %766 = vmatpush1.xpose.msra.mxu0 0.0
        %767 = vmatprep.subr.mxu0 0.0
        %768 = vmatpush1.xpose.msra.mxu0 0.0
        %769 = vmatprep.subr.mxu0 0.0
        %770 = vmatpush1.xpose.msra.mxu0 0.0
        %771 = vmatprep.subr.mxu0 0.0
        %772 = vmatpush1.xpose.msra.mxu0 0.0
        %773 = vmatprep.subr.mxu0 0.0
        %774 = vmatpush1.xpose.msra.mxu0 0.0
        %775 = vmatprep.subr.mxu0 0.0
        %776 = vmatpush1.xpose.msra.mxu0 0.0
        %777 = vmatprep.subr.mxu0 0.0
        %778 = vmatpush1.xpose.msra.mxu0 0.0
        %779 = vmatprep.mubr.f32.mxu0 0.0
        %v780 = vand.u32 %v403, 4294901760
        %781 = vmatmul.mubr.f32.gmra.mrb[0].mxu0 %v780
        %v782 = vpop.f32.mrb[0].mxu0
        %v783 = vadd.f32 %v562, %v782
        %v784 = vpop.f32.mrb[0].mxu0
        %785 = vmatprep.mubr.f32.mxu0 0.0
        %v786 = vand.u32 %v406, 4294901760
        %787 = vmatmul.mubr.f32.gmra.mrb[0].mxu0 %v786
        %v788 = vpop.f32.mrb[0].mxu0
        %v789 = vadd.f32 %v572, %v788
        %v790 = vpop.f32.mrb[0].mxu0
        %791 = vmatprep.mubr.f32.mxu0 0.0
        %v792 = vand.u32 %v409, 4294901760
        %793 = vmatmul.mubr.f32.gmra.mrb[0].mxu0 %v792
        %v794 = vpop.f32.mrb[0].mxu0
        %v795 = vadd.f32 %v582, %v794
        %v796 = vpop.f32.mrb[0].mxu0
        %797 = vmatprep.mubr.f32.mxu0 0.0
        %v798 = vand.u32 %v412, 4294901760
        %799 = vmatmul.mubr.f32.gmra.mrb[0].mxu0 %v798
        %v800 = vpop.f32.mrb[0].mxu0
        %v801 = vadd.f32 %v592, %v800
        %v802 = vpop.f32.mrb[0].mxu0
        %803 = vmatprep.mubr.f32.mxu0 0.0
        %v804 = vand.u32 %v415, 4294901760
        %805 = vmatmul.mubr.f32.gmra.mrb[0].mxu0 %v804
        %v806 = vpop.f32.mrb[0].mxu0
        %v807 = vadd.f32 %v602, %v806
        %v808 = vpop.f32.mrb[0].mxu0
        %809 = vmatprep.mubr.f32.mxu0 0.0
        %v810 = vand.u32 %v418, 4294901760
        %811 = vmatmul.mubr.f32.gmra.mrb[0].mxu0 %v810
        %v812 = vpop.f32.mrb[0].mxu0
        %v813 = vadd.f32 %v612, %v812
        %v814 = vpop.f32.mrb[0].mxu0
        %815 = vmatprep.mubr.f32.mxu0 0.0
        %v816 = vand.u32 %v421, 4294901760
        %817 = vmatmul.mubr.f32.gmra.mrb[0].mxu0 %v816
        %v818 = vpop.f32.mrb[0].mxu0
        %v819 = vadd.f32 %v622, %v818
        %v820 = vpop.f32.mrb[0].mxu0
        %821 = vmatprep.mubr.f32.mxu0 0.0
        %v822 = vand.u32 %v424, 4294901760
        %823 = vmatmul.mubr.f32.gmra.mrb[0].mxu0 %v822
        %v824 = vpop.f32.mrb[0].mxu0
        %v825 = vadd.f32 %v632, %v824
        %v826 = vpop.f32.mrb[0].mxu0
        %827 = vdwg.mxu0
        %828 = vmatprep.subr.mxu0 0.0
        %v829 = vand.u32 %v427, 4294901760
        %v830 = vsub.f32 %v427, %v829
        %831 = vmatpush1.xpose.msra.mxu0 %v830
        %832 = vmatprep.subr.mxu0 0.0
        %v833 = vand.u32 %v430, 4294901760
        %v834 = vsub.f32 %v430, %v833
        %835 = vmatpush1.xpose.msra.mxu0 %v834
        %836 = vmatprep.subr.mxu0 0.0
        %v837 = vand.u32 %v433, 4294901760
        %v838 = vsub.f32 %v433, %v837
        %839 = vmatpush1.xpose.msra.mxu0 %v838
        %840 = vmatprep.subr.mxu0 0.0
        %v841 = vand.u32 %v436, 4294901760
        %v842 = vsub.f32 %v436, %v841
        %843 = vmatpush1.xpose.msra.mxu0 %v842
        %844 = vmatprep.subr.mxu0 0.0
        %v845 = vand.u32 %v439, 4294901760
        %v846 = vsub.f32 %v439, %v845
        %847 = vmatpush1.xpose.msra.mxu0 %v846
        %848 = vmatprep.subr.mxu0 0.0
        %v849 = vand.u32 %v442, 4294901760
        %v850 = vsub.f32 %v442, %v849
        %851 = vmatpush1.xpose.msra.mxu0 %v850
        %852 = vmatprep.subr.mxu0 0.0
        %v853 = vand.u32 %v445, 4294901760
        %v854 = vsub.f32 %v445, %v853
        %855 = vmatpush1.xpose.msra.mxu0 %v854
        %856 = vmatprep.subr.mxu0 0.0
        %v857 = vand.u32 %v448, 4294901760
        %v858 = vsub.f32 %v448, %v857
        %859 = vmatpush1.xpose.msra.mxu0 %v858
        %860 = vmatprep.subr.mxu0 0.0
        %v861 = vand.u32 %v451, 4294901760
        %v862 = vsub.f32 %v451, %v861
        %863 = vmatpush1.xpose.msra.mxu0 %v862
        %864 = vmatprep.subr.mxu0 0.0
        %v865 = vand.u32 %v454, 4294901760
        %v866 = vsub.f32 %v454, %v865
        %867 = vmatpush1.xpose.msra.mxu0 %v866
        %868 = vmatprep.subr.mxu0 0.0
        %v869 = vand.u32 %v457, 4294901760
        %v870 = vsub.f32 %v457, %v869
        %871 = vmatpush1.xpose.msra.mxu0 %v870
        %872 = vmatprep.subr.mxu0 0.0
        %v873 = vand.u32 %v460, 4294901760
        %v874 = vsub.f32 %v460, %v873
        %875 = vmatpush1.xpose.msra.mxu0 %v874
        %876 = vmatprep.subr.mxu0 0.0
        %v877 = vand.u32 %v463, 4294901760
        %v878 = vsub.f32 %v463, %v877
        %879 = vmatpush1.xpose.msra.mxu0 %v878
        %880 = vmatprep.subr.mxu0 0.0
        %v881 = vand.u32 %v466, 4294901760
        %v882 = vsub.f32 %v466, %v881
        %883 = vmatpush1.xpose.msra.mxu0 %v882
        %884 = vmatprep.subr.mxu0 0.0
        %v885 = vand.u32 %v469, 4294901760
        %v886 = vsub.f32 %v469, %v885
        %887 = vmatpush1.xpose.msra.mxu0 %v886
        %888 = vmatprep.subr.mxu0 0.0
        %v889 = vand.u32 %v472, 4294901760
        %v890 = vsub.f32 %v472, %v889
        %891 = vmatpush1.xpose.msra.mxu0 %v890
        %892 = vmatprep.subr.mxu0 0.0
        %893 = vmatpush1.xpose.msra.mxu0 0.0
        %894 = vmatprep.subr.mxu0 0.0
        %895 = vmatpush1.xpose.msra.mxu0 0.0
        %896 = vmatprep.subr.mxu0 0.0
        %897 = vmatpush1.xpose.msra.mxu0 0.0
        %898 = vmatprep.subr.mxu0 0.0
        %899 = vmatpush1.xpose.msra.mxu0 0.0
        %900 = vmatprep.subr.mxu0 0.0
        %901 = vmatpush1.xpose.msra.mxu0 0.0
        %902 = vmatprep.subr.mxu0 0.0
        %903 = vmatpush1.xpose.msra.mxu0 0.0
        %904 = vmatprep.subr.mxu0 0.0
        %905 = vmatpush1.xpose.msra.mxu0 0.0
        %906 = vmatprep.subr.mxu0 0.0
        %907 = vmatpush1.xpose.msra.mxu0 0.0
        %908 = vmatprep.subr.mxu0 0.0
        %909 = vmatpush1.xpose.msra.mxu0 0.0
        %910 = vmatprep.subr.mxu0 0.0
        %911 = vmatpush1.xpose.msra.mxu0 0.0
        %912 = vmatprep.subr.mxu0 0.0
        %913 = vmatpush1.xpose.msra.mxu0 0.0
        %914 = vmatprep.subr.mxu0 0.0
        %915 = vmatpush1.xpose.msra.mxu0 0.0
        %916 = vmatprep.subr.mxu0 0.0
        %917 = vmatpush1.xpose.msra.mxu0 0.0
        %918 = vmatprep.subr.mxu0 0.0
        %919 = vmatpush1.xpose.msra.mxu0 0.0
        %920 = vmatprep.subr.mxu0 0.0
        %921 = vmatpush1.xpose.msra.mxu0 0.0
        %922 = vmatprep.subr.mxu0 0.0
        %923 = vmatpush1.xpose.msra.mxu0 0.0
        %924 = vmatprep.mubr.f32.mxu0 0.0
        %v925 = vand.u32 %v403, 4294901760
        %v926 = vsub.f32 %v403, %v925
        %927 = vmatmul.mubr.f32.gmra.mrb[0].mxu0 %v926
        %v928 = vpop.f32.mrb[0].mxu0
        %v929 = vadd.f32 %v783, %v928
        %v930 = vpop.f32.mrb[0].mxu0
        %931 = vmatprep.mubr.f32.mxu0 0.0
        %v932 = vand.u32 %v406, 4294901760
        %v933 = vsub.f32 %v406, %v932
        %934 = vmatmul.mubr.f32.gmra.mrb[0].mxu0 %v933
        %v935 = vpop.f32.mrb[0].mxu0
        %v936 = vadd.f32 %v789, %v935
        %v937 = vpop.f32.mrb[0].mxu0
        %938 = vmatprep.mubr.f32.mxu0 0.0
        %v939 = vand.u32 %v409, 4294901760
        %v940 = vsub.f32 %v409, %v939
        %941 = vmatmul.mubr.f32.gmra.mrb[0].mxu0 %v940
        %v942 = vpop.f32.mrb[0].mxu0
        %v943 = vadd.f32 %v795, %v942
        %v944 = vpop.f32.mrb[0].mxu0
        %945 = vmatprep.mubr.f32.mxu0 0.0
        %v946 = vand.u32 %v412, 4294901760
        %v947 = vsub.f32 %v412, %v946
        %948 = vmatmul.mubr.f32.gmra.mrb[0].mxu0 %v947
        %v949 = vpop.f32.mrb[0].mxu0
        %v950 = vadd.f32 %v801, %v949
        %v951 = vpop.f32.mrb[0].mxu0
        %952 = vmatprep.mubr.f32.mxu0 0.0
        %v953 = vand.u32 %v415, 4294901760
        %v954 = vsub.f32 %v415, %v953
        %955 = vmatmul.mubr.f32.gmra.mrb[0].mxu0 %v954
        %v956 = vpop.f32.mrb[0].mxu0
        %v957 = vadd.f32 %v807, %v956
        %v958 = vpop.f32.mrb[0].mxu0
        %959 = vmatprep.mubr.f32.mxu0 0.0
        %v960 = vand.u32 %v418, 4294901760
        %v961 = vsub.f32 %v418, %v960
        %962 = vmatmul.mubr.f32.gmra.mrb[0].mxu0 %v961
        %v963 = vpop.f32.mrb[0].mxu0
        %v964 = vadd.f32 %v813, %v963
        %v965 = vpop.f32.mrb[0].mxu0
        %966 = vmatprep.mubr.f32.mxu0 0.0
        %v967 = vand.u32 %v421, 4294901760
        %v968 = vsub.f32 %v421, %v967
        %969 = vmatmul.mubr.f32.gmra.mrb[0].mxu0 %v968
        %v970 = vpop.f32.mrb[0].mxu0
        %v971 = vadd.f32 %v819, %v970
        %v972 = vpop.f32.mrb[0].mxu0
        %973 = vmatprep.mubr.f32.mxu0 0.0
        %v974 = vand.u32 %v424, 4294901760
        %v975 = vsub.f32 %v424, %v974
        %976 = vmatmul.mubr.f32.gmra.mrb[0].mxu0 %v975
        %v977 = vpop.f32.mrb[0].mxu0
        %v978 = vadd.f32 %v825, %v977
        %v979 = vpop.f32.mrb[0].mxu0
        %980 = vdwg.mxu0
        %981 = vmatprep.subr.mxu0 0.0
        %v982 = vand.u32 %v427, 4294901760
        %983 = vmatpush1.xpose.msra.mxu0 %v982
        %984 = vmatprep.subr.mxu0 0.0
        %v985 = vand.u32 %v430, 4294901760
        %986 = vmatpush1.xpose.msra.mxu0 %v985
        %987 = vmatprep.subr.mxu0 0.0
        %v988 = vand.u32 %v433, 4294901760
        %989 = vmatpush1.xpose.msra.mxu0 %v988
        %990 = vmatprep.subr.mxu0 0.0
        %v991 = vand.u32 %v436, 4294901760
        %992 = vmatpush1.xpose.msra.mxu0 %v991
        %993 = vmatprep.subr.mxu0 0.0
        %v994 = vand.u32 %v439, 4294901760
        %995 = vmatpush1.xpose.msra.mxu0 %v994
        %996 = vmatprep.subr.mxu0 0.0
        %v997 = vand.u32 %v442, 4294901760
        %998 = vmatpush1.xpose.msra.mxu0 %v997
        %999 = vmatprep.subr.mxu0 0.0
        %v1000 = vand.u32 %v445, 4294901760
        %1001 = vmatpush1.xpose.msra.mxu0 %v1000
        %1002 = vmatprep.subr.mxu0 0.0
        %v1003 = vand.u32 %v448, 4294901760
        %1004 = vmatpush1.xpose.msra.mxu0 %v1003
        %1005 = vmatprep.subr.mxu0 0.0
        %v1006 = vand.u32 %v451, 4294901760
        %1007 = vmatpush1.xpose.msra.mxu0 %v1006
        %1008 = vmatprep.subr.mxu0 0.0
        %v1009 = vand.u32 %v454, 4294901760
        %1010 = vmatpush1.xpose.msra.mxu0 %v1009
        %1011 = vmatprep.subr.mxu0 0.0
        %v1012 = vand.u32 %v457, 4294901760
        %1013 = vmatpush1.xpose.msra.mxu0 %v1012
        %1014 = vmatprep.subr.mxu0 0.0
        %v1015 = vand.u32 %v460, 4294901760
        %1016 = vmatpush1.xpose.msra.mxu0 %v1015
        %1017 = vmatprep.subr.mxu0 0.0
        %v1018 = vand.u32 %v463, 4294901760
        %1019 = vmatpush1.xpose.msra.mxu0 %v1018
        %1020 = vmatprep.subr.mxu0 0.0
        %v1021 = vand.u32 %v466, 4294901760
        %1022 = vmatpush1.xpose.msra.mxu0 %v1021
        %1023 = vmatprep.subr.mxu0 0.0
        %v1024 = vand.u32 %v469, 4294901760
        %1025 = vmatpush1.xpose.msra.mxu0 %v1024
        %1026 = vmatprep.subr.mxu0 0.0
        %v1027 = vand.u32 %v472, 4294901760
        %1028 = vmatpush1.xpose.msra.mxu0 %v1027
        %1029 = vmatprep.subr.mxu0 0.0
        %1030 = vmatpush1.xpose.msra.mxu0 0.0
        %1031 = vmatprep.subr.mxu0 0.0
        %1032 = vmatpush1.xpose.msra.mxu0 0.0
        %1033 = vmatprep.subr.mxu0 0.0
        %1034 = vmatpush1.xpose.msra.mxu0 0.0
        %1035 = vmatprep.subr.mxu0 0.0
        %1036 = vmatpush1.xpose.msra.mxu0 0.0
        %1037 = vmatprep.subr.mxu0 0.0
        %1038 = vmatpush1.xpose.msra.mxu0 0.0
        %1039 = vmatprep.subr.mxu0 0.0
        %1040 = vmatpush1.xpose.msra.mxu0 0.0
        %1041 = vmatprep.subr.mxu0 0.0
        %1042 = vmatpush1.xpose.msra.mxu0 0.0
        %1043 = vmatprep.subr.mxu0 0.0
        %1044 = vmatpush1.xpose.msra.mxu0 0.0
        %1045 = vmatprep.subr.mxu0 0.0
        %1046 = vmatpush1.xpose.msra.mxu0 0.0
        %1047 = vmatprep.subr.mxu0 0.0
        %1048 = vmatpush1.xpose.msra.mxu0 0.0
        %1049 = vmatprep.subr.mxu0 0.0
        %1050 = vmatpush1.xpose.msra.mxu0 0.0
        %1051 = vmatprep.subr.mxu0 0.0
        %1052 = vmatpush1.xpose.msra.mxu0 0.0
        %1053 = vmatprep.subr.mxu0 0.0
        %1054 = vmatpush1.xpose.msra.mxu0 0.0
        %1055 = vmatprep.subr.mxu0 0.0
        %1056 = vmatpush1.xpose.msra.mxu0 0.0
        %1057 = vmatprep.subr.mxu0 0.0
        %1058 = vmatpush1.xpose.msra.mxu0 0.0
        %1059 = vmatprep.subr.mxu0 0.0
        %1060 = vmatpush1.xpose.msra.mxu0 0.0
        %1061 = vmatprep.mubr.f32.mxu0 0.0
        %v1062 = vand.u32 %v403, 4294901760
        %v1063 = vsub.f32 %v403, %v1062
        %v1064 = vand.u32 %v1063, 4294901760
        %1065 = vmatmul.mubr.f32.gmra.mrb[0].mxu0 %v1064
        %v1066 = vpop.f32.mrb[0].mxu0
        %v1067 = vadd.f32 %v929, %v1066
        %v1068 = vpop.f32.mrb[0].mxu0
        %1069 = vmatprep.mubr.f32.mxu0 0.0
        %v1070 = vand.u32 %v406, 4294901760
        %v1071 = vsub.f32 %v406, %v1070
        %v1072 = vand.u32 %v1071, 4294901760
        %1073 = vmatmul.mubr.f32.gmra.mrb[0].mxu0 %v1072
        %v1074 = vpop.f32.mrb[0].mxu0
        %v1075 = vadd.f32 %v936, %v1074
        %v1076 = vpop.f32.mrb[0].mxu0
        %1077 = vmatprep.mubr.f32.mxu0 0.0
        %v1078 = vand.u32 %v409, 4294901760
        %v1079 = vsub.f32 %v409, %v1078
        %v1080 = vand.u32 %v1079, 4294901760
        %1081 = vmatmul.mubr.f32.gmra.mrb[0].mxu0 %v1080
        %v1082 = vpop.f32.mrb[0].mxu0
        %v1083 = vadd.f32 %v943, %v1082
        %v1084 = vpop.f32.mrb[0].mxu0
        %1085 = vmatprep.mubr.f32.mxu0 0.0
        %v1086 = vand.u32 %v412, 4294901760
        %v1087 = vsub.f32 %v412, %v1086
        %v1088 = vand.u32 %v1087, 4294901760
        %1089 = vmatmul.mubr.f32.gmra.mrb[0].mxu0 %v1088
        %v1090 = vpop.f32.mrb[0].mxu0
        %v1091 = vadd.f32 %v950, %v1090
        %v1092 = vpop.f32.mrb[0].mxu0
        %1093 = vmatprep.mubr.f32.mxu0 0.0
        %v1094 = vand.u32 %v415, 4294901760
        %v1095 = vsub.f32 %v415, %v1094
        %v1096 = vand.u32 %v1095, 4294901760
        %1097 = vmatmul.mubr.f32.gmra.mrb[0].mxu0 %v1096
        %v1098 = vpop.f32.mrb[0].mxu0
        %v1099 = vadd.f32 %v957, %v1098
        %v1100 = vpop.f32.mrb[0].mxu0
        %1101 = vmatprep.mubr.f32.mxu0 0.0
        %v1102 = vand.u32 %v418, 4294901760
        %v1103 = vsub.f32 %v418, %v1102
        %v1104 = vand.u32 %v1103, 4294901760
        %1105 = vmatmul.mubr.f32.gmra.mrb[0].mxu0 %v1104
        %v1106 = vpop.f32.mrb[0].mxu0
        %v1107 = vadd.f32 %v964, %v1106
        %v1108 = vpop.f32.mrb[0].mxu0
        %1109 = vmatprep.mubr.f32.mxu0 0.0
        %v1110 = vand.u32 %v421, 4294901760
        %v1111 = vsub.f32 %v421, %v1110
        %v1112 = vand.u32 %v1111, 4294901760
        %1113 = vmatmul.mubr.f32.gmra.mrb[0].mxu0 %v1112
        %v1114 = vpop.f32.mrb[0].mxu0
        %v1115 = vadd.f32 %v971, %v1114
        %v1116 = vpop.f32.mrb[0].mxu0
        %1117 = vmatprep.mubr.f32.mxu0 0.0
        %v1118 = vand.u32 %v424, 4294901760
        %v1119 = vsub.f32 %v424, %v1118
        %v1120 = vand.u32 %v1119, 4294901760
        %1121 = vmatmul.mubr.f32.gmra.mrb[0].mxu0 %v1120
        %v1122 = vpop.f32.mrb[0].mxu0
        %v1123 = vadd.f32 %v978, %v1122
        %v1124 = vpop.f32.mrb[0].mxu0
        %1125 = vdwg.mxu0
        %1126 = vmatprep.subr.mxu0 0.0
        %v1127 = vand.u32 %v427, 4294901760
        %v1128 = vsub.f32 %v427, %v1127
        %v1129 = vand.u32 %v1128, 4294901760
        %1130 = vmatpush1.xpose.msra.mxu0 %v1129
        %1131 = vmatprep.subr.mxu0 0.0
        %v1132 = vand.u32 %v430, 4294901760
        %v1133 = vsub.f32 %v430, %v1132
        %v1134 = vand.u32 %v1133, 4294901760
        %1135 = vmatpush1.xpose.msra.mxu0 %v1134
        %1136 = vmatprep.subr.mxu0 0.0
        %v1137 = vand.u32 %v433, 4294901760
        %v1138 = vsub.f32 %v433, %v1137
        %v1139 = vand.u32 %v1138, 4294901760
        %1140 = vmatpush1.xpose.msra.mxu0 %v1139
        %1141 = vmatprep.subr.mxu0 0.0
        %v1142 = vand.u32 %v436, 4294901760
        %v1143 = vsub.f32 %v436, %v1142
        %v1144 = vand.u32 %v1143, 4294901760
        %1145 = vmatpush1.xpose.msra.mxu0 %v1144
        %1146 = vmatprep.subr.mxu0 0.0
        %v1147 = vand.u32 %v439, 4294901760
        %v1148 = vsub.f32 %v439, %v1147
        %v1149 = vand.u32 %v1148, 4294901760
        %1150 = vmatpush1.xpose.msra.mxu0 %v1149
        %1151 = vmatprep.subr.mxu0 0.0
        %v1152 = vand.u32 %v442, 4294901760
        %v1153 = vsub.f32 %v442, %v1152
        %v1154 = vand.u32 %v1153, 4294901760
        %1155 = vmatpush1.xpose.msra.mxu0 %v1154
        %1156 = vmatprep.subr.mxu0 0.0
        %v1157 = vand.u32 %v445, 4294901760
        %v1158 = vsub.f32 %v445, %v1157
        %v1159 = vand.u32 %v1158, 4294901760
        %1160 = vmatpush1.xpose.msra.mxu0 %v1159
        %1161 = vmatprep.subr.mxu0 0.0
        %v1162 = vand.u32 %v448, 4294901760
        %v1163 = vsub.f32 %v448, %v1162
        %v1164 = vand.u32 %v1163, 4294901760
        %1165 = vmatpush1.xpose.msra.mxu0 %v1164
        %1166 = vmatprep.subr.mxu0 0.0
        %v1167 = vand.u32 %v451, 4294901760
        %v1168 = vsub.f32 %v451, %v1167
        %v1169 = vand.u32 %v1168, 4294901760
        %1170 = vmatpush1.xpose.msra.mxu0 %v1169
        %1171 = vmatprep.subr.mxu0 0.0
        %v1172 = vand.u32 %v454, 4294901760
        %v1173 = vsub.f32 %v454, %v1172
        %v1174 = vand.u32 %v1173, 4294901760
        %1175 = vmatpush1.xpose.msra.mxu0 %v1174
        %1176 = vmatprep.subr.mxu0 0.0
        %v1177 = vand.u32 %v457, 4294901760
        %v1178 = vsub.f32 %v457, %v1177
        %v1179 = vand.u32 %v1178, 4294901760
        %1180 = vmatpush1.xpose.msra.mxu0 %v1179
        %1181 = vmatprep.subr.mxu0 0.0
        %v1182 = vand.u32 %v460, 4294901760
        %v1183 = vsub.f32 %v460, %v1182
        %v1184 = vand.u32 %v1183, 4294901760
        %1185 = vmatpush1.xpose.msra.mxu0 %v1184
        %1186 = vmatprep.subr.mxu0 0.0
        %v1187 = vand.u32 %v463, 4294901760
        %v1188 = vsub.f32 %v463, %v1187
        %v1189 = vand.u32 %v1188, 4294901760
        %1190 = vmatpush1.xpose.msra.mxu0 %v1189
        %1191 = vmatprep.subr.mxu0 0.0
        %v1192 = vand.u32 %v466, 4294901760
        %v1193 = vsub.f32 %v466, %v1192
        %v1194 = vand.u32 %v1193, 4294901760
        %1195 = vmatpush1.xpose.msra.mxu0 %v1194
        %1196 = vmatprep.subr.mxu0 0.0
        %v1197 = vand.u32 %v469, 4294901760
        %v1198 = vsub.f32 %v469, %v1197
        %v1199 = vand.u32 %v1198, 4294901760
        %1200 = vmatpush1.xpose.msra.mxu0 %v1199
        %1201 = vmatprep.subr.mxu0 0.0
        %v1202 = vand.u32 %v472, 4294901760
        %v1203 = vsub.f32 %v472, %v1202
        %v1204 = vand.u32 %v1203, 4294901760
        %1205 = vmatpush1.xpose.msra.mxu0 %v1204
        %1206 = vmatprep.subr.mxu0 0.0
        %1207 = vmatpush1.xpose.msra.mxu0 0.0
        %1208 = vmatprep.subr.mxu0 0.0
        %1209 = vmatpush1.xpose.msra.mxu0 0.0
        %1210 = vmatprep.subr.mxu0 0.0
        %1211 = vmatpush1.xpose.msra.mxu0 0.0
        %1212 = vmatprep.subr.mxu0 0.0
        %1213 = vmatpush1.xpose.msra.mxu0 0.0
        %1214 = vmatprep.subr.mxu0 0.0
        %1215 = vmatpush1.xpose.msra.mxu0 0.0
        %1216 = vmatprep.subr.mxu0 0.0
        %1217 = vmatpush1.xpose.msra.mxu0 0.0
        %1218 = vmatprep.subr.mxu0 0.0
        %1219 = vmatpush1.xpose.msra.mxu0 0.0
        %1220 = vmatprep.subr.mxu0 0.0
        %1221 = vmatpush1.xpose.msra.mxu0 0.0
        %1222 = vmatprep.subr.mxu0 0.0
        %1223 = vmatpush1.xpose.msra.mxu0 0.0
        %1224 = vmatprep.subr.mxu0 0.0
        %1225 = vmatpush1.xpose.msra.mxu0 0.0
        %1226 = vmatprep.subr.mxu0 0.0
        %1227 = vmatpush1.xpose.msra.mxu0 0.0
        %1228 = vmatprep.subr.mxu0 0.0
        %1229 = vmatpush1.xpose.msra.mxu0 0.0
        %1230 = vmatprep.subr.mxu0 0.0
        %1231 = vmatpush1.xpose.msra.mxu0 0.0
        %1232 = vmatprep.subr.mxu0 0.0
        %1233 = vmatpush1.xpose.msra.mxu0 0.0
        %1234 = vmatprep.subr.mxu0 0.0
        %1235 = vmatpush1.xpose.msra.mxu0 0.0
        %1236 = vmatprep.subr.mxu0 0.0
        %1237 = vmatpush1.xpose.msra.mxu0 0.0
        %1238 = vmatprep.mubr.f32.mxu0 0.0
        %v1239 = vand.u32 %v403, 4294901760
        %1240 = vmatmul.mubr.f32.gmra.mrb[0].mxu0 %v1239
        %v1241 = vpop.f32.mrb[0].mxu0
        %v1242 = vadd.f32 %v1067, %v1241
        %v1243 = vpop.f32.mrb[0].mxu0
        %1244 = vmatprep.mubr.f32.mxu0 0.0
        %v1245 = vand.u32 %v406, 4294901760
        %1246 = vmatmul.mubr.f32.gmra.mrb[0].mxu0 %v1245
        %v1247 = vpop.f32.mrb[0].mxu0
        %v1248 = vadd.f32 %v1075, %v1247
        %v1249 = vpop.f32.mrb[0].mxu0
        %1250 = vmatprep.mubr.f32.mxu0 0.0
        %v1251 = vand.u32 %v409, 4294901760
        %1252 = vmatmul.mubr.f32.gmra.mrb[0].mxu0 %v1251
        %v1253 = vpop.f32.mrb[0].mxu0
        %v1254 = vadd.f32 %v1083, %v1253
        %v1255 = vpop.f32.mrb[0].mxu0
        %1256 = vmatprep.mubr.f32.mxu0 0.0
        %v1257 = vand.u32 %v412, 4294901760
        %1258 = vmatmul.mubr.f32.gmra.mrb[0].mxu0 %v1257
        %v1259 = vpop.f32.mrb[0].mxu0
        %v1260 = vadd.f32 %v1091, %v1259
        %v1261 = vpop.f32.mrb[0].mxu0
        %1262 = vmatprep.mubr.f32.mxu0 0.0
        %v1263 = vand.u32 %v415, 4294901760
        %1264 = vmatmul.mubr.f32.gmra.mrb[0].mxu0 %v1263
        %v1265 = vpop.f32.mrb[0].mxu0
        %v1266 = vadd.f32 %v1099, %v1265
        %v1267 = vpop.f32.mrb[0].mxu0
        %1268 = vmatprep.mubr.f32.mxu0 0.0
        %v1269 = vand.u32 %v418, 4294901760
        %1270 = vmatmul.mubr.f32.gmra.mrb[0].mxu0 %v1269
        %v1271 = vpop.f32.mrb[0].mxu0
        %v1272 = vadd.f32 %v1107, %v1271
        %v1273 = vpop.f32.mrb[0].mxu0
        %1274 = vmatprep.mubr.f32.mxu0 0.0
        %v1275 = vand.u32 %v421, 4294901760
        %1276 = vmatmul.mubr.f32.gmra.mrb[0].mxu0 %v1275
        %v1277 = vpop.f32.mrb[0].mxu0
        %v1278 = vadd.f32 %v1115, %v1277
        %v1279 = vpop.f32.mrb[0].mxu0
        %1280 = vmatprep.mubr.f32.mxu0 0.0
        %v1281 = vand.u32 %v424, 4294901760
        %1282 = vmatmul.mubr.f32.gmra.mrb[0].mxu0 %v1281
        %v1283 = vpop.f32.mrb[0].mxu0
        %v1284 = vadd.f32 %v1123, %v1283
        %v1285 = vpop.f32.mrb[0].mxu0
        %1286 = vdwg.mxu0
        %1287 = vmatprep.subr.mxu0 0.0
        %v1288 = vand.u32 %v427, 4294901760
        %1289 = vmatpush1.xpose.msra.mxu0 %v1288
        %1290 = vmatprep.subr.mxu0 0.0
        %v1291 = vand.u32 %v430, 4294901760
        %1292 = vmatpush1.xpose.msra.mxu0 %v1291
        %1293 = vmatprep.subr.mxu0 0.0
        %v1294 = vand.u32 %v433, 4294901760
        %1295 = vmatpush1.xpose.msra.mxu0 %v1294
        %1296 = vmatprep.subr.mxu0 0.0
        %v1297 = vand.u32 %v436, 4294901760
        %1298 = vmatpush1.xpose.msra.mxu0 %v1297
        %1299 = vmatprep.subr.mxu0 0.0
        %v1300 = vand.u32 %v439, 4294901760
        %1301 = vmatpush1.xpose.msra.mxu0 %v1300
        %1302 = vmatprep.subr.mxu0 0.0
        %v1303 = vand.u32 %v442, 4294901760
        %1304 = vmatpush1.xpose.msra.mxu0 %v1303
        %1305 = vmatprep.subr.mxu0 0.0
        %v1306 = vand.u32 %v445, 4294901760
        %1307 = vmatpush1.xpose.msra.mxu0 %v1306
        %1308 = vmatprep.subr.mxu0 0.0
        %v1309 = vand.u32 %v448, 4294901760
        %1310 = vmatpush1.xpose.msra.mxu0 %v1309
        %1311 = vmatprep.subr.mxu0 0.0
        %v1312 = vand.u32 %v451, 4294901760
        %1313 = vmatpush1.xpose.msra.mxu0 %v1312
        %1314 = vmatprep.subr.mxu0 0.0
        %v1315 = vand.u32 %v454, 4294901760
        %1316 = vmatpush1.xpose.msra.mxu0 %v1315
        %1317 = vmatprep.subr.mxu0 0.0
        %v1318 = vand.u32 %v457, 4294901760
        %1319 = vmatpush1.xpose.msra.mxu0 %v1318
        %1320 = vmatprep.subr.mxu0 0.0
        %v1321 = vand.u32 %v460, 4294901760
        %1322 = vmatpush1.xpose.msra.mxu0 %v1321
        %1323 = vmatprep.subr.mxu0 0.0
        %v1324 = vand.u32 %v463, 4294901760
        %1325 = vmatpush1.xpose.msra.mxu0 %v1324
        %1326 = vmatprep.subr.mxu0 0.0
        %v1327 = vand.u32 %v466, 4294901760
        %1328 = vmatpush1.xpose.msra.mxu0 %v1327
        %1329 = vmatprep.subr.mxu0 0.0
        %v1330 = vand.u32 %v469, 4294901760
        %1331 = vmatpush1.xpose.msra.mxu0 %v1330
        %1332 = vmatprep.subr.mxu0 0.0
        %v1333 = vand.u32 %v472, 4294901760
        %1334 = vmatpush1.xpose.msra.mxu0 %v1333
        %1335 = vmatprep.subr.mxu0 0.0
        %1336 = vmatpush1.xpose.msra.mxu0 0.0
        %1337 = vmatprep.subr.mxu0 0.0
        %1338 = vmatpush1.xpose.msra.mxu0 0.0
        %1339 = vmatprep.subr.mxu0 0.0
        %1340 = vmatpush1.xpose.msra.mxu0 0.0
        %1341 = vmatprep.subr.mxu0 0.0
        %1342 = vmatpush1.xpose.msra.mxu0 0.0
        %1343 = vmatprep.subr.mxu0 0.0
        %1344 = vmatpush1.xpose.msra.mxu0 0.0
        %1345 = vmatprep.subr.mxu0 0.0
        %1346 = vmatpush1.xpose.msra.mxu0 0.0
        %1347 = vmatprep.subr.mxu0 0.0
        %1348 = vmatpush1.xpose.msra.mxu0 0.0
        %1349 = vmatprep.subr.mxu0 0.0
        %1350 = vmatpush1.xpose.msra.mxu0 0.0
        %1351 = vmatprep.subr.mxu0 0.0
        %1352 = vmatpush1.xpose.msra.mxu0 0.0
        %1353 = vmatprep.subr.mxu0 0.0
        %1354 = vmatpush1.xpose.msra.mxu0 0.0
        %1355 = vmatprep.subr.mxu0 0.0
        %1356 = vmatpush1.xpose.msra.mxu0 0.0
        %1357 = vmatprep.subr.mxu0 0.0
        %1358 = vmatpush1.xpose.msra.mxu0 0.0
        %1359 = vmatprep.subr.mxu0 0.0
        %1360 = vmatpush1.xpose.msra.mxu0 0.0
        %1361 = vmatprep.subr.mxu0 0.0
        %1362 = vmatpush1.xpose.msra.mxu0 0.0
        %1363 = vmatprep.subr.mxu0 0.0
        %1364 = vmatpush1.xpose.msra.mxu0 0.0
        %1365 = vmatprep.subr.mxu0 0.0
        %1366 = vmatpush1.xpose.msra.mxu0 0.0
        %1367 = vmatprep.mubr.f32.mxu0 0.0
        %v1368 = vand.u32 %v403, 4294901760
        %1369 = vmatmul.mubr.f32.gmra.mrb[0].mxu0 %v1368
        %v1370 = vpop.f32.mrb[0].mxu0
        %v1371 = vadd.f32 %v1242, %v1370
        %v1372 = vpop.f32.mrb[0].mxu0
        %1373 = vmatprep.mubr.f32.mxu0 0.0
        %v1374 = vand.u32 %v406, 4294901760
        %1375 = vmatmul.mubr.f32.gmra.mrb[0].mxu0 %v1374
        %v1376 = vpop.f32.mrb[0].mxu0
        %v1377 = vadd.f32 %v1248, %v1376
        %v1378 = vpop.f32.mrb[0].mxu0
        %1379 = vmatprep.mubr.f32.mxu0 0.0
        %v1380 = vand.u32 %v409, 4294901760
        %1381 = vmatmul.mubr.f32.gmra.mrb[0].mxu0 %v1380
        %v1382 = vpop.f32.mrb[0].mxu0
        %v1383 = vadd.f32 %v1254, %v1382
        %v1384 = vpop.f32.mrb[0].mxu0
        %1385 = vmatprep.mubr.f32.mxu0 0.0
        %v1386 = vand.u32 %v412, 4294901760
        %1387 = vmatmul.mubr.f32.gmra.mrb[0].mxu0 %v1386
        %v1388 = vpop.f32.mrb[0].mxu0
        %v1389 = vadd.f32 %v1260, %v1388
        %v1390 = vpop.f32.mrb[0].mxu0
        %1391 = vmatprep.mubr.f32.mxu0 0.0
        %v1392 = vand.u32 %v415, 4294901760
        %1393 = vmatmul.mubr.f32.gmra.mrb[0].mxu0 %v1392
        %v1394 = vpop.f32.mrb[0].mxu0
        %v1395 = vadd.f32 %v1266, %v1394
        %v1396 = vpop.f32.mrb[0].mxu0
        %1397 = vmatprep.mubr.f32.mxu0 0.0
        %v1398 = vand.u32 %v418, 4294901760
        %1399 = vmatmul.mubr.f32.gmra.mrb[0].mxu0 %v1398
        %v1400 = vpop.f32.mrb[0].mxu0
        %v1401 = vadd.f32 %v1272, %v1400
        %v1402 = vpop.f32.mrb[0].mxu0
        %1403 = vmatprep.mubr.f32.mxu0 0.0
        %v1404 = vand.u32 %v421, 4294901760
        %1405 = vmatmul.mubr.f32.gmra.mrb[0].mxu0 %v1404
        %v1406 = vpop.f32.mrb[0].mxu0
        %v1407 = vadd.f32 %v1278, %v1406
        %v1408 = vpop.f32.mrb[0].mxu0
        %1409 = vmatprep.mubr.f32.mxu0 0.0
        %v1410 = vand.u32 %v424, 4294901760
        %1411 = vmatmul.mubr.f32.gmra.mrb[0].mxu0 %v1410
        %v1412 = vpop.f32.mrb[0].mxu0
        %v1413 = vadd.f32 %v1284, %v1412
        %v1414 = vpop.f32.mrb[0].mxu0
        %1415 = vdwg.mxu0
        %v1416 = vmul.f32 %v1371, 14.285714
        %v1417 = vmul.f32 %v1377, 14.285714
        %v1418 = vmul.f32 %v1383, 14.285714
        %v1419 = vmul.f32 %v1389, 14.285714
        %v1420 = vmul.f32 %v1395, 14.285714
        %v1421 = vmul.f32 %v1401, 14.285714
        %v1422 = vmul.f32 %v1407, 14.285714
        %v1423 = vmul.f32 %v1413, 14.285714
        %1424 = vmax.xlane.f32.xlu0 %v1416
        %v1425 = vpop.xlane.xlu0 %1424
        %1426 = vmax.xlane.f32.xlu0 %v1417
        %v1427 = vpop.xlane.xlu0 %1426
        %1428 = vmax.xlane.f32.xlu0 %v1418
        %v1429 = vpop.xlane.xlu0 %1428
        %1430 = vmax.xlane.f32.xlu0 %v1419
        %v1431 = vpop.xlane.xlu0 %1430
        %1432 = vmax.xlane.f32.xlu0 %v1420
        %v1433 = vpop.xlane.xlu0 %1432
        %1434 = vmax.xlane.f32.xlu0 %v1421
        %v1435 = vpop.xlane.xlu0 %1434
        %1436 = vmax.xlane.f32.xlu0 %v1422
        %v1437 = vpop.xlane.xlu0 %1436
        %1438 = vmax.xlane.f32.xlu0 %v1423
        %v1439 = vpop.xlane.xlu0 %1438
        %v1440 = vmax.f32 %v333, %v1425
        %v1441 = vmax.f32 %v334, %v1427
        %v1442 = vmax.f32 %v335, %v1429
        %v1443 = vmax.f32 %v336, %v1431
        %v1444 = vmax.f32 %v337, %v1433
        %v1445 = vmax.f32 %v338, %v1435
        %v1446 = vmax.f32 %v339, %v1437
        %v1447 = vmax.f32 %v340, %v1439
        %v1448 = vsub.f32 %v333, %v1440
        %v1449 = vsub.f32 %v334, %v1441
        %v1450 = vsub.f32 %v335, %v1442
        %v1451 = vsub.f32 %v336, %v1443
        %v1452 = vsub.f32 %v337, %v1444
        %v1453 = vsub.f32 %v338, %v1445
        %v1454 = vsub.f32 %v339, %v1446
        %v1455 = vsub.f32 %v340, %v1447
        %v1456 = vmul.f32 %v1448, 1.442695
        %v1457 = vpow.pop %v1456
        %v1458 = vmul.f32 %v1449, 1.442695
        %v1459 = vpow.pop %v1458
        %v1460 = vmul.f32 %v1450, 1.442695
        %v1461 = vpow.pop %v1460
        %v1462 = vmul.f32 %v1451, 1.442695
        %v1463 = vpow.pop %v1462
        %v1464 = vmul.f32 %v1452, 1.442695
        %v1465 = vpow.pop %v1464
        %v1466 = vmul.f32 %v1453, 1.442695
        %v1467 = vpow.pop %v1466
        %v1468 = vmul.f32 %v1454, 1.442695
        %v1469 = vpow.pop %v1468
        %v1470 = vmul.f32 %v1455, 1.442695
        %v1471 = vpow.pop %v1470
        %1473 = vset.pattern.permute.xlu0 0
        %1474 = vperm.xlu0 %1473, %v1440
        %v1475 = vpop.permute.xlu0 %1474
        %1478 = vset.pattern.permute.xlu0 0
        %1479 = vperm.xlu0 %1478, %v1441
        %v1480 = vpop.permute.xlu0 %1479
        %1483 = vset.pattern.permute.xlu0 0
        %1484 = vperm.xlu0 %1483, %v1442
        %v1485 = vpop.permute.xlu0 %1484
        %1488 = vset.pattern.permute.xlu0 0
        %1489 = vperm.xlu0 %1488, %v1443
        %v1490 = vpop.permute.xlu0 %1489
        %1493 = vset.pattern.permute.xlu0 0
        %1494 = vperm.xlu0 %1493, %v1444
        %v1495 = vpop.permute.xlu0 %1494
        %1498 = vset.pattern.permute.xlu0 0
        %1499 = vperm.xlu0 %1498, %v1445
        %v1500 = vpop.permute.xlu0 %1499
        %1503 = vset.pattern.permute.xlu0 0
        %1504 = vperm.xlu0 %1503, %v1446
        %v1505 = vpop.permute.xlu0 %1504
        %1508 = vset.pattern.permute.xlu0 0
        %1509 = vperm.xlu0 %1508, %v1447
        %v1510 = vpop.permute.xlu0 %1509
        %v1512 = vsub.f32 %v1416, %v1475
        %v1513 = vsub.f32 %v1417, %v1480
        %v1514 = vsub.f32 %v1418, %v1485
        %v1515 = vsub.f32 %v1419, %v1490
        %v1516 = vsub.f32 %v1420, %v1495
        %v1517 = vsub.f32 %v1421, %v1500
        %v1518 = vsub.f32 %v1422, %v1505
        %v1519 = vsub.f32 %v1423, %v1510
        %v1520 = vmul.f32 %v1512, 1.442695
        %v1521 = vpow.pop %v1520
        %v1522 = vmul.f32 %v1513, 1.442695
        %v1523 = vpow.pop %v1522
        %v1524 = vmul.f32 %v1514, 1.442695
        %v1525 = vpow.pop %v1524
        %v1526 = vmul.f32 %v1515, 1.442695
        %v1527 = vpow.pop %v1526
        %v1528 = vmul.f32 %v1516, 1.442695
        %v1529 = vpow.pop %v1528
        %v1530 = vmul.f32 %v1517, 1.442695
        %v1531 = vpow.pop %v1530
        %v1532 = vmul.f32 %v1518, 1.442695
        %v1533 = vpow.pop %v1532
        %v1534 = vmul.f32 %v1519, 1.442695
        %v1535 = vpow.pop %v1534
        %1536 = vset.pattern.permute.xlu0 0
        %1537 = vperm.xlu0 %1536, %v318
        %v1538 = vpop.permute.xlu0 %1537
        %1539 = vset.pattern.permute.xlu0 0
        %1540 = vperm.xlu0 %1539, %v319
        %v1541 = vpop.permute.xlu0 %1540
        %1542 = vset.pattern.permute.xlu0 0
        %1543 = vperm.xlu0 %1542, %v320
        %v1544 = vpop.permute.xlu0 %1543
        %1545 = vset.pattern.permute.xlu0 0
        %1546 = vperm.xlu0 %1545, %v321
        %v1547 = vpop.permute.xlu0 %1546
        %1548 = vset.pattern.permute.xlu0 0
        %1549 = vperm.xlu0 %1548, %v322
        %v1550 = vpop.permute.xlu0 %1549
        %1551 = vset.pattern.permute.xlu0 0
        %1552 = vperm.xlu0 %1551, %v323
        %v1553 = vpop.permute.xlu0 %1552
        %1554 = vset.pattern.permute.xlu0 0
        %1555 = vperm.xlu0 %1554, %v324
        %v1556 = vpop.permute.xlu0 %1555
        %1557 = vset.pattern.permute.xlu0 0
        %1558 = vperm.xlu0 %1557, %v325
        %v1559 = vpop.permute.xlu0 %1558
        %v1560 = vlaneseq
        %v1561 = vshrl.u32 %v1560, 7
        %v1562 = vsub.s32 0, %v1561
        %v1563 = vrot.slane %v400, %v1562
        %vm1564 = vcmp.eq.s32.totalorder %v1538, %v1563
        %vm1565 = vcmp.eq.s32.totalorder %v1541, %v1563
        %vm1566 = vcmp.eq.s32.totalorder %v1544, %v1563
        %vm1567 = vcmp.eq.s32.totalorder %v1547, %v1563
        %vm1568 = vcmp.eq.s32.totalorder %v1550, %v1563
        %vm1569 = vcmp.eq.s32.totalorder %v1553, %v1563
        %vm1570 = vcmp.eq.s32.totalorder %v1556, %v1563
        %vm1571 = vcmp.eq.s32.totalorder %v1559, %v1563
        %v1572 = vsel %vm1564, 1, 0
        %v1573 = vsel %vm1565, 1, 0
        %v1574 = vsel %vm1566, 1, 0
        %v1575 = vsel %vm1567, 1, 0
        %v1576 = vsel %vm1568, 1, 0
        %v1577 = vsel %vm1569, 1, 0
        %v1578 = vsel %vm1570, 1, 0
        %v1579 = vsel %vm1571, 1, 0
        %v1580 = vcvt.s32.f32 %v1572
        %v1581 = vcvt.s32.f32 %v1573
        %v1582 = vcvt.s32.f32 %v1574
        %v1583 = vcvt.s32.f32 %v1575
        %v1584 = vcvt.s32.f32 %v1576
        %v1585 = vcvt.s32.f32 %v1577
        %v1586 = vcvt.s32.f32 %v1578
        %v1587 = vcvt.s32.f32 %v1579
        %s1588 = ssub.s32 %s308, %s309
        %v1589 = vstv %s1588
        %vm1590 = vcmp.ne.s32.totalorder %v376, %v1589
        %vm1591 = vcmp.ne.s32.totalorder %v377, %v1589
        %vm1592 = vcmp.ne.s32.totalorder %v378, %v1589
        %vm1593 = vcmp.ne.s32.totalorder %v379, %v1589
        %vm1594 = vcmp.ne.s32.totalorder %v380, %v1589
        %vm1595 = vcmp.ne.s32.totalorder %v381, %v1589
        %vm1596 = vcmp.ne.s32.totalorder %v382, %v1589
        %vm1597 = vcmp.ne.s32.totalorder %v383, %v1589
        %v1598 = vsel %vm1590, %v1521, 0.0
        %v1599 = vsel %vm1591, %v1523, 0.0
        %v1600 = vsel %vm1592, %v1525, 0.0
        %v1601 = vsel %vm1593, %v1527, 0.0
        %v1602 = vsel %vm1594, %v1529, 0.0
        %v1603 = vsel %vm1595, %v1531, 0.0
        %v1604 = vsel %vm1596, %v1533, 0.0
        %v1605 = vsel %vm1597, %v1535, 0.0
        %v1606 = vsel %vm1590, %v1580, 0.0
        %v1607 = vsel %vm1591, %v1581, 0.0
        %v1608 = vsel %vm1592, %v1582, 0.0
        %v1609 = vsel %vm1593, %v1583, 0.0
        %v1610 = vsel %vm1594, %v1584, 0.0
        %v1611 = vsel %vm1595, %v1585, 0.0
        %v1612 = vsel %vm1596, %v1586, 0.0
        %v1613 = vsel %vm1597, %v1587, 0.0
        %v1614 = vmul.f32 %v1457, %v341
        %v1615 = vmul.f32 %v1459, %v342
        %v1616 = vmul.f32 %v1461, %v343
        %v1617 = vmul.f32 %v1463, %v344
        %v1618 = vmul.f32 %v1465, %v345
        %v1619 = vmul.f32 %v1467, %v346
        %v1620 = vmul.f32 %v1469, %v347
        %v1621 = vmul.f32 %v1471, %v348
        %1622 = vadd.xlane.f32.xlu0 %v1598
        %v1623 = vpop.xlane.xlu0 %1622
        %1624 = vadd.xlane.f32.xlu0 %v1599
        %v1625 = vpop.xlane.xlu0 %1624
        %1626 = vadd.xlane.f32.xlu0 %v1600
        %v1627 = vpop.xlane.xlu0 %1626
        %1628 = vadd.xlane.f32.xlu0 %v1601
        %v1629 = vpop.xlane.xlu0 %1628
        %1630 = vadd.xlane.f32.xlu0 %v1602
        %v1631 = vpop.xlane.xlu0 %1630
        %1632 = vadd.xlane.f32.xlu0 %v1603
        %v1633 = vpop.xlane.xlu0 %1632
        %1634 = vadd.xlane.f32.xlu0 %v1604
        %v1635 = vpop.xlane.xlu0 %1634
        %1636 = vadd.xlane.f32.xlu0 %v1605
        %v1637 = vpop.xlane.xlu0 %1636
        %v1638 = vadd.f32 %v1614, %v1623
        %v1639 = vadd.f32 %v1615, %v1625
        %v1640 = vadd.f32 %v1616, %v1627
        %v1641 = vadd.f32 %v1617, %v1629
        %v1642 = vadd.f32 %v1618, %v1631
        %v1643 = vadd.f32 %v1619, %v1633
        %v1644 = vadd.f32 %v1620, %v1635
        %v1645 = vadd.f32 %v1621, %v1637
        %v1646 = vmul.f32 %v1606, %v1416
        %v1647 = vmul.f32 %v1607, %v1417
        %v1648 = vmul.f32 %v1608, %v1418
        %v1649 = vmul.f32 %v1609, %v1419
        %v1650 = vmul.f32 %v1610, %v1420
        %v1651 = vmul.f32 %v1611, %v1421
        %v1652 = vmul.f32 %v1612, %v1422
        %v1653 = vmul.f32 %v1613, %v1423
        %1654 = vadd.xlane.f32.xlu0 %v1646
        %v1655 = vpop.xlane.xlu0 %1654
        %1656 = vadd.xlane.f32.xlu0 %v1647
        %v1657 = vpop.xlane.xlu0 %1656
        %1658 = vadd.xlane.f32.xlu0 %v1648
        %v1659 = vpop.xlane.xlu0 %1658
        %1660 = vadd.xlane.f32.xlu0 %v1649
        %v1661 = vpop.xlane.xlu0 %1660
        %1662 = vadd.xlane.f32.xlu0 %v1650
        %v1663 = vpop.xlane.xlu0 %1662
        %1664 = vadd.xlane.f32.xlu0 %v1651
        %v1665 = vpop.xlane.xlu0 %1664
        %1666 = vadd.xlane.f32.xlu0 %v1652
        %v1667 = vpop.xlane.xlu0 %1666
        %1668 = vadd.xlane.f32.xlu0 %v1653
        %v1669 = vpop.xlane.xlu0 %1668
        %v1670 = vadd.f32 %v349, %v1655
        %v1671 = vadd.f32 %v350, %v1657
        %v1672 = vadd.f32 %v351, %v1659
        %v1673 = vadd.f32 %v352, %v1661
        %v1674 = vadd.f32 %v353, %v1663
        %v1675 = vadd.f32 %v354, %v1665
        %v1676 = vadd.f32 %v355, %v1667
        %v1677 = vadd.f32 %v356, %v1669
        %1678 = vadd.xlane.f32.xlu0 %v1606
        %v1679 = vpop.xlane.xlu0 %1678
        %1680 = vadd.xlane.f32.xlu0 %v1607
        %v1681 = vpop.xlane.xlu0 %1680
        %1682 = vadd.xlane.f32.xlu0 %v1608
        %v1683 = vpop.xlane.xlu0 %1682
        %1684 = vadd.xlane.f32.xlu0 %v1609
        %v1685 = vpop.xlane.xlu0 %1684
        %1686 = vadd.xlane.f32.xlu0 %v1610
        %v1687 = vpop.xlane.xlu0 %1686
        %1688 = vadd.xlane.f32.xlu0 %v1611
        %v1689 = vpop.xlane.xlu0 %1688
        %1690 = vadd.xlane.f32.xlu0 %v1612
        %v1691 = vpop.xlane.xlu0 %1690
        %1692 = vadd.xlane.f32.xlu0 %v1613
        %v1693 = vpop.xlane.xlu0 %1692
        %v1694 = vadd.f32 %v357, %v1679
        %v1695 = vadd.f32 %v358, %v1681
        %v1696 = vadd.f32 %v359, %v1683
        %v1697 = vadd.f32 %v360, %v1685
        %v1698 = vadd.f32 %v361, %v1687
        %v1699 = vadd.f32 %v362, %v1689
        %v1700 = vadd.f32 %v363, %v1691
        %v1701 = vadd.f32 %v364, %v1693
        %vm1702 = vcmask 7168
        %1703 = vst.msk [vmem:[#allocation2] sm:$0xff] %vm1702, %v1440
        %1704 = vst.msk [vmem:[#allocation2 + $0x8] sm:$0xff] %vm1702, %v1441
        %1705 = vst.msk [vmem:[#allocation2 + $0x10] sm:$0xff] %vm1702, %v1442
        %1706 = vst.msk [vmem:[#allocation2 + $0x18] sm:$0xff] %vm1702, %v1443
        %1707 = vst.msk [vmem:[#allocation2 + $0x20] sm:$0xff] %vm1702, %v1444
        %1708 = vst.msk [vmem:[#allocation2 + $0x28] sm:$0xff] %vm1702, %v1445
        %1709 = vst.msk [vmem:[#allocation2 + $0x30] sm:$0xff] %vm1702, %v1446
        %1710 = vst.msk [vmem:[#allocation2 + $0x38] sm:$0xff] %vm1702, %v1447
        %1711 = vst.msk [vmem:[#allocation3] sm:$0xff] %vm1702, %v1638
        %1712 = vst.msk [vmem:[#allocation3 + $0x8] sm:$0xff] %vm1702, %v1639
        %1713 = vst.msk [vmem:[#allocation3 + $0x10] sm:$0xff] %vm1702, %v1640
        %1714 = vst.msk [vmem:[#allocation3 + $0x18] sm:$0xff] %vm1702, %v1641
        %1715 = vst.msk [vmem:[#allocation3 + $0x20] sm:$0xff] %vm1702, %v1642
        %1716 = vst.msk [vmem:[#allocation3 + $0x28] sm:$0xff] %vm1702, %v1643
        %1717 = vst.msk [vmem:[#allocation3 + $0x30] sm:$0xff] %vm1702, %v1644
        %1718 = vst.msk [vmem:[#allocation3 + $0x38] sm:$0xff] %vm1702, %v1645
        %1719 = vst.msk [vmem:[#allocation4] sm:$0xff] %vm1702, %v1670
        %1720 = vst.msk [vmem:[#allocation4 + $0x8] sm:$0xff] %vm1702, %v1671
        %1721 = vst.msk [vmem:[#allocation4 + $0x10] sm:$0xff] %vm1702, %v1672
        %1722 = vst.msk [vmem:[#allocation4 + $0x18] sm:$0xff] %vm1702, %v1673
        %1723 = vst.msk [vmem:[#allocation4 + $0x20] sm:$0xff] %vm1702, %v1674
        %1724 = vst.msk [vmem:[#allocation4 + $0x28] sm:$0xff] %vm1702, %v1675
        %1725 = vst.msk [vmem:[#allocation4 + $0x30] sm:$0xff] %vm1702, %v1676
        %1726 = vst.msk [vmem:[#allocation4 + $0x38] sm:$0xff] %vm1702, %v1677
        %1727 = vst.msk [vmem:[#allocation5] sm:$0xff] %vm1702, %v1694
        %1728 = vst.msk [vmem:[#allocation5 + $0x8] sm:$0xff] %vm1702, %v1695
        %1729 = vst.msk [vmem:[#allocation5 + $0x10] sm:$0xff] %vm1702, %v1696
        %1730 = vst.msk [vmem:[#allocation5 + $0x18] sm:$0xff] %vm1702, %v1697
        %1731 = vst.msk [vmem:[#allocation5 + $0x20] sm:$0xff] %vm1702, %v1698
        %1732 = vst.msk [vmem:[#allocation5 + $0x28] sm:$0xff] %vm1702, %v1699
        %1733 = vst.msk [vmem:[#allocation5 + $0x30] sm:$0xff] %vm1702, %v1700
        %1734 = vst.msk [vmem:[#allocation5 + $0x38] sm:$0xff] %vm1702, %v1701
      $region44: #{tpu_custom_call.1} parent=35 // pred_fallthru
        _
      // Predicated region
      $region45: #{tpu_custom_call.1} parent=35 // pred_check
        %p1735 = pneg %p329
      $region46: #{tpu_custom_call.1} parent=35 // pred_check_branch
        %1737 = sbr.rel (%p1735) target = $region48
      $region47: #{tpu_custom_call.1} parent=35 // pred_region
        %v1738 = vld [vmem:[#allocation2] sm:$0xff]
        %v1739 = vld [vmem:[#allocation2 + $0x8] sm:$0xff]
        %v1740 = vld [vmem:[#allocation2 + $0x10] sm:$0xff]
        %v1741 = vld [vmem:[#allocation2 + $0x18] sm:$0xff]
        %v1742 = vld [vmem:[#allocation2 + $0x20] sm:$0xff]
        %v1743 = vld [vmem:[#allocation2 + $0x28] sm:$0xff]
        %v1744 = vld [vmem:[#allocation2 + $0x30] sm:$0xff]
        %v1745 = vld [vmem:[#allocation2 + $0x38] sm:$0xff]
        %v1746 = vld [vmem:[#allocation3] sm:$0xff]
        %v1747 = vld [vmem:[#allocation3 + $0x8] sm:$0xff]
        %v1748 = vld [vmem:[#allocation3 + $0x10] sm:$0xff]
        %v1749 = vld [vmem:[#allocation3 + $0x18] sm:$0xff]
        %v1750 = vld [vmem:[#allocation3 + $0x20] sm:$0xff]
        %v1751 = vld [vmem:[#allocation3 + $0x28] sm:$0xff]
        %v1752 = vld [vmem:[#allocation3 + $0x30] sm:$0xff]
        %v1753 = vld [vmem:[#allocation3 + $0x38] sm:$0xff]
        %v1754 = vld [vmem:[#allocation4] sm:$0xff]
        %v1755 = vld [vmem:[#allocation4 + $0x8] sm:$0xff]
        %v1756 = vld [vmem:[#allocation4 + $0x10] sm:$0xff]
        %v1757 = vld [vmem:[#allocation4 + $0x18] sm:$0xff]
        %v1758 = vld [vmem:[#allocation4 + $0x20] sm:$0xff]
        %v1759 = vld [vmem:[#allocation4 + $0x28] sm:$0xff]
        %v1760 = vld [vmem:[#allocation4 + $0x30] sm:$0xff]
        %v1761 = vld [vmem:[#allocation4 + $0x38] sm:$0xff]
        %v1762 = vld [vmem:[#allocation5] sm:$0xff]
        %v1763 = vld [vmem:[#allocation5 + $0x8] sm:$0xff]
        %v1764 = vld [vmem:[#allocation5 + $0x10] sm:$0xff]
        %v1765 = vld [vmem:[#allocation5 + $0x18] sm:$0xff]
        %v1766 = vld [vmem:[#allocation5 + $0x20] sm:$0xff]
        %v1767 = vld [vmem:[#allocation5 + $0x28] sm:$0xff]
        %v1768 = vld [vmem:[#allocation5 + $0x30] sm:$0xff]
        %v1769 = vld [vmem:[#allocation5 + $0x38] sm:$0xff]
        %v1770 = vld [vmem:[%s254] sm:$0xff]
        %v1771 = vld [vmem:[%s254 + $0x8] sm:$0xff]
        %v1772 = vld [vmem:[%s254 + $0x10] sm:$0xff]
        %v1773 = vld [vmem:[%s254 + $0x18] sm:$0xff]
        %v1774 = vld [vmem:[%s254 + $0x20] sm:$0xff]
        %v1775 = vld [vmem:[%s254 + $0x28] sm:$0xff]
        %v1776 = vld [vmem:[%s254 + $0x30] sm:$0xff]
        %v1777 = vld [vmem:[%s254 + $0x38] sm:$0xff]
        %v1778 = vld [vmem:[%s254 + $0x40] sm:$0xff]
        %v1779 = vld [vmem:[%s254 + $0x48] sm:$0xff]
        %v1780 = vld [vmem:[%s254 + $0x50] sm:$0xff]
        %v1781 = vld [vmem:[%s254 + $0x58] sm:$0xff]
        %v1782 = vld [vmem:[%s254 + $0x60] sm:$0xff]
        %v1783 = vld [vmem:[%s254 + $0x68] sm:$0xff]
        %v1784 = vld [vmem:[%s254 + $0x70] sm:$0xff]
        %v1785 = vld [vmem:[%s254 + $0x78] sm:$0xff]
        %v1786 = vld [vmem:[%s264] sm:$0x1]
        %vm1787 = vcmask 261120
        %v1789 = vsel %vm1787, %v310, 0
        %v1792 = vsel %vm1787, %v311, 0
        %v1795 = vsel %vm1787, %v312, 0
        %v1798 = vsel %vm1787, %v313, 0
        %v1801 = vsel %vm1787, %v314, 0
        %v1804 = vsel %vm1787, %v315, 0
        %v1807 = vsel %vm1787, %v316, 0
        %v1810 = vsel %vm1787, %v317, 0
        %v1813 = vsel %vm1787, %v1770, 0
        %v1816 = vsel %vm1787, %v1771, 0
        %v1819 = vsel %vm1787, %v1772, 0
        %v1822 = vsel %vm1787, %v1773, 0
        %v1825 = vsel %vm1787, %v1774, 0
        %v1828 = vsel %vm1787, %v1775, 0
        %v1831 = vsel %vm1787, %v1776, 0
        %v1834 = vsel %vm1787, %v1777, 0
        %v1837 = vsel %vm1787, %v1778, 0
        %v1840 = vsel %vm1787, %v1779, 0
        %v1843 = vsel %vm1787, %v1780, 0
        %v1846 = vsel %vm1787, %v1781, 0
        %v1849 = vsel %vm1787, %v1782, 0
        %v1852 = vsel %vm1787, %v1783, 0
        %v1855 = vsel %vm1787, %v1784, 0
        %v1858 = vsel %vm1787, %v1785, 0
        %1860 = vmatprep.subr.mxu0 0.0
        %v1861 = vand.u32 %v1813, 4294901760
        %1862 = vmatpush1.xpose.msra.mxu0 %v1861
        %1863 = vmatprep.subr.mxu0 0.0
        %v1864 = vand.u32 %v1816, 4294901760
        %1865 = vmatpush1.xpose.msra.mxu0 %v1864
        %1866 = vmatprep.subr.mxu0 0.0
        %v1867 = vand.u32 %v1819, 4294901760
        %1868 = vmatpush1.xpose.msra.mxu0 %v1867
        %1869 = vmatprep.subr.mxu0 0.0
        %v1870 = vand.u32 %v1822, 4294901760
        %1871 = vmatpush1.xpose.msra.mxu0 %v1870
        %1872 = vmatprep.subr.mxu0 0.0
        %v1873 = vand.u32 %v1825, 4294901760
        %1874 = vmatpush1.xpose.msra.mxu0 %v1873
        %1875 = vmatprep.subr.mxu0 0.0
        %v1876 = vand.u32 %v1828, 4294901760
        %1877 = vmatpush1.xpose.msra.mxu0 %v1876
        %1878 = vmatprep.subr.mxu0 0.0
        %v1879 = vand.u32 %v1831, 4294901760
        %1880 = vmatpush1.xpose.msra.mxu0 %v1879
        %1881 = vmatprep.subr.mxu0 0.0
        %v1882 = vand.u32 %v1834, 4294901760
        %1883 = vmatpush1.xpose.msra.mxu0 %v1882
        %1884 = vmatprep.subr.mxu0 0.0
        %v1885 = vand.u32 %v1837, 4294901760
        %1886 = vmatpush1.xpose.msra.mxu0 %v1885
        %1887 = vmatprep.subr.mxu0 0.0
        %v1888 = vand.u32 %v1840, 4294901760
        %1889 = vmatpush1.xpose.msra.mxu0 %v1888
        %1890 = vmatprep.subr.mxu0 0.0
        %v1891 = vand.u32 %v1843, 4294901760
        %1892 = vmatpush1.xpose.msra.mxu0 %v1891
        %1893 = vmatprep.subr.mxu0 0.0
        %v1894 = vand.u32 %v1846, 4294901760
        %1895 = vmatpush1.xpose.msra.mxu0 %v1894
        %1896 = vmatprep.subr.mxu0 0.0
        %v1897 = vand.u32 %v1849, 4294901760
        %1898 = vmatpush1.xpose.msra.mxu0 %v1897
        %1899 = vmatprep.subr.mxu0 0.0
        %v1900 = vand.u32 %v1852, 4294901760
        %1901 = vmatpush1.xpose.msra.mxu0 %v1900
        %1902 = vmatprep.subr.mxu0 0.0
        %v1903 = vand.u32 %v1855, 4294901760
        %1904 = vmatpush1.xpose.msra.mxu0 %v1903
        %1905 = vmatprep.subr.mxu0 0.0
        %v1906 = vand.u32 %v1858, 4294901760
        %1907 = vmatpush1.xpose.msra.mxu0 %v1906
        %1908 = vmatprep.subr.mxu0 0.0
        %1909 = vmatpush1.xpose.msra.mxu0 0.0
        %1910 = vmatprep.subr.mxu0 0.0
        %1911 = vmatpush1.xpose.msra.mxu0 0.0
        %1912 = vmatprep.subr.mxu0 0.0
        %1913 = vmatpush1.xpose.msra.mxu0 0.0
        %1914 = vmatprep.subr.mxu0 0.0
        %1915 = vmatpush1.xpose.msra.mxu0 0.0
        %1916 = vmatprep.subr.mxu0 0.0
        %1917 = vmatpush1.xpose.msra.mxu0 0.0
        %1918 = vmatprep.subr.mxu0 0.0
        %1919 = vmatpush1.xpose.msra.mxu0 0.0
        %1920 = vmatprep.subr.mxu0 0.0
        %1921 = vmatpush1.xpose.msra.mxu0 0.0
        %1922 = vmatprep.subr.mxu0 0.0
        %1923 = vmatpush1.xpose.msra.mxu0 0.0
        %1924 = vmatprep.subr.mxu0 0.0
        %1925 = vmatpush1.xpose.msra.mxu0 0.0
        %1926 = vmatprep.subr.mxu0 0.0
        %1927 = vmatpush1.xpose.msra.mxu0 0.0
        %1928 = vmatprep.subr.mxu0 0.0
        %1929 = vmatpush1.xpose.msra.mxu0 0.0
        %1930 = vmatprep.subr.mxu0 0.0
        %1931 = vmatpush1.xpose.msra.mxu0 0.0
        %1932 = vmatprep.subr.mxu0 0.0
        %1933 = vmatpush1.xpose.msra.mxu0 0.0
        %1934 = vmatprep.subr.mxu0 0.0
        %1935 = vmatpush1.xpose.msra.mxu0 0.0
        %1936 = vmatprep.subr.mxu0 0.0
        %1937 = vmatpush1.xpose.msra.mxu0 0.0
        %1938 = vmatprep.subr.mxu0 0.0
        %1939 = vmatpush1.xpose.msra.mxu0 0.0
        %1940 = vmatprep.mubr.f32.mxu0 0.0
        %v1941 = vand.u32 %v1789, 4294901760
        %v1942 = vsub.f32 %v1789, %v1941
        %v1943 = vand.u32 %v1942, 4294901760
        %v1944 = vsub.f32 %v1942, %v1943
        %v1945 = vand.u32 %v1944, 4294901760
        %1946 = vmatmul.mubr.f32.gmra.mrb[0].mxu0 %v1945
        %v1947 = vpop.f32.mrb[0].mxu0
        %v1948 = vadd.f32 0.0, %v1947
        %v1949 = vpop.f32.mrb[0].mxu0
        %1950 = vmatprep.mubr.f32.mxu0 0.0
        %v1951 = vand.u32 %v1792, 4294901760
        %v1952 = vsub.f32 %v1792, %v1951
        %v1953 = vand.u32 %v1952, 4294901760
        %v1954 = vsub.f32 %v1952, %v1953
        %v1955 = vand.u32 %v1954, 4294901760
        %1956 = vmatmul.mubr.f32.gmra.mrb[0].mxu0 %v1955
        %v1957 = vpop.f32.mrb[0].mxu0
        %v1958 = vadd.f32 0.0, %v1957
        %v1959 = vpop.f32.mrb[0].mxu0
        %1960 = vmatprep.mubr.f32.mxu0 0.0
        %v1961 = vand.u32 %v1795, 4294901760
        %v1962 = vsub.f32 %v1795, %v1961
        %v1963 = vand.u32 %v1962, 4294901760
        %v1964 = vsub.f32 %v1962, %v1963
        %v1965 = vand.u32 %v1964, 4294901760
        %1966 = vmatmul.mubr.f32.gmra.mrb[0].mxu0 %v1965
        %v1967 = vpop.f32.mrb[0].mxu0
        %v1968 = vadd.f32 0.0, %v1967
        %v1969 = vpop.f32.mrb[0].mxu0
        %1970 = vmatprep.mubr.f32.mxu0 0.0
        %v1971 = vand.u32 %v1798, 4294901760
        %v1972 = vsub.f32 %v1798, %v1971
        %v1973 = vand.u32 %v1972, 4294901760
        %v1974 = vsub.f32 %v1972, %v1973
        %v1975 = vand.u32 %v1974, 4294901760
        %1976 = vmatmul.mubr.f32.gmra.mrb[0].mxu0 %v1975
        %v1977 = vpop.f32.mrb[0].mxu0
        %v1978 = vadd.f32 0.0, %v1977
        %v1979 = vpop.f32.mrb[0].mxu0
        %1980 = vmatprep.mubr.f32.mxu0 0.0
        %v1981 = vand.u32 %v1801, 4294901760
        %v1982 = vsub.f32 %v1801, %v1981
        %v1983 = vand.u32 %v1982, 4294901760
        %v1984 = vsub.f32 %v1982, %v1983
        %v1985 = vand.u32 %v1984, 4294901760
        %1986 = vmatmul.mubr.f32.gmra.mrb[0].mxu0 %v1985
        %v1987 = vpop.f32.mrb[0].mxu0
        %v1988 = vadd.f32 0.0, %v1987
        %v1989 = vpop.f32.mrb[0].mxu0
        %1990 = vmatprep.mubr.f32.mxu0 0.0
        %v1991 = vand.u32 %v1804, 4294901760
        %v1992 = vsub.f32 %v1804, %v1991
        %v1993 = vand.u32 %v1992, 4294901760
        %v1994 = vsub.f32 %v1992, %v1993
        %v1995 = vand.u32 %v1994, 4294901760
        %1996 = vmatmul.mubr.f32.gmra.mrb[0].mxu0 %v1995
        %v1997 = vpop.f32.mrb[0].mxu0
        %v1998 = vadd.f32 0.0, %v1997
        %v1999 = vpop.f32.mrb[0].mxu0
        %2000 = vmatprep.mubr.f32.mxu0 0.0
        %v2001 = vand.u32 %v1807, 4294901760
        %v2002 = vsub.f32 %v1807, %v2001
        %v2003 = vand.u32 %v2002, 4294901760
        %v2004 = vsub.f32 %v2002, %v2003
        %v2005 = vand.u32 %v2004, 4294901760
        %2006 = vmatmul.mubr.f32.gmra.mrb[0].mxu0 %v2005
        %v2007 = vpop.f32.mrb[0].mxu0
        %v2008 = vadd.f32 0.0, %v2007
        %v2009 = vpop.f32.mrb[0].mxu0
        %2010 = vmatprep.mubr.f32.mxu0 0.0
        %v2011 = vand.u32 %v1810, 4294901760
        %v2012 = vsub.f32 %v1810, %v2011
        %v2013 = vand.u32 %v2012, 4294901760
        %v2014 = vsub.f32 %v2012, %v2013
        %v2015 = vand.u32 %v2014, 4294901760
        %2016 = vmatmul.mubr.f32.gmra.mrb[0].mxu0 %v2015
        %v2017 = vpop.f32.mrb[0].mxu0
        %v2018 = vadd.f32 0.0, %v2017
        %v2019 = vpop.f32.mrb[0].mxu0
        %2020 = vdwg.mxu0
        %2021 = vmatprep.subr.mxu0 0.0
        %v2022 = vand.u32 %v1813, 4294901760
        %v2023 = vsub.f32 %v1813, %v2022
        %v2024 = vand.u32 %v2023, 4294901760
        %v2025 = vsub.f32 %v2023, %v2024
        %v2026 = vand.u32 %v2025, 4294901760
        %2027 = vmatpush1.xpose.msra.mxu0 %v2026
        %2028 = vmatprep.subr.mxu0 0.0
        %v2029 = vand.u32 %v1816, 4294901760
        %v2030 = vsub.f32 %v1816, %v2029
        %v2031 = vand.u32 %v2030, 4294901760
        %v2032 = vsub.f32 %v2030, %v2031
        %v2033 = vand.u32 %v2032, 4294901760
        %2034 = vmatpush1.xpose.msra.mxu0 %v2033
        %2035 = vmatprep.subr.mxu0 0.0
        %v2036 = vand.u32 %v1819, 4294901760
        %v2037 = vsub.f32 %v1819, %v2036
        %v2038 = vand.u32 %v2037, 4294901760
        %v2039 = vsub.f32 %v2037, %v2038
        %v2040 = vand.u32 %v2039, 4294901760
        %2041 = vmatpush1.xpose.msra.mxu0 %v2040
        %2042 = vmatprep.subr.mxu0 0.0
        %v2043 = vand.u32 %v1822, 4294901760
        %v2044 = vsub.f32 %v1822, %v2043
        %v2045 = vand.u32 %v2044, 4294901760
        %v2046 = vsub.f32 %v2044, %v2045
        %v2047 = vand.u32 %v2046, 4294901760
        %2048 = vmatpush1.xpose.msra.mxu0 %v2047
        %2049 = vmatprep.subr.mxu0 0.0
        %v2050 = vand.u32 %v1825, 4294901760
        %v2051 = vsub.f32 %v1825, %v2050
        %v2052 = vand.u32 %v2051, 4294901760
        %v2053 = vsub.f32 %v2051, %v2052
        %v2054 = vand.u32 %v2053, 4294901760
        %2055 = vmatpush1.xpose.msra.mxu0 %v2054
        %2056 = vmatprep.subr.mxu0 0.0
        %v2057 = vand.u32 %v1828, 4294901760
        %v2058 = vsub.f32 %v1828, %v2057
        %v2059 = vand.u32 %v2058, 4294901760
        %v2060 = vsub.f32 %v2058, %v2059
        %v2061 = vand.u32 %v2060, 4294901760
        %2062 = vmatpush1.xpose.msra.mxu0 %v2061
        %2063 = vmatprep.subr.mxu0 0.0
        %v2064 = vand.u32 %v1831, 4294901760
        %v2065 = vsub.f32 %v1831, %v2064
        %v2066 = vand.u32 %v2065, 4294901760
        %v2067 = vsub.f32 %v2065, %v2066
        %v2068 = vand.u32 %v2067, 4294901760
        %2069 = vmatpush1.xpose.msra.mxu0 %v2068
        %2070 = vmatprep.subr.mxu0 0.0
        %v2071 = vand.u32 %v1834, 4294901760
        %v2072 = vsub.f32 %v1834, %v2071
        %v2073 = vand.u32 %v2072, 4294901760
        %v2074 = vsub.f32 %v2072, %v2073
        %v2075 = vand.u32 %v2074, 4294901760
        %2076 = vmatpush1.xpose.msra.mxu0 %v2075
        %2077 = vmatprep.subr.mxu0 0.0
        %v2078 = vand.u32 %v1837, 4294901760
        %v2079 = vsub.f32 %v1837, %v2078
        %v2080 = vand.u32 %v2079, 4294901760
        %v2081 = vsub.f32 %v2079, %v2080
        %v2082 = vand.u32 %v2081, 4294901760
        %2083 = vmatpush1.xpose.msra.mxu0 %v2082
        %2084 = vmatprep.subr.mxu0 0.0
        %v2085 = vand.u32 %v1840, 4294901760
        %v2086 = vsub.f32 %v1840, %v2085
        %v2087 = vand.u32 %v2086, 4294901760
        %v2088 = vsub.f32 %v2086, %v2087
        %v2089 = vand.u32 %v2088, 4294901760
        %2090 = vmatpush1.xpose.msra.mxu0 %v2089
        %2091 = vmatprep.subr.mxu0 0.0
        %v2092 = vand.u32 %v1843, 4294901760
        %v2093 = vsub.f32 %v1843, %v2092
        %v2094 = vand.u32 %v2093, 4294901760
        %v2095 = vsub.f32 %v2093, %v2094
        %v2096 = vand.u32 %v2095, 4294901760
        %2097 = vmatpush1.xpose.msra.mxu0 %v2096
        %2098 = vmatprep.subr.mxu0 0.0
        %v2099 = vand.u32 %v1846, 4294901760
        %v2100 = vsub.f32 %v1846, %v2099
        %v2101 = vand.u32 %v2100, 4294901760
        %v2102 = vsub.f32 %v2100, %v2101
        %v2103 = vand.u32 %v2102, 4294901760
        %2104 = vmatpush1.xpose.msra.mxu0 %v2103
        %2105 = vmatprep.subr.mxu0 0.0
        %v2106 = vand.u32 %v1849, 4294901760
        %v2107 = vsub.f32 %v1849, %v2106
        %v2108 = vand.u32 %v2107, 4294901760
        %v2109 = vsub.f32 %v2107, %v2108
        %v2110 = vand.u32 %v2109, 4294901760
        %2111 = vmatpush1.xpose.msra.mxu0 %v2110
        %2112 = vmatprep.subr.mxu0 0.0
        %v2113 = vand.u32 %v1852, 4294901760
        %v2114 = vsub.f32 %v1852, %v2113
        %v2115 = vand.u32 %v2114, 4294901760
        %v2116 = vsub.f32 %v2114, %v2115
        %v2117 = vand.u32 %v2116, 4294901760
        %2118 = vmatpush1.xpose.msra.mxu0 %v2117
        %2119 = vmatprep.subr.mxu0 0.0
        %v2120 = vand.u32 %v1855, 4294901760
        %v2121 = vsub.f32 %v1855, %v2120
        %v2122 = vand.u32 %v2121, 4294901760
        %v2123 = vsub.f32 %v2121, %v2122
        %v2124 = vand.u32 %v2123, 4294901760
        %2125 = vmatpush1.xpose.msra.mxu0 %v2124
        %2126 = vmatprep.subr.mxu0 0.0
        %v2127 = vand.u32 %v1858, 4294901760
        %v2128 = vsub.f32 %v1858, %v2127
        %v2129 = vand.u32 %v2128, 4294901760
        %v2130 = vsub.f32 %v2128, %v2129
        %v2131 = vand.u32 %v2130, 4294901760
        %2132 = vmatpush1.xpose.msra.mxu0 %v2131
        %2133 = vmatprep.subr.mxu0 0.0
        %2134 = vmatpush1.xpose.msra.mxu0 0.0
        %2135 = vmatprep.subr.mxu0 0.0
        %2136 = vmatpush1.xpose.msra.mxu0 0.0
        %2137 = vmatprep.subr.mxu0 0.0
        %2138 = vmatpush1.xpose.msra.mxu0 0.0
        %2139 = vmatprep.subr.mxu0 0.0
        %2140 = vmatpush1.xpose.msra.mxu0 0.0
        %2141 = vmatprep.subr.mxu0 0.0
        %2142 = vmatpush1.xpose.msra.mxu0 0.0
        %2143 = vmatprep.subr.mxu0 0.0
        %2144 = vmatpush1.xpose.msra.mxu0 0.0
        %2145 = vmatprep.subr.mxu0 0.0
        %2146 = vmatpush1.xpose.msra.mxu0 0.0
        %2147 = vmatprep.subr.mxu0 0.0
        %2148 = vmatpush1.xpose.msra.mxu0 0.0
        %2149 = vmatprep.subr.mxu0 0.0
        %2150 = vmatpush1.xpose.msra.mxu0 0.0
        %2151 = vmatprep.subr.mxu0 0.0
        %2152 = vmatpush1.xpose.msra.mxu0 0.0
        %2153 = vmatprep.subr.mxu0 0.0
        %2154 = vmatpush1.xpose.msra.mxu0 0.0
        %2155 = vmatprep.subr.mxu0 0.0
        %2156 = vmatpush1.xpose.msra.mxu0 0.0
        %2157 = vmatprep.subr.mxu0 0.0
        %2158 = vmatpush1.xpose.msra.mxu0 0.0
        %2159 = vmatprep.subr.mxu0 0.0
        %2160 = vmatpush1.xpose.msra.mxu0 0.0
        %2161 = vmatprep.subr.mxu0 0.0
        %2162 = vmatpush1.xpose.msra.mxu0 0.0
        %2163 = vmatprep.subr.mxu0 0.0
        %2164 = vmatpush1.xpose.msra.mxu0 0.0
        %2165 = vmatprep.mubr.f32.mxu0 0.0
        %v2166 = vand.u32 %v1789, 4294901760
        %2167 = vmatmul.mubr.f32.gmra.mrb[0].mxu0 %v2166
        %v2168 = vpop.f32.mrb[0].mxu0
        %v2169 = vadd.f32 %v1948, %v2168
        %v2170 = vpop.f32.mrb[0].mxu0
        %2171 = vmatprep.mubr.f32.mxu0 0.0
        %v2172 = vand.u32 %v1792, 4294901760
        %2173 = vmatmul.mubr.f32.gmra.mrb[0].mxu0 %v2172
        %v2174 = vpop.f32.mrb[0].mxu0
        %v2175 = vadd.f32 %v1958, %v2174
        %v2176 = vpop.f32.mrb[0].mxu0
        %2177 = vmatprep.mubr.f32.mxu0 0.0
        %v2178 = vand.u32 %v1795, 4294901760
        %2179 = vmatmul.mubr.f32.gmra.mrb[0].mxu0 %v2178
        %v2180 = vpop.f32.mrb[0].mxu0
        %v2181 = vadd.f32 %v1968, %v2180
        %v2182 = vpop.f32.mrb[0].mxu0
        %2183 = vmatprep.mubr.f32.mxu0 0.0
        %v2184 = vand.u32 %v1798, 4294901760
        %2185 = vmatmul.mubr.f32.gmra.mrb[0].mxu0 %v2184
        %v2186 = vpop.f32.mrb[0].mxu0
        %v2187 = vadd.f32 %v1978, %v2186
        %v2188 = vpop.f32.mrb[0].mxu0
        %2189 = vmatprep.mubr.f32.mxu0 0.0
        %v2190 = vand.u32 %v1801, 4294901760
        %2191 = vmatmul.mubr.f32.gmra.mrb[0].mxu0 %v2190
        %v2192 = vpop.f32.mrb[0].mxu0
        %v2193 = vadd.f32 %v1988, %v2192
        %v2194 = vpop.f32.mrb[0].mxu0
        %2195 = vmatprep.mubr.f32.mxu0 0.0
        %v2196 = vand.u32 %v1804, 4294901760
        %2197 = vmatmul.mubr.f32.gmra.mrb[0].mxu0 %v2196
        %v2198 = vpop.f32.mrb[0].mxu0
        %v2199 = vadd.f32 %v1998, %v2198
        %v2200 = vpop.f32.mrb[0].mxu0
        %2201 = vmatprep.mubr.f32.mxu0 0.0
        %v2202 = vand.u32 %v1807, 4294901760
        %2203 = vmatmul.mubr.f32.gmra.mrb[0].mxu0 %v2202
        %v2204 = vpop.f32.mrb[0].mxu0
        %v2205 = vadd.f32 %v2008, %v2204
        %v2206 = vpop.f32.mrb[0].mxu0
        %2207 = vmatprep.mubr.f32.mxu0 0.0
        %v2208 = vand.u32 %v1810, 4294901760
        %2209 = vmatmul.mubr.f32.gmra.mrb[0].mxu0 %v2208
        %v2210 = vpop.f32.mrb[0].mxu0
        %v2211 = vadd.f32 %v2018, %v2210
        %v2212 = vpop.f32.mrb[0].mxu0
        %2213 = vdwg.mxu0
        %2214 = vmatprep.subr.mxu0 0.0
        %v2215 = vand.u32 %v1813, 4294901760
        %v2216 = vsub.f32 %v1813, %v2215
        %2217 = vmatpush1.xpose.msra.mxu0 %v2216
        %2218 = vmatprep.subr.mxu0 0.0
        %v2219 = vand.u32 %v1816, 4294901760
        %v2220 = vsub.f32 %v1816, %v2219
        %2221 = vmatpush1.xpose.msra.mxu0 %v2220
        %2222 = vmatprep.subr.mxu0 0.0
        %v2223 = vand.u32 %v1819, 4294901760
        %v2224 = vsub.f32 %v1819, %v2223
        %2225 = vmatpush1.xpose.msra.mxu0 %v2224
        %2226 = vmatprep.subr.mxu0 0.0
        %v2227 = vand.u32 %v1822, 4294901760
        %v2228 = vsub.f32 %v1822, %v2227
        %2229 = vmatpush1.xpose.msra.mxu0 %v2228
        %2230 = vmatprep.subr.mxu0 0.0
        %v2231 = vand.u32 %v1825, 4294901760
        %v2232 = vsub.f32 %v1825, %v2231
        %2233 = vmatpush1.xpose.msra.mxu0 %v2232
        %2234 = vmatprep.subr.mxu0 0.0
        %v2235 = vand.u32 %v1828, 4294901760
        %v2236 = vsub.f32 %v1828, %v2235
        %2237 = vmatpush1.xpose.msra.mxu0 %v2236
        %2238 = vmatprep.subr.mxu0 0.0
        %v2239 = vand.u32 %v1831, 4294901760
        %v2240 = vsub.f32 %v1831, %v2239
        %2241 = vmatpush1.xpose.msra.mxu0 %v2240
        %2242 = vmatprep.subr.mxu0 0.0
        %v2243 = vand.u32 %v1834, 4294901760
        %v2244 = vsub.f32 %v1834, %v2243
        %2245 = vmatpush1.xpose.msra.mxu0 %v2244
        %2246 = vmatprep.subr.mxu0 0.0
        %v2247 = vand.u32 %v1837, 4294901760
        %v2248 = vsub.f32 %v1837, %v2247
        %2249 = vmatpush1.xpose.msra.mxu0 %v2248
        %2250 = vmatprep.subr.mxu0 0.0
        %v2251 = vand.u32 %v1840, 4294901760
        %v2252 = vsub.f32 %v1840, %v2251
        %2253 = vmatpush1.xpose.msra.mxu0 %v2252
        %2254 = vmatprep.subr.mxu0 0.0
        %v2255 = vand.u32 %v1843, 4294901760
        %v2256 = vsub.f32 %v1843, %v2255
        %2257 = vmatpush1.xpose.msra.mxu0 %v2256
        %2258 = vmatprep.subr.mxu0 0.0
        %v2259 = vand.u32 %v1846, 4294901760
        %v2260 = vsub.f32 %v1846, %v2259
        %2261 = vmatpush1.xpose.msra.mxu0 %v2260
        %2262 = vmatprep.subr.mxu0 0.0
        %v2263 = vand.u32 %v1849, 4294901760
        %v2264 = vsub.f32 %v1849, %v2263
        %2265 = vmatpush1.xpose.msra.mxu0 %v2264
        %2266 = vmatprep.subr.mxu0 0.0
        %v2267 = vand.u32 %v1852, 4294901760
        %v2268 = vsub.f32 %v1852, %v2267
        %2269 = vmatpush1.xpose.msra.mxu0 %v2268
        %2270 = vmatprep.subr.mxu0 0.0
        %v2271 = vand.u32 %v1855, 4294901760
        %v2272 = vsub.f32 %v1855, %v2271
        %2273 = vmatpush1.xpose.msra.mxu0 %v2272
        %2274 = vmatprep.subr.mxu0 0.0
        %v2275 = vand.u32 %v1858, 4294901760
        %v2276 = vsub.f32 %v1858, %v2275
        %2277 = vmatpush1.xpose.msra.mxu0 %v2276
        %2278 = vmatprep.subr.mxu0 0.0
        %2279 = vmatpush1.xpose.msra.mxu0 0.0
        %2280 = vmatprep.subr.mxu0 0.0
        %2281 = vmatpush1.xpose.msra.mxu0 0.0
        %2282 = vmatprep.subr.mxu0 0.0
        %2283 = vmatpush1.xpose.msra.mxu0 0.0
        %2284 = vmatprep.subr.mxu0 0.0
        %2285 = vmatpush1.xpose.msra.mxu0 0.0
        %2286 = vmatprep.subr.mxu0 0.0
        %2287 = vmatpush1.xpose.msra.mxu0 0.0
        %2288 = vmatprep.subr.mxu0 0.0
        %2289 = vmatpush1.xpose.msra.mxu0 0.0
        %2290 = vmatprep.subr.mxu0 0.0
        %2291 = vmatpush1.xpose.msra.mxu0 0.0
        %2292 = vmatprep.subr.mxu0 0.0
        %2293 = vmatpush1.xpose.msra.mxu0 0.0
        %2294 = vmatprep.subr.mxu0 0.0
        %2295 = vmatpush1.xpose.msra.mxu0 0.0
        %2296 = vmatprep.subr.mxu0 0.0
        %2297 = vmatpush1.xpose.msra.mxu0 0.0
        %2298 = vmatprep.subr.mxu0 0.0
        %2299 = vmatpush1.xpose.msra.mxu0 0.0
        %2300 = vmatprep.subr.mxu0 0.0
        %2301 = vmatpush1.xpose.msra.mxu0 0.0
        %2302 = vmatprep.subr.mxu0 0.0
        %2303 = vmatpush1.xpose.msra.mxu0 0.0
        %2304 = vmatprep.subr.mxu0 0.0
        %2305 = vmatpush1.xpose.msra.mxu0 0.0
        %2306 = vmatprep.subr.mxu0 0.0
        %2307 = vmatpush1.xpose.msra.mxu0 0.0
        %2308 = vmatprep.subr.mxu0 0.0
        %2309 = vmatpush1.xpose.msra.mxu0 0.0
        %2310 = vmatprep.mubr.f32.mxu0 0.0
        %v2311 = vand.u32 %v1789, 4294901760
        %v2312 = vsub.f32 %v1789, %v2311
        %2313 = vmatmul.mubr.f32.gmra.mrb[0].mxu0 %v2312
        %v2314 = vpop.f32.mrb[0].mxu0
        %v2315 = vadd.f32 %v2169, %v2314
        %v2316 = vpop.f32.mrb[0].mxu0
        %2317 = vmatprep.mubr.f32.mxu0 0.0
        %v2318 = vand.u32 %v1792, 4294901760
        %v2319 = vsub.f32 %v1792, %v2318
        %2320 = vmatmul.mubr.f32.gmra.mrb[0].mxu0 %v2319
        %v2321 = vpop.f32.mrb[0].mxu0
        %v2322 = vadd.f32 %v2175, %v2321
        %v2323 = vpop.f32.mrb[0].mxu0
        %2324 = vmatprep.mubr.f32.mxu0 0.0
        %v2325 = vand.u32 %v1795, 4294901760
        %v2326 = vsub.f32 %v1795, %v2325
        %2327 = vmatmul.mubr.f32.gmra.mrb[0].mxu0 %v2326
        %v2328 = vpop.f32.mrb[0].mxu0
        %v2329 = vadd.f32 %v2181, %v2328
        %v2330 = vpop.f32.mrb[0].mxu0
        %2331 = vmatprep.mubr.f32.mxu0 0.0
        %v2332 = vand.u32 %v1798, 4294901760
        %v2333 = vsub.f32 %v1798, %v2332
        %2334 = vmatmul.mubr.f32.gmra.mrb[0].mxu0 %v2333
        %v2335 = vpop.f32.mrb[0].mxu0
        %v2336 = vadd.f32 %v2187, %v2335
        %v2337 = vpop.f32.mrb[0].mxu0
        %2338 = vmatprep.mubr.f32.mxu0 0.0
        %v2339 = vand.u32 %v1801, 4294901760
        %v2340 = vsub.f32 %v1801, %v2339
        %2341 = vmatmul.mubr.f32.gmra.mrb[0].mxu0 %v2340
        %v2342 = vpop.f32.mrb[0].mxu0
        %v2343 = vadd.f32 %v2193, %v2342
        %v2344 = vpop.f32.mrb[0].mxu0
        %2345 = vmatprep.mubr.f32.mxu0 0.0
        %v2346 = vand.u32 %v1804, 4294901760
        %v2347 = vsub.f32 %v1804, %v2346
        %2348 = vmatmul.mubr.f32.gmra.mrb[0].mxu0 %v2347
        %v2349 = vpop.f32.mrb[0].mxu0
        %v2350 = vadd.f32 %v2199, %v2349
        %v2351 = vpop.f32.mrb[0].mxu0
        %2352 = vmatprep.mubr.f32.mxu0 0.0
        %v2353 = vand.u32 %v1807, 4294901760
        %v2354 = vsub.f32 %v1807, %v2353
        %2355 = vmatmul.mubr.f32.gmra.mrb[0].mxu0 %v2354
        %v2356 = vpop.f32.mrb[0].mxu0
        %v2357 = vadd.f32 %v2205, %v2356
        %v2358 = vpop.f32.mrb[0].mxu0
        %2359 = vmatprep.mubr.f32.mxu0 0.0
        %v2360 = vand.u32 %v1810, 4294901760
        %v2361 = vsub.f32 %v1810, %v2360
        %2362 = vmatmul.mubr.f32.gmra.mrb[0].mxu0 %v2361
        %v2363 = vpop.f32.mrb[0].mxu0
        %v2364 = vadd.f32 %v2211, %v2363
        %v2365 = vpop.f32.mrb[0].mxu0
        %2366 = vdwg.mxu0
        %2367 = vmatprep.subr.mxu0 0.0
        %v2368 = vand.u32 %v1813, 4294901760
        %2369 = vmatpush1.xpose.msra.mxu0 %v2368
        %2370 = vmatprep.subr.mxu0 0.0
        %v2371 = vand.u32 %v1816, 4294901760
        %2372 = vmatpush1.xpose.msra.mxu0 %v2371
        %2373 = vmatprep.subr.mxu0 0.0
        %v2374 = vand.u32 %v1819, 4294901760
        %2375 = vmatpush1.xpose.msra.mxu0 %v2374
        %2376 = vmatprep.subr.mxu0 0.0
        %v2377 = vand.u32 %v1822, 4294901760
        %2378 = vmatpush1.xpose.msra.mxu0 %v2377
        %2379 = vmatprep.subr.mxu0 0.0
        %v2380 = vand.u32 %v1825, 4294901760
        %2381 = vmatpush1.xpose.msra.mxu0 %v2380
        %2382 = vmatprep.subr.mxu0 0.0
        %v2383 = vand.u32 %v1828, 4294901760
        %2384 = vmatpush1.xpose.msra.mxu0 %v2383
        %2385 = vmatprep.subr.mxu0 0.0
        %v2386 = vand.u32 %v1831, 4294901760
        %2387 = vmatpush1.xpose.msra.mxu0 %v2386
        %2388 = vmatprep.subr.mxu0 0.0
        %v2389 = vand.u32 %v1834, 4294901760
        %2390 = vmatpush1.xpose.msra.mxu0 %v2389
        %2391 = vmatprep.subr.mxu0 0.0
        %v2392 = vand.u32 %v1837, 4294901760
        %2393 = vmatpush1.xpose.msra.mxu0 %v2392
        %2394 = vmatprep.subr.mxu0 0.0
        %v2395 = vand.u32 %v1840, 4294901760
        %2396 = vmatpush1.xpose.msra.mxu0 %v2395
        %2397 = vmatprep.subr.mxu0 0.0
        %v2398 = vand.u32 %v1843, 4294901760
        %2399 = vmatpush1.xpose.msra.mxu0 %v2398
        %2400 = vmatprep.subr.mxu0 0.0
        %v2401 = vand.u32 %v1846, 4294901760
        %2402 = vmatpush1.xpose.msra.mxu0 %v2401
        %2403 = vmatprep.subr.mxu0 0.0
        %v2404 = vand.u32 %v1849, 4294901760
        %2405 = vmatpush1.xpose.msra.mxu0 %v2404
        %2406 = vmatprep.subr.mxu0 0.0
        %v2407 = vand.u32 %v1852, 4294901760
        %2408 = vmatpush1.xpose.msra.mxu0 %v2407
        %2409 = vmatprep.subr.mxu0 0.0
        %v2410 = vand.u32 %v1855, 4294901760
        %2411 = vmatpush1.xpose.msra.mxu0 %v2410
        %2412 = vmatprep.subr.mxu0 0.0
        %v2413 = vand.u32 %v1858, 4294901760
        %2414 = vmatpush1.xpose.msra.mxu0 %v2413
        %2415 = vmatprep.subr.mxu0 0.0
        %2416 = vmatpush1.xpose.msra.mxu0 0.0
        %2417 = vmatprep.subr.mxu0 0.0
        %2418 = vmatpush1.xpose.msra.mxu0 0.0
        %2419 = vmatprep.subr.mxu0 0.0
        %2420 = vmatpush1.xpose.msra.mxu0 0.0
        %2421 = vmatprep.subr.mxu0 0.0
        %2422 = vmatpush1.xpose.msra.mxu0 0.0
        %2423 = vmatprep.subr.mxu0 0.0
        %2424 = vmatpush1.xpose.msra.mxu0 0.0
        %2425 = vmatprep.subr.mxu0 0.0
        %2426 = vmatpush1.xpose.msra.mxu0 0.0
        %2427 = vmatprep.subr.mxu0 0.0
        %2428 = vmatpush1.xpose.msra.mxu0 0.0
        %2429 = vmatprep.subr.mxu0 0.0
        %2430 = vmatpush1.xpose.msra.mxu0 0.0
        %2431 = vmatprep.subr.mxu0 0.0
        %2432 = vmatpush1.xpose.msra.mxu0 0.0
        %2433 = vmatprep.subr.mxu0 0.0
        %2434 = vmatpush1.xpose.msra.mxu0 0.0
        %2435 = vmatprep.subr.mxu0 0.0
        %2436 = vmatpush1.xpose.msra.mxu0 0.0
        %2437 = vmatprep.subr.mxu0 0.0
        %2438 = vmatpush1.xpose.msra.mxu0 0.0
        %2439 = vmatprep.subr.mxu0 0.0
        %2440 = vmatpush1.xpose.msra.mxu0 0.0
        %2441 = vmatprep.subr.mxu0 0.0
        %2442 = vmatpush1.xpose.msra.mxu0 0.0
        %2443 = vmatprep.subr.mxu0 0.0
        %2444 = vmatpush1.xpose.msra.mxu0 0.0
        %2445 = vmatprep.subr.mxu0 0.0
        %2446 = vmatpush1.xpose.msra.mxu0 0.0
        %2447 = vmatprep.mubr.f32.mxu0 0.0
        %v2448 = vand.u32 %v1789, 4294901760
        %v2449 = vsub.f32 %v1789, %v2448
        %v2450 = vand.u32 %v2449, 4294901760
        %2451 = vmatmul.mubr.f32.gmra.mrb[0].mxu0 %v2450
        %v2452 = vpop.f32.mrb[0].mxu0
        %v2453 = vadd.f32 %v2315, %v2452
        %v2454 = vpop.f32.mrb[0].mxu0
        %2455 = vmatprep.mubr.f32.mxu0 0.0
        %v2456 = vand.u32 %v1792, 4294901760
        %v2457 = vsub.f32 %v1792, %v2456
        %v2458 = vand.u32 %v2457, 4294901760
        %2459 = vmatmul.mubr.f32.gmra.mrb[0].mxu0 %v2458
        %v2460 = vpop.f32.mrb[0].mxu0
        %v2461 = vadd.f32 %v2322, %v2460
        %v2462 = vpop.f32.mrb[0].mxu0
        %2463 = vmatprep.mubr.f32.mxu0 0.0
        %v2464 = vand.u32 %v1795, 4294901760
        %v2465 = vsub.f32 %v1795, %v2464
        %v2466 = vand.u32 %v2465, 4294901760
        %2467 = vmatmul.mubr.f32.gmra.mrb[0].mxu0 %v2466
        %v2468 = vpop.f32.mrb[0].mxu0
        %v2469 = vadd.f32 %v2329, %v2468
        %v2470 = vpop.f32.mrb[0].mxu0
        %2471 = vmatprep.mubr.f32.mxu0 0.0
        %v2472 = vand.u32 %v1798, 4294901760
        %v2473 = vsub.f32 %v1798, %v2472
        %v2474 = vand.u32 %v2473, 4294901760
        %2475 = vmatmul.mubr.f32.gmra.mrb[0].mxu0 %v2474
        %v2476 = vpop.f32.mrb[0].mxu0
        %v2477 = vadd.f32 %v2336, %v2476
        %v2478 = vpop.f32.mrb[0].mxu0
        %2479 = vmatprep.mubr.f32.mxu0 0.0
        %v2480 = vand.u32 %v1801, 4294901760
        %v2481 = vsub.f32 %v1801, %v2480
        %v2482 = vand.u32 %v2481, 4294901760
        %2483 = vmatmul.mubr.f32.gmra.mrb[0].mxu0 %v2482
        %v2484 = vpop.f32.mrb[0].mxu0
        %v2485 = vadd.f32 %v2343, %v2484
        %v2486 = vpop.f32.mrb[0].mxu0
        %2487 = vmatprep.mubr.f32.mxu0 0.0
        %v2488 = vand.u32 %v1804, 4294901760
        %v2489 = vsub.f32 %v1804, %v2488
        %v2490 = vand.u32 %v2489, 4294901760
        %2491 = vmatmul.mubr.f32.gmra.mrb[0].mxu0 %v2490
        %v2492 = vpop.f32.mrb[0].mxu0
        %v2493 = vadd.f32 %v2350, %v2492
        %v2494 = vpop.f32.mrb[0].mxu0
        %2495 = vmatprep.mubr.f32.mxu0 0.0
        %v2496 = vand.u32 %v1807, 4294901760
        %v2497 = vsub.f32 %v1807, %v2496
        %v2498 = vand.u32 %v2497, 4294901760
        %2499 = vmatmul.mubr.f32.gmra.mrb[0].mxu0 %v2498
        %v2500 = vpop.f32.mrb[0].mxu0
        %v2501 = vadd.f32 %v2357, %v2500
        %v2502 = vpop.f32.mrb[0].mxu0
        %2503 = vmatprep.mubr.f32.mxu0 0.0
        %v2504 = vand.u32 %v1810, 4294901760
        %v2505 = vsub.f32 %v1810, %v2504
        %v2506 = vand.u32 %v2505, 4294901760
        %2507 = vmatmul.mubr.f32.gmra.mrb[0].mxu0 %v2506
        %v2508 = vpop.f32.mrb[0].mxu0
        %v2509 = vadd.f32 %v2364, %v2508
        %v2510 = vpop.f32.mrb[0].mxu0
        %2511 = vdwg.mxu0
        %2512 = vmatprep.subr.mxu0 0.0
        %v2513 = vand.u32 %v1813, 4294901760
        %v2514 = vsub.f32 %v1813, %v2513
        %v2515 = vand.u32 %v2514, 4294901760
        %2516 = vmatpush1.xpose.msra.mxu0 %v2515
        %2517 = vmatprep.subr.mxu0 0.0
        %v2518 = vand.u32 %v1816, 4294901760
        %v2519 = vsub.f32 %v1816, %v2518
        %v2520 = vand.u32 %v2519, 4294901760
        %2521 = vmatpush1.xpose.msra.mxu0 %v2520
        %2522 = vmatprep.subr.mxu0 0.0
        %v2523 = vand.u32 %v1819, 4294901760
        %v2524 = vsub.f32 %v1819, %v2523
        %v2525 = vand.u32 %v2524, 4294901760
        %2526 = vmatpush1.xpose.msra.mxu0 %v2525
        %2527 = vmatprep.subr.mxu0 0.0
        %v2528 = vand.u32 %v1822, 4294901760
        %v2529 = vsub.f32 %v1822, %v2528
        %v2530 = vand.u32 %v2529, 4294901760
        %2531 = vmatpush1.xpose.msra.mxu0 %v2530
        %2532 = vmatprep.subr.mxu0 0.0
        %v2533 = vand.u32 %v1825, 4294901760
        %v2534 = vsub.f32 %v1825, %v2533
        %v2535 = vand.u32 %v2534, 4294901760
        %2536 = vmatpush1.xpose.msra.mxu0 %v2535
        %2537 = vmatprep.subr.mxu0 0.0
        %v2538 = vand.u32 %v1828, 4294901760
        %v2539 = vsub.f32 %v1828, %v2538
        %v2540 = vand.u32 %v2539, 4294901760
        %2541 = vmatpush1.xpose.msra.mxu0 %v2540
        %2542 = vmatprep.subr.mxu0 0.0
        %v2543 = vand.u32 %v1831, 4294901760
        %v2544 = vsub.f32 %v1831, %v2543
        %v2545 = vand.u32 %v2544, 4294901760
        %2546 = vmatpush1.xpose.msra.mxu0 %v2545
        %2547 = vmatprep.subr.mxu0 0.0
        %v2548 = vand.u32 %v1834, 4294901760
        %v2549 = vsub.f32 %v1834, %v2548
        %v2550 = vand.u32 %v2549, 4294901760
        %2551 = vmatpush1.xpose.msra.mxu0 %v2550
        %2552 = vmatprep.subr.mxu0 0.0
        %v2553 = vand.u32 %v1837, 4294901760
        %v2554 = vsub.f32 %v1837, %v2553
        %v2555 = vand.u32 %v2554, 4294901760
        %2556 = vmatpush1.xpose.msra.mxu0 %v2555
        %2557 = vmatprep.subr.mxu0 0.0
        %v2558 = vand.u32 %v1840, 4294901760
        %v2559 = vsub.f32 %v1840, %v2558
        %v2560 = vand.u32 %v2559, 4294901760
        %2561 = vmatpush1.xpose.msra.mxu0 %v2560
        %2562 = vmatprep.subr.mxu0 0.0
        %v2563 = vand.u32 %v1843, 4294901760
        %v2564 = vsub.f32 %v1843, %v2563
        %v2565 = vand.u32 %v2564, 4294901760
        %2566 = vmatpush1.xpose.msra.mxu0 %v2565
        %2567 = vmatprep.subr.mxu0 0.0
        %v2568 = vand.u32 %v1846, 4294901760
        %v2569 = vsub.f32 %v1846, %v2568
        %v2570 = vand.u32 %v2569, 4294901760
        %2571 = vmatpush1.xpose.msra.mxu0 %v2570
        %2572 = vmatprep.subr.mxu0 0.0
        %v2573 = vand.u32 %v1849, 4294901760
        %v2574 = vsub.f32 %v1849, %v2573
        %v2575 = vand.u32 %v2574, 4294901760
        %2576 = vmatpush1.xpose.msra.mxu0 %v2575
        %2577 = vmatprep.subr.mxu0 0.0
        %v2578 = vand.u32 %v1852, 4294901760
        %v2579 = vsub.f32 %v1852, %v2578
        %v2580 = vand.u32 %v2579, 4294901760
        %2581 = vmatpush1.xpose.msra.mxu0 %v2580
        %2582 = vmatprep.subr.mxu0 0.0
        %v2583 = vand.u32 %v1855, 4294901760
        %v2584 = vsub.f32 %v1855, %v2583
        %v2585 = vand.u32 %v2584, 4294901760
        %2586 = vmatpush1.xpose.msra.mxu0 %v2585
        %2587 = vmatprep.subr.mxu0 0.0
        %v2588 = vand.u32 %v1858, 4294901760
        %v2589 = vsub.f32 %v1858, %v2588
        %v2590 = vand.u32 %v2589, 4294901760
        %2591 = vmatpush1.xpose.msra.mxu0 %v2590
        %2592 = vmatprep.subr.mxu0 0.0
        %2593 = vmatpush1.xpose.msra.mxu0 0.0
        %2594 = vmatprep.subr.mxu0 0.0
        %2595 = vmatpush1.xpose.msra.mxu0 0.0
        %2596 = vmatprep.subr.mxu0 0.0
        %2597 = vmatpush1.xpose.msra.mxu0 0.0
        %2598 = vmatprep.subr.mxu0 0.0
        %2599 = vmatpush1.xpose.msra.mxu0 0.0
        %2600 = vmatprep.subr.mxu0 0.0
        %2601 = vmatpush1.xpose.msra.mxu0 0.0
        %2602 = vmatprep.subr.mxu0 0.0
        %2603 = vmatpush1.xpose.msra.mxu0 0.0
        %2604 = vmatprep.subr.mxu0 0.0
        %2605 = vmatpush1.xpose.msra.mxu0 0.0
        %2606 = vmatprep.subr.mxu0 0.0
        %2607 = vmatpush1.xpose.msra.mxu0 0.0
        %2608 = vmatprep.subr.mxu0 0.0
        %2609 = vmatpush1.xpose.msra.mxu0 0.0
        %2610 = vmatprep.subr.mxu0 0.0
        %2611 = vmatpush1.xpose.msra.mxu0 0.0
        %2612 = vmatprep.subr.mxu0 0.0
        %2613 = vmatpush1.xpose.msra.mxu0 0.0
        %2614 = vmatprep.subr.mxu0 0.0
        %2615 = vmatpush1.xpose.msra.mxu0 0.0
        %2616 = vmatprep.subr.mxu0 0.0
        %2617 = vmatpush1.xpose.msra.mxu0 0.0
        %2618 = vmatprep.subr.mxu0 0.0
        %2619 = vmatpush1.xpose.msra.mxu0 0.0
        %2620 = vmatprep.subr.mxu0 0.0
        %2621 = vmatpush1.xpose.msra.mxu0 0.0
        %2622 = vmatprep.subr.mxu0 0.0
        %2623 = vmatpush1.xpose.msra.mxu0 0.0
        %2624 = vmatprep.mubr.f32.mxu0 0.0
        %v2625 = vand.u32 %v1789, 4294901760
        %2626 = vmatmul.mubr.f32.gmra.mrb[0].mxu0 %v2625
        %v2627 = vpop.f32.mrb[0].mxu0
        %v2628 = vadd.f32 %v2453, %v2627
        %v2629 = vpop.f32.mrb[0].mxu0
        %2630 = vmatprep.mubr.f32.mxu0 0.0
        %v2631 = vand.u32 %v1792, 4294901760
        %2632 = vmatmul.mubr.f32.gmra.mrb[0].mxu0 %v2631
        %v2633 = vpop.f32.mrb[0].mxu0
        %v2634 = vadd.f32 %v2461, %v2633
        %v2635 = vpop.f32.mrb[0].mxu0
        %2636 = vmatprep.mubr.f32.mxu0 0.0
        %v2637 = vand.u32 %v1795, 4294901760
        %2638 = vmatmul.mubr.f32.gmra.mrb[0].mxu0 %v2637
        %v2639 = vpop.f32.mrb[0].mxu0
        %v2640 = vadd.f32 %v2469, %v2639
        %v2641 = vpop.f32.mrb[0].mxu0
        %2642 = vmatprep.mubr.f32.mxu0 0.0
        %v2643 = vand.u32 %v1798, 4294901760
        %2644 = vmatmul.mubr.f32.gmra.mrb[0].mxu0 %v2643
        %v2645 = vpop.f32.mrb[0].mxu0
        %v2646 = vadd.f32 %v2477, %v2645
        %v2647 = vpop.f32.mrb[0].mxu0
        %2648 = vmatprep.mubr.f32.mxu0 0.0
        %v2649 = vand.u32 %v1801, 4294901760
        %2650 = vmatmul.mubr.f32.gmra.mrb[0].mxu0 %v2649
        %v2651 = vpop.f32.mrb[0].mxu0
        %v2652 = vadd.f32 %v2485, %v2651
        %v2653 = vpop.f32.mrb[0].mxu0
        %2654 = vmatprep.mubr.f32.mxu0 0.0
        %v2655 = vand.u32 %v1804, 4294901760
        %2656 = vmatmul.mubr.f32.gmra.mrb[0].mxu0 %v2655
        %v2657 = vpop.f32.mrb[0].mxu0
        %v2658 = vadd.f32 %v2493, %v2657
        %v2659 = vpop.f32.mrb[0].mxu0
        %2660 = vmatprep.mubr.f32.mxu0 0.0
        %v2661 = vand.u32 %v1807, 4294901760
        %2662 = vmatmul.mubr.f32.gmra.mrb[0].mxu0 %v2661
        %v2663 = vpop.f32.mrb[0].mxu0
        %v2664 = vadd.f32 %v2501, %v2663
        %v2665 = vpop.f32.mrb[0].mxu0
        %2666 = vmatprep.mubr.f32.mxu0 0.0
        %v2667 = vand.u32 %v1810, 4294901760
        %2668 = vmatmul.mubr.f32.gmra.mrb[0].mxu0 %v2667
        %v2669 = vpop.f32.mrb[0].mxu0
        %v2670 = vadd.f32 %v2509, %v2669
        %v2671 = vpop.f32.mrb[0].mxu0
        %2672 = vdwg.mxu0
        %2673 = vmatprep.subr.mxu0 0.0
        %v2674 = vand.u32 %v1813, 4294901760
        %2675 = vmatpush1.xpose.msra.mxu0 %v2674
        %2676 = vmatprep.subr.mxu0 0.0
        %v2677 = vand.u32 %v1816, 4294901760
        %2678 = vmatpush1.xpose.msra.mxu0 %v2677
        %2679 = vmatprep.subr.mxu0 0.0
        %v2680 = vand.u32 %v1819, 4294901760
        %2681 = vmatpush1.xpose.msra.mxu0 %v2680
        %2682 = vmatprep.subr.mxu0 0.0
        %v2683 = vand.u32 %v1822, 4294901760
        %2684 = vmatpush1.xpose.msra.mxu0 %v2683
        %2685 = vmatprep.subr.mxu0 0.0
        %v2686 = vand.u32 %v1825, 4294901760
        %2687 = vmatpush1.xpose.msra.mxu0 %v2686
        %2688 = vmatprep.subr.mxu0 0.0
        %v2689 = vand.u32 %v1828, 4294901760
        %2690 = vmatpush1.xpose.msra.mxu0 %v2689
        %2691 = vmatprep.subr.mxu0 0.0
        %v2692 = vand.u32 %v1831, 4294901760
        %2693 = vmatpush1.xpose.msra.mxu0 %v2692
        %2694 = vmatprep.subr.mxu0 0.0
        %v2695 = vand.u32 %v1834, 4294901760
        %2696 = vmatpush1.xpose.msra.mxu0 %v2695
        %2697 = vmatprep.subr.mxu0 0.0
        %v2698 = vand.u32 %v1837, 4294901760
        %2699 = vmatpush1.xpose.msra.mxu0 %v2698
        %2700 = vmatprep.subr.mxu0 0.0
        %v2701 = vand.u32 %v1840, 4294901760
        %2702 = vmatpush1.xpose.msra.mxu0 %v2701
        %2703 = vmatprep.subr.mxu0 0.0
        %v2704 = vand.u32 %v1843, 4294901760
        %2705 = vmatpush1.xpose.msra.mxu0 %v2704
        %2706 = vmatprep.subr.mxu0 0.0
        %v2707 = vand.u32 %v1846, 4294901760
        %2708 = vmatpush1.xpose.msra.mxu0 %v2707
        %2709 = vmatprep.subr.mxu0 0.0
        %v2710 = vand.u32 %v1849, 4294901760
        %2711 = vmatpush1.xpose.msra.mxu0 %v2710
        %2712 = vmatprep.subr.mxu0 0.0
        %v2713 = vand.u32 %v1852, 4294901760
        %2714 = vmatpush1.xpose.msra.mxu0 %v2713
        %2715 = vmatprep.subr.mxu0 0.0
        %v2716 = vand.u32 %v1855, 4294901760
        %2717 = vmatpush1.xpose.msra.mxu0 %v2716
        %2718 = vmatprep.subr.mxu0 0.0
        %v2719 = vand.u32 %v1858, 4294901760
        %2720 = vmatpush1.xpose.msra.mxu0 %v2719
        %2721 = vmatprep.subr.mxu0 0.0
        %2722 = vmatpush1.xpose.msra.mxu0 0.0
        %2723 = vmatprep.subr.mxu0 0.0
        %2724 = vmatpush1.xpose.msra.mxu0 0.0
        %2725 = vmatprep.subr.mxu0 0.0
        %2726 = vmatpush1.xpose.msra.mxu0 0.0
        %2727 = vmatprep.subr.mxu0 0.0
        %2728 = vmatpush1.xpose.msra.mxu0 0.0
        %2729 = vmatprep.subr.mxu0 0.0
        %2730 = vmatpush1.xpose.msra.mxu0 0.0
        %2731 = vmatprep.subr.mxu0 0.0
        %2732 = vmatpush1.xpose.msra.mxu0 0.0
        %2733 = vmatprep.subr.mxu0 0.0
        %2734 = vmatpush1.xpose.msra.mxu0 0.0
        %2735 = vmatprep.subr.mxu0 0.0
        %2736 = vmatpush1.xpose.msra.mxu0 0.0
        %2737 = vmatprep.subr.mxu0 0.0
        %2738 = vmatpush1.xpose.msra.mxu0 0.0
        %2739 = vmatprep.subr.mxu0 0.0
        %2740 = vmatpush1.xpose.msra.mxu0 0.0
        %2741 = vmatprep.subr.mxu0 0.0
        %2742 = vmatpush1.xpose.msra.mxu0 0.0
        %2743 = vmatprep.subr.mxu0 0.0
        %2744 = vmatpush1.xpose.msra.mxu0 0.0
        %2745 = vmatprep.subr.mxu0 0.0
        %2746 = vmatpush1.xpose.msra.mxu0 0.0
        %2747 = vmatprep.subr.mxu0 0.0
        %2748 = vmatpush1.xpose.msra.mxu0 0.0
        %2749 = vmatprep.subr.mxu0 0.0
        %2750 = vmatpush1.xpose.msra.mxu0 0.0
        %2751 = vmatprep.subr.mxu0 0.0
        %2752 = vmatpush1.xpose.msra.mxu0 0.0
        %2753 = vmatprep.mubr.f32.mxu0 0.0
        %v2754 = vand.u32 %v1789, 4294901760
        %2755 = vmatmul.mubr.f32.gmra.mrb[0].mxu0 %v2754
        %v2756 = vpop.f32.mrb[0].mxu0
        %v2757 = vadd.f32 %v2628, %v2756
        %v2758 = vpop.f32.mrb[0].mxu0
        %2759 = vmatprep.mubr.f32.mxu0 0.0
        %v2760 = vand.u32 %v1792, 4294901760
        %2761 = vmatmul.mubr.f32.gmra.mrb[0].mxu0 %v2760
        %v2762 = vpop.f32.mrb[0].mxu0
        %v2763 = vadd.f32 %v2634, %v2762
        %v2764 = vpop.f32.mrb[0].mxu0
        %2765 = vmatprep.mubr.f32.mxu0 0.0
        %v2766 = vand.u32 %v1795, 4294901760
        %2767 = vmatmul.mubr.f32.gmra.mrb[0].mxu0 %v2766
        %v2768 = vpop.f32.mrb[0].mxu0
        %v2769 = vadd.f32 %v2640, %v2768
        %v2770 = vpop.f32.mrb[0].mxu0
        %2771 = vmatprep.mubr.f32.mxu0 0.0
        %v2772 = vand.u32 %v1798, 4294901760
        %2773 = vmatmul.mubr.f32.gmra.mrb[0].mxu0 %v2772
        %v2774 = vpop.f32.mrb[0].mxu0
        %v2775 = vadd.f32 %v2646, %v2774
        %v2776 = vpop.f32.mrb[0].mxu0
        %2777 = vmatprep.mubr.f32.mxu0 0.0
        %v2778 = vand.u32 %v1801, 4294901760
        %2779 = vmatmul.mubr.f32.gmra.mrb[0].mxu0 %v2778
        %v2780 = vpop.f32.mrb[0].mxu0
        %v2781 = vadd.f32 %v2652, %v2780
        %v2782 = vpop.f32.mrb[0].mxu0
        %2783 = vmatprep.mubr.f32.mxu0 0.0
        %v2784 = vand.u32 %v1804, 4294901760
        %2785 = vmatmul.mubr.f32.gmra.mrb[0].mxu0 %v2784
        %v2786 = vpop.f32.mrb[0].mxu0
        %v2787 = vadd.f32 %v2658, %v2786
        %v2788 = vpop.f32.mrb[0].mxu0
        %2789 = vmatprep.mubr.f32.mxu0 0.0
        %v2790 = vand.u32 %v1807, 4294901760
        %2791 = vmatmul.mubr.f32.gmra.mrb[0].mxu0 %v2790
        %v2792 = vpop.f32.mrb[0].mxu0
        %v2793 = vadd.f32 %v2664, %v2792
        %v2794 = vpop.f32.mrb[0].mxu0
        %2795 = vmatprep.mubr.f32.mxu0 0.0
        %v2796 = vand.u32 %v1810, 4294901760
        %2797 = vmatmul.mubr.f32.gmra.mrb[0].mxu0 %v2796
        %v2798 = vpop.f32.mrb[0].mxu0
        %v2799 = vadd.f32 %v2670, %v2798
        %v2800 = vpop.f32.mrb[0].mxu0
        %2801 = vdwg.mxu0
        %v2802 = vmul.f32 %v2757, 14.285714
        %v2803 = vmul.f32 %v2763, 14.285714
        %v2804 = vmul.f32 %v2769, 14.285714
        %v2805 = vmul.f32 %v2775, 14.285714
        %v2806 = vmul.f32 %v2781, 14.285714
        %v2807 = vmul.f32 %v2787, 14.285714
        %v2808 = vmul.f32 %v2793, 14.285714
        %v2809 = vmul.f32 %v2799, 14.285714
        %2810 = vmax.xlane.f32.xlu0 %v2802
        %v2811 = vpop.xlane.xlu0 %2810
        %2812 = vmax.xlane.f32.xlu0 %v2803
        %v2813 = vpop.xlane.xlu0 %2812
        %2814 = vmax.xlane.f32.xlu0 %v2804
        %v2815 = vpop.xlane.xlu0 %2814
        %2816 = vmax.xlane.f32.xlu0 %v2805
        %v2817 = vpop.xlane.xlu0 %2816
        %2818 = vmax.xlane.f32.xlu0 %v2806
        %v2819 = vpop.xlane.xlu0 %2818
        %2820 = vmax.xlane.f32.xlu0 %v2807
        %v2821 = vpop.xlane.xlu0 %2820
        %2822 = vmax.xlane.f32.xlu0 %v2808
        %v2823 = vpop.xlane.xlu0 %2822
        %2824 = vmax.xlane.f32.xlu0 %v2809
        %v2825 = vpop.xlane.xlu0 %2824
        %v2826 = vmax.f32 %v1738, %v2811
        %v2827 = vmax.f32 %v1739, %v2813
        %v2828 = vmax.f32 %v1740, %v2815
        %v2829 = vmax.f32 %v1741, %v2817
        %v2830 = vmax.f32 %v1742, %v2819
        %v2831 = vmax.f32 %v1743, %v2821
        %v2832 = vmax.f32 %v1744, %v2823
        %v2833 = vmax.f32 %v1745, %v2825
        %v2834 = vsub.f32 %v1738, %v2826
        %v2835 = vsub.f32 %v1739, %v2827
        %v2836 = vsub.f32 %v1740, %v2828
        %v2837 = vsub.f32 %v1741, %v2829
        %v2838 = vsub.f32 %v1742, %v2830
        %v2839 = vsub.f32 %v1743, %v2831
        %v2840 = vsub.f32 %v1744, %v2832
        %v2841 = vsub.f32 %v1745, %v2833
        %v2842 = vmul.f32 %v2834, 1.442695
        %v2843 = vpow.pop %v2842
        %v2844 = vmul.f32 %v2835, 1.442695
        %v2845 = vpow.pop %v2844
        %v2846 = vmul.f32 %v2836, 1.442695
        %v2847 = vpow.pop %v2846
        %v2848 = vmul.f32 %v2837, 1.442695
        %v2849 = vpow.pop %v2848
        %v2850 = vmul.f32 %v2838, 1.442695
        %v2851 = vpow.pop %v2850
        %v2852 = vmul.f32 %v2839, 1.442695
        %v2853 = vpow.pop %v2852
        %v2854 = vmul.f32 %v2840, 1.442695
        %v2855 = vpow.pop %v2854
        %v2856 = vmul.f32 %v2841, 1.442695
        %v2857 = vpow.pop %v2856
        %2859 = vset.pattern.permute.xlu0 0
        %2860 = vperm.xlu0 %2859, %v2826
        %v2861 = vpop.permute.xlu0 %2860
        %2864 = vset.pattern.permute.xlu0 0
        %2865 = vperm.xlu0 %2864, %v2827
        %v2866 = vpop.permute.xlu0 %2865
        %2869 = vset.pattern.permute.xlu0 0
        %2870 = vperm.xlu0 %2869, %v2828
        %v2871 = vpop.permute.xlu0 %2870
        %2874 = vset.pattern.permute.xlu0 0
        %2875 = vperm.xlu0 %2874, %v2829
        %v2876 = vpop.permute.xlu0 %2875
        %2879 = vset.pattern.permute.xlu0 0
        %2880 = vperm.xlu0 %2879, %v2830
        %v2881 = vpop.permute.xlu0 %2880
        %2884 = vset.pattern.permute.xlu0 0
        %2885 = vperm.xlu0 %2884, %v2831
        %v2886 = vpop.permute.xlu0 %2885
        %2889 = vset.pattern.permute.xlu0 0
        %2890 = vperm.xlu0 %2889, %v2832
        %v2891 = vpop.permute.xlu0 %2890
        %2894 = vset.pattern.permute.xlu0 0
        %2895 = vperm.xlu0 %2894, %v2833
        %v2896 = vpop.permute.xlu0 %2895
        %v2898 = vsub.f32 %v2802, %v2861
        %v2899 = vsub.f32 %v2803, %v2866
        %v2900 = vsub.f32 %v2804, %v2871
        %v2901 = vsub.f32 %v2805, %v2876
        %v2902 = vsub.f32 %v2806, %v2881
        %v2903 = vsub.f32 %v2807, %v2886
        %v2904 = vsub.f32 %v2808, %v2891
        %v2905 = vsub.f32 %v2809, %v2896
        %v2906 = vmul.f32 %v2898, 1.442695
        %v2907 = vpow.pop %v2906
        %v2908 = vmul.f32 %v2899, 1.442695
        %v2909 = vpow.pop %v2908
        %v2910 = vmul.f32 %v2900, 1.442695
        %v2911 = vpow.pop %v2910
        %v2912 = vmul.f32 %v2901, 1.442695
        %v2913 = vpow.pop %v2912
        %v2914 = vmul.f32 %v2902, 1.442695
        %v2915 = vpow.pop %v2914
        %v2916 = vmul.f32 %v2903, 1.442695
        %v2917 = vpow.pop %v2916
        %v2918 = vmul.f32 %v2904, 1.442695
        %v2919 = vpow.pop %v2918
        %v2920 = vmul.f32 %v2905, 1.442695
        %v2921 = vpow.pop %v2920
        %2922 = vset.pattern.permute.xlu0 0
        %2923 = vperm.xlu0 %2922, %v318
        %v2924 = vpop.permute.xlu0 %2923
        %2925 = vset.pattern.permute.xlu0 0
        %2926 = vperm.xlu0 %2925, %v319
        %v2927 = vpop.permute.xlu0 %2926
        %2928 = vset.pattern.permute.xlu0 0
        %2929 = vperm.xlu0 %2928, %v320
        %v2930 = vpop.permute.xlu0 %2929
        %2931 = vset.pattern.permute.xlu0 0
        %2932 = vperm.xlu0 %2931, %v321
        %v2933 = vpop.permute.xlu0 %2932
        %2934 = vset.pattern.permute.xlu0 0
        %2935 = vperm.xlu0 %2934, %v322
        %v2936 = vpop.permute.xlu0 %2935
        %2937 = vset.pattern.permute.xlu0 0
        %2938 = vperm.xlu0 %2937, %v323
        %v2939 = vpop.permute.xlu0 %2938
        %2940 = vset.pattern.permute.xlu0 0
        %2941 = vperm.xlu0 %2940, %v324
        %v2942 = vpop.permute.xlu0 %2941
        %2943 = vset.pattern.permute.xlu0 0
        %2944 = vperm.xlu0 %2943, %v325
        %v2945 = vpop.permute.xlu0 %2944
        %v2946 = vlaneseq
        %v2947 = vshrl.u32 %v2946, 7
        %v2948 = vsub.s32 0, %v2947
        %v2949 = vrot.slane %v1786, %v2948
        %vm2950 = vcmp.eq.s32.totalorder %v2924, %v2949
        %vm2951 = vcmp.eq.s32.totalorder %v2927, %v2949
        %vm2952 = vcmp.eq.s32.totalorder %v2930, %v2949
        %vm2953 = vcmp.eq.s32.totalorder %v2933, %v2949
        %vm2954 = vcmp.eq.s32.totalorder %v2936, %v2949
        %vm2955 = vcmp.eq.s32.totalorder %v2939, %v2949
        %vm2956 = vcmp.eq.s32.totalorder %v2942, %v2949
        %vm2957 = vcmp.eq.s32.totalorder %v2945, %v2949
        %v2958 = vsel %vm2950, 1, 0
        %v2959 = vsel %vm2951, 1, 0
        %v2960 = vsel %vm2952, 1, 0
        %v2961 = vsel %vm2953, 1, 0
        %v2962 = vsel %vm2954, 1, 0
        %v2963 = vsel %vm2955, 1, 0
        %v2964 = vsel %vm2956, 1, 0
        %v2965 = vsel %vm2957, 1, 0
        %v2966 = vcvt.s32.f32 %v2958
        %v2967 = vcvt.s32.f32 %v2959
        %v2968 = vcvt.s32.f32 %v2960
        %v2969 = vcvt.s32.f32 %v2961
        %v2970 = vcvt.s32.f32 %v2962
        %v2971 = vcvt.s32.f32 %v2963
        %v2972 = vcvt.s32.f32 %v2964
        %v2973 = vcvt.s32.f32 %v2965
        %v2974 = vmul.f32 %v2843, %v1746
        %v2975 = vmul.f32 %v2845, %v1747
        %v2976 = vmul.f32 %v2847, %v1748
        %v2977 = vmul.f32 %v2849, %v1749
        %v2978 = vmul.f32 %v2851, %v1750
        %v2979 = vmul.f32 %v2853, %v1751
        %v2980 = vmul.f32 %v2855, %v1752
        %v2981 = vmul.f32 %v2857, %v1753
        %2982 = vadd.xlane.f32.xlu0 %v2907
        %v2983 = vpop.xlane.xlu0 %2982
        %2984 = vadd.xlane.f32.xlu0 %v2909
        %v2985 = vpop.xlane.xlu0 %2984
        %2986 = vadd.xlane.f32.xlu0 %v2911
        %v2987 = vpop.xlane.xlu0 %2986
        %2988 = vadd.xlane.f32.xlu0 %v2913
        %v2989 = vpop.xlane.xlu0 %2988
        %2990 = vadd.xlane.f32.xlu0 %v2915
        %v2991 = vpop.xlane.xlu0 %2990
        %2992 = vadd.xlane.f32.xlu0 %v2917
        %v2993 = vpop.xlane.xlu0 %2992
        %2994 = vadd.xlane.f32.xlu0 %v2919
        %v2995 = vpop.xlane.xlu0 %2994
        %2996 = vadd.xlane.f32.xlu0 %v2921
        %v2997 = vpop.xlane.xlu0 %2996
        %v2998 = vadd.f32 %v2974, %v2983
        %v2999 = vadd.f32 %v2975, %v2985
        %v3000 = vadd.f32 %v2976, %v2987
        %v3001 = vadd.f32 %v2977, %v2989
        %v3002 = vadd.f32 %v2978, %v2991
        %v3003 = vadd.f32 %v2979, %v2993
        %v3004 = vadd.f32 %v2980, %v2995
        %v3005 = vadd.f32 %v2981, %v2997
        %v3006 = vmul.f32 %v2966, %v2802
        %v3007 = vmul.f32 %v2967, %v2803
        %v3008 = vmul.f32 %v2968, %v2804
        %v3009 = vmul.f32 %v2969, %v2805
        %v3010 = vmul.f32 %v2970, %v2806
        %v3011 = vmul.f32 %v2971, %v2807
        %v3012 = vmul.f32 %v2972, %v2808
        %v3013 = vmul.f32 %v2973, %v2809
        %3014 = vadd.xlane.f32.xlu0 %v3006
        %v3015 = vpop.xlane.xlu0 %3014
        %3016 = vadd.xlane.f32.xlu0 %v3007
        %v3017 = vpop.xlane.xlu0 %3016
        %3018 = vadd.xlane.f32.xlu0 %v3008
        %v3019 = vpop.xlane.xlu0 %3018
        %3020 = vadd.xlane.f32.xlu0 %v3009
        %v3021 = vpop.xlane.xlu0 %3020
        %3022 = vadd.xlane.f32.xlu0 %v3010
        %v3023 = vpop.xlane.xlu0 %3022
        %3024 = vadd.xlane.f32.xlu0 %v3011
        %v3025 = vpop.xlane.xlu0 %3024
        %3026 = vadd.xlane.f32.xlu0 %v3012
        %v3027 = vpop.xlane.xlu0 %3026
        %3028 = vadd.xlane.f32.xlu0 %v3013
        %v3029 = vpop.xlane.xlu0 %3028
        %v3030 = vadd.f32 %v1754, %v3015
        %v3031 = vadd.f32 %v1755, %v3017
        %v3032 = vadd.f32 %v1756, %v3019
        %v3033 = vadd.f32 %v1757, %v3021
        %v3034 = vadd.f32 %v1758, %v3023
        %v3035 = vadd.f32 %v1759, %v3025
        %v3036 = vadd.f32 %v1760, %v3027
        %v3037 = vadd.f32 %v1761, %v3029
        %3038 = vadd.xlane.f32.xlu0 %v2966
        %v3039 = vpop.xlane.xlu0 %3038
        %3040 = vadd.xlane.f32.xlu0 %v2967
        %v3041 = vpop.xlane.xlu0 %3040
        %3042 = vadd.xlane.f32.xlu0 %v2968
        %v3043 = vpop.xlane.xlu0 %3042
        %3044 = vadd.xlane.f32.xlu0 %v2969
        %v3045 = vpop.xlane.xlu0 %3044
        %3046 = vadd.xlane.f32.xlu0 %v2970
        %v3047 = vpop.xlane.xlu0 %3046
        %3048 = vadd.xlane.f32.xlu0 %v2971
        %v3049 = vpop.xlane.xlu0 %3048
        %3050 = vadd.xlane.f32.xlu0 %v2972
        %v3051 = vpop.xlane.xlu0 %3050
        %3052 = vadd.xlane.f32.xlu0 %v2973
        %v3053 = vpop.xlane.xlu0 %3052
        %v3054 = vadd.f32 %v1762, %v3039
        %v3055 = vadd.f32 %v1763, %v3041
        %v3056 = vadd.f32 %v1764, %v3043
        %v3057 = vadd.f32 %v1765, %v3045
        %v3058 = vadd.f32 %v1766, %v3047
        %v3059 = vadd.f32 %v1767, %v3049
        %v3060 = vadd.f32 %v1768, %v3051
        %v3061 = vadd.f32 %v1769, %v3053
        %vm3062 = vcmask 7168
        %3063 = vst.msk [vmem:[#allocation2] sm:$0xff] %vm3062, %v2826
        %3064 = vst.msk [vmem:[#allocation2 + $0x8] sm:$0xff] %vm3062, %v2827
        %3065 = vst.msk [vmem:[#allocation2 + $0x10] sm:$0xff] %vm3062, %v2828
        %3066 = vst.msk [vmem:[#allocation2 + $0x18] sm:$0xff] %vm3062, %v2829
        %3067 = vst.msk [vmem:[#allocation2 + $0x20] sm:$0xff] %vm3062, %v2830
        %3068 = vst.msk [vmem:[#allocation2 + $0x28] sm:$0xff] %vm3062, %v2831
        %3069 = vst.msk [vmem:[#allocation2 + $0x30] sm:$0xff] %vm3062, %v2832
        %3070 = vst.msk [vmem:[#allocation2 + $0x38] sm:$0xff] %vm3062, %v2833
        %3071 = vst.msk [vmem:[#allocation3] sm:$0xff] %vm3062, %v2998
        %3072 = vst.msk [vmem:[#allocation3 + $0x8] sm:$0xff] %vm3062, %v2999
        %3073 = vst.msk [vmem:[#allocation3 + $0x10] sm:$0xff] %vm3062, %v3000
        %3074 = vst.msk [vmem:[#allocation3 + $0x18] sm:$0xff] %vm3062, %v3001
        %3075 = vst.msk [vmem:[#allocation3 + $0x20] sm:$0xff] %vm3062, %v3002
        %3076 = vst.msk [vmem:[#allocation3 + $0x28] sm:$0xff] %vm3062, %v3003
        %3077 = vst.msk [vmem:[#allocation3 + $0x30] sm:$0xff] %vm3062, %v3004
        %3078 = vst.msk [vmem:[#allocation3 + $0x38] sm:$0xff] %vm3062, %v3005
        %3079 = vst.msk [vmem:[#allocation4] sm:$0xff] %vm3062, %v3030
        %3080 = vst.msk [vmem:[#allocation4 + $0x8] sm:$0xff] %vm3062, %v3031
        %3081 = vst.msk [vmem:[#allocation4 + $0x10] sm:$0xff] %vm3062, %v3032
        %3082 = vst.msk [vmem:[#allocation4 + $0x18] sm:$0xff] %vm3062, %v3033
        %3083 = vst.msk [vmem:[#allocation4 + $0x20] sm:$0xff] %vm3062, %v3034
        %3084 = vst.msk [vmem:[#allocation4 + $0x28] sm:$0xff] %vm3062, %v3035
        %3085 = vst.msk [vmem:[#allocation4 + $0x30] sm:$0xff] %vm3062, %v3036
        %3086 = vst.msk [vmem:[#allocation4 + $0x38] sm:$0xff] %vm3062, %v3037
        %3087 = vst.msk [vmem:[#allocation5] sm:$0xff] %vm3062, %v3054
        %3088 = vst.msk [vmem:[#allocation5 + $0x8] sm:$0xff] %vm3062, %v3055
        %3089 = vst.msk [vmem:[#allocation5 + $0x10] sm:$0xff] %vm3062, %v3056
        %3090 = vst.msk [vmem:[#allocation5 + $0x18] sm:$0xff] %vm3062, %v3057
        %3091 = vst.msk [vmem:[#allocation5 + $0x20] sm:$0xff] %vm3062, %v3058
        %3092 = vst.msk [vmem:[#allocation5 + $0x28] sm:$0xff] %vm3062, %v3059
        %3093 = vst.msk [vmem:[#allocation5 + $0x30] sm:$0xff] %vm3062, %v3060
        %3094 = vst.msk [vmem:[#allocation5 + $0x38] sm:$0xff] %vm3062, %v3061
      $region48: #{tpu_custom_call.1} parent=35 // pred_fallthru
        _
      // Predicated region
      $region49: #{tpu_custom_call.1} parent=35 // pred_check
        %p3095 = pneg %p271
      $region50: #{tpu_custom_call.1} parent=35 // pred_check_branch
        %3097 = sbr.rel (%p3095) target = $region52
      $region51: #{tpu_custom_call.1} parent=35 // pred_region
        %v3098 = vld [vmem:[#allocation2] sm:$0xff]
        %v3099 = vld [vmem:[#allocation2 + $0x8] sm:$0xff]
        %v3100 = vld [vmem:[#allocation2 + $0x10] sm:$0xff]
        %v3101 = vld [vmem:[#allocation2 + $0x18] sm:$0xff]
        %v3102 = vld [vmem:[#allocation2 + $0x20] sm:$0xff]
        %v3103 = vld [vmem:[#allocation2 + $0x28] sm:$0xff]
        %v3104 = vld [vmem:[#allocation2 + $0x30] sm:$0xff]
        %v3105 = vld [vmem:[#allocation2 + $0x38] sm:$0xff]
        %v3106 = vld [vmem:[#allocation3] sm:$0xff]
        %v3107 = vld [vmem:[#allocation3 + $0x8] sm:$0xff]
        %v3108 = vld [vmem:[#allocation3 + $0x10] sm:$0xff]
        %v3109 = vld [vmem:[#allocation3 + $0x18] sm:$0xff]
        %v3110 = vld [vmem:[#allocation3 + $0x20] sm:$0xff]
        %v3111 = vld [vmem:[#allocation3 + $0x28] sm:$0xff]
        %v3112 = vld [vmem:[#allocation3 + $0x30] sm:$0xff]
        %v3113 = vld [vmem:[#allocation3 + $0x38] sm:$0xff]
        %v3114 = vsub.f32 0.0, %v3098
        %v3115 = vsub.f32 0.0, %v3099
        %v3116 = vsub.f32 0.0, %v3100
        %v3117 = vsub.f32 0.0, %v3101
        %v3118 = vsub.f32 0.0, %v3102
        %v3119 = vsub.f32 0.0, %v3103
        %v3120 = vsub.f32 0.0, %v3104
        %v3121 = vsub.f32 0.0, %v3105
        %v3122 = vmul.f32 %v3114, 1.442695
        %v3123 = vpow.pop %v3122
        %v3124 = vmul.f32 %v3115, 1.442695
        %v3125 = vpow.pop %v3124
        %v3126 = vmul.f32 %v3116, 1.442695
        %v3127 = vpow.pop %v3126
        %v3128 = vmul.f32 %v3117, 1.442695
        %v3129 = vpow.pop %v3128
        %v3130 = vmul.f32 %v3118, 1.442695
        %v3131 = vpow.pop %v3130
        %v3132 = vmul.f32 %v3119, 1.442695
        %v3133 = vpow.pop %v3132
        %v3134 = vmul.f32 %v3120, 1.442695
        %v3135 = vpow.pop %v3134
        %v3136 = vmul.f32 %v3121, 1.442695
        %v3137 = vpow.pop %v3136
        %v3138 = vmul.f32 %v3123, 112.0
        %v3139 = vmul.f32 %v3125, 112.0
        %v3140 = vmul.f32 %v3127, 112.0
        %v3141 = vmul.f32 %v3129, 112.0
        %v3142 = vmul.f32 %v3131, 112.0
        %v3143 = vmul.f32 %v3133, 112.0
        %v3144 = vmul.f32 %v3135, 112.0
        %v3145 = vmul.f32 %v3137, 112.0
        %v3146 = vsub.f32 %v3106, %v3138
        %v3147 = vsub.f32 %v3107, %v3139
        %v3148 = vsub.f32 %v3108, %v3140
        %v3149 = vsub.f32 %v3109, %v3141
        %v3150 = vsub.f32 %v3110, %v3142
        %v3151 = vsub.f32 %v3111, %v3143
        %v3152 = vsub.f32 %v3112, %v3144
        %v3153 = vsub.f32 %v3113, %v3145
        %v3154 = vld [vmem:[#allocation5] sm:$0xff]
        %v3155 = vld [vmem:[#allocation5 + $0x8] sm:$0xff]
        %v3156 = vld [vmem:[#allocation5 + $0x10] sm:$0xff]
        %v3157 = vld [vmem:[#allocation5 + $0x18] sm:$0xff]
        %v3158 = vld [vmem:[#allocation5 + $0x20] sm:$0xff]
        %v3159 = vld [vmem:[#allocation5 + $0x28] sm:$0xff]
        %v3160 = vld [vmem:[#allocation5 + $0x30] sm:$0xff]
        %v3161 = vld [vmem:[#allocation5 + $0x38] sm:$0xff]
        %vm3162 = vcmp.gt.f32.partialorder %v3154, 0.0
        %vm3163 = vcmp.gt.f32.partialorder %v3155, 0.0
        %vm3164 = vcmp.gt.f32.partialorder %v3156, 0.0
        %vm3165 = vcmp.gt.f32.partialorder %v3157, 0.0
        %vm3166 = vcmp.gt.f32.partialorder %v3158, 0.0
        %vm3167 = vcmp.gt.f32.partialorder %v3159, 0.0
        %vm3168 = vcmp.gt.f32.partialorder %v3160, 0.0
        %vm3169 = vcmp.gt.f32.partialorder %v3161, 0.0
        %v3170 = vsel %vm3162, %v3154, 1.0
        %v3171 = vsel %vm3163, %v3155, 1.0
        %v3172 = vsel %vm3164, %v3156, 1.0
        %v3173 = vsel %vm3165, %v3157, 1.0
        %v3174 = vsel %vm3166, %v3158, 1.0
        %v3175 = vsel %vm3167, %v3159, 1.0
        %v3176 = vsel %vm3168, %v3160, 1.0
        %v3177 = vsel %vm3169, %v3161, 1.0
        %v3178 = vld [vmem:[#allocation4] sm:$0xff]
        %v3179 = vld [vmem:[#allocation4 + $0x8] sm:$0xff]
        %v3180 = vld [vmem:[#allocation4 + $0x10] sm:$0xff]
        %v3181 = vld [vmem:[#allocation4 + $0x18] sm:$0xff]
        %v3182 = vld [vmem:[#allocation4 + $0x20] sm:$0xff]
        %v3183 = vld [vmem:[#allocation4 + $0x28] sm:$0xff]
        %v3184 = vld [vmem:[#allocation4 + $0x30] sm:$0xff]
        %v3185 = vld [vmem:[#allocation4 + $0x38] sm:$0xff]
        %v3186 = vrcp.pop %v3170
        %v3187 = vmul.f32 %v3178, %v3186
        %v3188 = vrcp.pop %v3171
        %v3189 = vmul.f32 %v3179, %v3188
        %v3190 = vrcp.pop %v3172
        %v3191 = vmul.f32 %v3180, %v3190
        %v3192 = vrcp.pop %v3173
        %v3193 = vmul.f32 %v3181, %v3192
        %v3194 = vrcp.pop %v3174
        %v3195 = vmul.f32 %v3182, %v3194
        %v3196 = vrcp.pop %v3175
        %v3197 = vmul.f32 %v3183, %v3196
        %v3198 = vrcp.pop %v3176
        %v3199 = vmul.f32 %v3184, %v3198
        %v3200 = vrcp.pop %v3177
        %v3201 = vmul.f32 %v3185, %v3200
        %v3202 = vsub.f32 %v3187, %v3098
        %v3203 = vsub.f32 %v3189, %v3099
        %v3204 = vsub.f32 %v3191, %v3100
        %v3205 = vsub.f32 %v3193, %v3101
        %v3206 = vsub.f32 %v3195, %v3102
        %v3207 = vsub.f32 %v3197, %v3103
        %v3208 = vsub.f32 %v3199, %v3104
        %v3209 = vsub.f32 %v3201, %v3105
        %v3210 = vlog2.pop %v3146
        %v3211 = vmul.f32 %v3210, 0.6931472
        %v3212 = vlog2.pop %v3147
        %v3213 = vmul.f32 %v3212, 0.6931472
        %v3214 = vlog2.pop %v3148
        %v3215 = vmul.f32 %v3214, 0.6931472
        %v3216 = vlog2.pop %v3149
        %v3217 = vmul.f32 %v3216, 0.6931472
        %v3218 = vlog2.pop %v3150
        %v3219 = vmul.f32 %v3218, 0.6931472
        %v3220 = vlog2.pop %v3151
        %v3221 = vmul.f32 %v3220, 0.6931472
        %v3222 = vlog2.pop %v3152
        %v3223 = vmul.f32 %v3222, 0.6931472
        %v3224 = vlog2.pop %v3153
        %v3225 = vmul.f32 %v3224, 0.6931472
        %v3226 = vsub.f32 %v3202, %v3211
        %v3227 = vsub.f32 %v3203, %v3213
        %v3228 = vsub.f32 %v3204, %v3215
        %v3229 = vsub.f32 %v3205, %v3217
        %v3230 = vsub.f32 %v3206, %v3219
        %v3231 = vsub.f32 %v3207, %v3221
        %v3232 = vsub.f32 %v3208, %v3223
        %v3233 = vsub.f32 %v3209, %v3225
        %v3234 = vsel %vm3162, %v3226, 0.0
        %v3235 = vsel %vm3163, %v3227, 0.0
        %v3236 = vsel %vm3164, %v3228, 0.0
        %v3237 = vsel %vm3165, %v3229, 0.0
        %v3238 = vsel %vm3166, %v3230, 0.0
        %v3239 = vsel %vm3167, %v3231, 0.0
        %v3240 = vsel %vm3168, %v3232, 0.0
        %v3241 = vsel %vm3169, %v3233, 0.0
        %vm3242 = vcmask 7168
        %3243 = vst.msk [vmem:[%s269] sm:$0xff] %vm3242, %v3234
        %3244 = vst.msk [vmem:[%s269 + $0x8] sm:$0xff] %vm3242, %v3235
        %3245 = vst.msk [vmem:[%s269 + $0x10] sm:$0xff] %vm3242, %v3236
        %3246 = vst.msk [vmem:[%s269 + $0x18] sm:$0xff] %vm3242, %v3237
        %3247 = vst.msk [vmem:[%s269 + $0x20] sm:$0xff] %vm3242, %v3238
        %3248 = vst.msk [vmem:[%s269 + $0x28] sm:$0xff] %vm3242, %v3239
        %3249 = vst.msk [vmem:[%s269 + $0x30] sm:$0xff] %vm3242, %v3240
        %3250 = vst.msk [vmem:[%s269 + $0x38] sm:$0xff] %vm3242, %v3241
      $region52: #{tpu_custom_call.1} parent=35 // pred_fallthru
        _
      %s3251 = smul.u32 8, %s19
      %p3252 = scmp.lt.s32.totalorder %s3251, 15
      %s3253 = scalar_select %p3252, %s3251, 15
      %s3254 = smul.addr %s3253, 8
      %s3255 = scalar_lea.vmem %s4, %s3254
      // Predicated region
      $region53: #{tpu_custom_call.1} parent=35 // pred_check
        %p3256 = pneg %p149
      $region54: #{tpu_custom_call.1} parent=35 // pred_check_branch
        %3258 = sbr.rel (%p3256) target = $region56
      $region55: #{tpu_custom_call.1} parent=35 // pred_region
        %s3259 = smul.u32 8, %s19
      $region56: #{tpu_custom_call.1} parent=35 // pred_fallthru
        _
    $region36: #{tpu_custom_call.1} parent=5 // pred_fallthru
      _
    %p3260 = scmp.le.s32.totalorder 2, %s10
    // Predicated region
    $region57: #{tpu_custom_call.1} parent=5 // pred_check
      %p3261 = pneg %p3260
    $region58: #{tpu_custom_call.1} parent=5 // pred_check_branch
      %3263 = sbr.rel (%p3261) target = $region60
    $region59: #{tpu_custom_call.1} parent=5 // pred_region
      %s3264 = ssub.s32 %s10, 2
      // Predicated region
      $region61: #{tpu_custom_call.1} parent=59 // pred_check
        %p3265 = pneg %p155
      $region62: #{tpu_custom_call.1} parent=59 // pred_check_branch
        %3267 = sbr.rel (%p3265) target = $region64
      $region63: #{tpu_custom_call.1} parent=59 // pred_region
        %s3268 = smul.u32 8, %s21
        %p3269 = scmp.lt.s32.totalorder %s3268, 15
        %s3270 = scalar_select %p3269, %s3268, 15
        %s3271 = smul.addr %s3270, 8
        %s3272 = scalar_lea.vmem %s4, %s3271
      $region64: #{tpu_custom_call.1} parent=59 // pred_fallthru
        _
    $region60: #{tpu_custom_call.1} parent=5 // pred_fallthru
      _
  $region6: #{tpu_custom_call.1} parent=0 // loop_footer
    %s14 = sadd.s32 1, %s10
  $region7: #{tpu_custom_call.1} parent=0 // loop_footer_branch
    %9 = sbr.rel target = $region3
  $region8: #{tpu_custom_call.1} parent=0 // loop_exit
    _

</llo_original>
